<compile_context>
chip_gen: v5e
topology: v5e:2x2
jax: 0.10.0
libtpu: 0.0.40
codegen_flags: <defaults>
</compile_context>

<pallas_src>
import functools

import jax
import jax.numpy as jnp
from jax.experimental import pallas as pl
from jax.experimental.pallas import tpu as pltpu


# -----------------------------------------------------------------------------
# In-kernel helpers
# -----------------------------------------------------------------------------
def _assemble_chunk(xm_ref, xh_ref):
    """(th, Wp, Cin) main rows + (2, Wp, Cin) halo rows -> (th+2, Wp, Cin)."""
    return jnp.concatenate([xm_ref[0], xh_ref[0]], axis=0)


def _conv3x3(x, w_ref, col_ref, *, th, W, Cin):
    """3x3 'same' conv of the assembled padded chunk -> (th*W, Cp) f32.

    x      : (th+2, W+2, Cin) bf16 value
    w_ref  : (9*Cin, Cp) bf16 ref if col_ref is not None (single-matmul path)
             (9, Cin, Cp) bf16 ref otherwise              (per-tap path)
    col_ref: (th*W, 9*Cin) bf16 VMEM scratch, or None
    """
    if col_ref is not None:
        # im2col into VMEM once (lane-aligned stores since Cin % 128 == 0),
        # then a single K = 9*Cin MXU matmul -- no accumulator RMW.
        for kh in range(3):
            for kw in range(3):
                tap = kh * 3 + kw
                col_ref[:, tap * Cin:(tap + 1) * Cin] = (
                    x[kh:kh + th, kw:kw + W, :].reshape(th * W, Cin))
        return jnp.dot(col_ref[...], w_ref[...],
                       preferred_element_type=jnp.float32)
    # Small / unaligned Cin (first conv): nine K=Cin matmuls accumulated as
    # values -- no scratch zero-init and no VMEM round-trips of the f32 acc.
    acc = None
    for kh in range(3):
        for kw in range(3):
            lhs = x[kh:kh + th, kw:kw + W, :].reshape(th * W, Cin)
            part = jnp.dot(lhs, w_ref[kh * 3 + kw],
                           preferred_element_type=jnp.float32)
            acc = part if acc is None else acc + part
    return acc


# -----------------------------------------------------------------------------
# Pallas kernels
# -----------------------------------------------------------------------------
def _conv_stats_kernel(xm_ref, xh_ref, w_ref, y_ref, psum_ref, pssq_ref,
                       *col_scratch, th, W, Cin):
    """BN pass 1: conv (bias skipped, cancels under train-mode BN) + per-chunk
    per-channel mean-centred statistics; y stored bf16."""
    col_ref = col_scratch[0] if col_scratch else None
    x = _assemble_chunk(xm_ref, xh_ref)
    y = _conv3x3(x, w_ref, col_ref, th=th, W=W, Cin=Cin)      # (th*W, Cp) f32
    psum = jnp.sum(y, axis=0, keepdims=True)                  # (1, Cp)
    mu = psum * (1.0 / (th * W))
    d = y - mu
    psum_ref[0, 0] = psum
    pssq_ref[0, 0] = jnp.sum(d * d, axis=0, keepdims=True)
    y_ref[0] = y.astype(y_ref.dtype)                          # bf16 intermediate


def _conv_bias_relu_kernel(xm_ref, xh_ref, w_ref, b_ref, o_ref,
                           *col_scratch, th, W, Cin):
    """No-BN path: conv + bias + ReLU in a single pass."""
    col_ref = col_scratch[0] if col_scratch else None
    x = _assemble_chunk(xm_ref, xh_ref)
    y = _conv3x3(x, w_ref, col_ref, th=th, W=W, Cin=Cin) + b_ref[...]
    o_ref[0] = jnp.maximum(y, 0.0).astype(o_ref.dtype)


def _scale_shift_relu_kernel(y_ref, scale_ref, shift_ref, o_ref):
    """BN pass 2: folded BN as one FMA (y*scale + shift), then ReLU."""
    y = y_ref[0].astype(jnp.float32)
    o_ref[0] = jnp.maximum(y * scale_ref[...] + shift_ref[...], 0.0
                           ).astype(o_ref.dtype)


# -----------------------------------------------------------------------------
# Conv block wrapper
# -----------------------------------------------------------------------------
def _round_up(x, m):
    return (x + m - 1) // m * m


def _pick_row_tile(H, W, N, tm_target, min_chunks=4):
    """Largest EVEN divisor th of H with th*W <= tm_target output rows,
    preferring tiles that still give >= min_chunks grid steps (keeps both v7x
    TensorCores busy).  If even the 2-row minimum exceeds tm_target it is used
    anyway (explicit fallback instead of silently blowing the budget)."""
    if H % 2 != 0:
        raise NotImplementedError("conv_block requires even H (row-halo tiling)")
    cands = [t for t in range(2, H + 1, 2) if H % t == 0 and t * W <= tm_target]
    if not cands:
        cands = [2]
    for t in sorted(cands, reverse=True):
        if N * (H // t) >= min_chunks:
            return t
    return cands[0]  # smallest candidate -> maximum chunk count


def conv_block(x_nhwc, w_hwio, bias, gamma, beta, *, use_bn, out_dtype,
               eps=1e-5, tm_target=1024):
    """Conv2d(3x3, s=1, p=1) [+ train-mode BN] + ReLU; hot path in Pallas.

    Returns (N, H, W, Cp) with Cp = Cout rounded up to 128 (padded channels
    are exactly zero); the caller slices once at the very end.
    """
    N, H, W, Cin = x_nhwc.shape
    Cout = w_hwio.shape[-1]
    if W % 8 != 0:
        raise NotImplementedError("conv_block requires W % 8 == 0")

    Cp = _round_up(Cout, 128)            # lane-dense output channels
    th = _pick_row_tile(H, W, N, tm_target)
    n_ht = H // th
    Wp = W + 2
    Mrow = th * W
    use_im2col = (Cin % 128 == 0)        # single-matmul path for deep layers

    # ---- glue (plain JAX): bf16 cast + zero border pad; the only host copy.
    xp = jnp.pad(x_nhwc.astype(jnp.bfloat16), ((0, 0), (1, 1), (1, 1), (0, 0)))

    w_pad = jnp.pad(w_hwio, ((0, 0), (0, 0), (0, 0), (0, Cp - Cout)))
    if use_im2col:
        w_mat = w_pad.reshape(9 * Cin, Cp).astype(jnp.bfloat16)
        w_spec = pl.BlockSpec((9 * Cin, Cp), lambda n, r: (0, 0))
        scratch = [pltpu.VMEM((Mrow, 9 * Cin), jnp.bfloat16)]
    else:
        w_mat = w_pad.reshape(9, Cin, Cp).astype(jnp.bfloat16)
        w_spec = pl.BlockSpec((9, Cin, Cp), lambda n, r: (0, 0, 0))
        scratch = []

    # ---- specs: grid over (image, row-chunk); both axes parallel.
    grid = (N, n_ht)
    # Main rows [r*th, r*th+th) and 2-row halo [(r+1)*th, (r+1)*th+2): two
    # BlockSpec views of the SAME padded array (no duplicated chunks in HBM).
    xm_spec = pl.BlockSpec((1, th, Wp, Cin), lambda n, r: (n, r, 0, 0))
    xh_spec = pl.BlockSpec((1, 2, Wp, Cin),
                           lambda n, r: (n, (r + 1) * (th // 2), 0, 0))
    y_spec = pl.BlockSpec((1, Mrow, Cp), lambda n, r: (n, r, 0))
    vec_spec = pl.BlockSpec((1, Cp), lambda n, r: (0, 0))
    stat_spec = pl.BlockSpec((1, 1, 1, Cp), lambda n, r: (n, r, 0, 0))
    cparams = pltpu.CompilerParams(
        dimension_semantics=("parallel", "parallel"),
        vmem_limit_bytes=48 * 1024 * 1024)

    out_shape = jax.ShapeDtypeStruct((N, n_ht * Mrow, Cp), out_dtype)

    if use_bn:
        y_shape = jax.ShapeDtypeStruct((N, n_ht * Mrow, Cp), jnp.bfloat16)
        stat_shape = jax.ShapeDtypeStruct((N, n_ht, 1, Cp), jnp.float32)
        kern = functools.partial(_conv_stats_kernel, th=th, W=W, Cin=Cin)
        y, psum, pssq = pl.pallas_call(
            kern,
            grid=grid,
            in_specs=[xm_spec, xh_spec, w_spec],
            out_specs=(y_spec, stat_spec, stat_spec),
            out_shape=(y_shape, stat_shape, stat_shape),
            scratch_shapes=scratch,
            compiler_params=cparams,
        )(xp, xp, w_mat)

        # Tiny cross-chunk reduction: pooled mean / variance (mean-centred per
        # chunk, so no E[y^2]-E[y]^2 cancellation), folded to one FMA.
        n_c = float(Mrow)
        m_tot = float(N * H * W)
        chunk_mean = psum[:, :, 0, :] / n_c                      # (N, n_ht, Cp)
        mean = jnp.sum(psum[:, :, 0, :], axis=(0, 1)) / m_tot
        ss = (jnp.sum(pssq[:, :, 0, :], axis=(0, 1))
              + n_c * jnp.sum((chunk_mean - mean) ** 2, axis=(0, 1)))
        var = jnp.maximum(ss / m_tot, 0.0)
        gamma_p = jnp.pad(gamma, (0, Cp - Cout))
        beta_p = jnp.pad(beta, (0, Cp - Cout))
        scale = gamma_p * jax.lax.rsqrt(var + eps)
        shift = beta_p - mean * scale

        out = pl.pallas_call(
            _scale_shift_relu_kernel,
            grid=grid,
            in_specs=[y_spec, vec_spec, vec_spec],
            out_specs=y_spec,
            out_shape=out_shape,
            compiler_params=cparams,
        )(y, scale.reshape(1, Cp).astype(jnp.float32),
          shift.reshape(1, Cp).astype(jnp.float32))
    else:
        kern = functools.partial(_conv_bias_relu_kernel, th=th, W=W, Cin=Cin)
        bias_p = jnp.pad(bias, (0, Cp - Cout)).reshape(1, Cp).astype(jnp.float32)
        out = pl.pallas_call(
            kern,
            grid=grid,
            in_specs=[xm_spec, xh_spec, w_spec, vec_spec],
            out_specs=y_spec,
            out_shape=out_shape,
            scratch_shapes=scratch,
            compiler_params=cparams,
        )(xp, xp, w_mat, bias_p)

    # Chunk rows are already in (H, W) order; keep the Cp channel padding.
    return out.reshape(N, H, W, Cp)


# -----------------------------------------------------------------------------
# unetConv2 forward
# -----------------------------------------------------------------------------
def init_unet_conv2_params(key, in_size, out_size):
    k1, k2, k3, k4 = jax.random.split(key, 4)
    return {
        # HWIO conv weights (PyTorch OIHW transposed).
        "w1": 0.1 * jax.random.normal(k1, (3, 3, in_size, out_size), jnp.float32),
        "b1": 0.1 * jax.random.normal(k2, (out_size,), jnp.float32),
        "g1": jnp.ones((out_size,), jnp.float32),      # BN gamma default init
        "beta1": jnp.zeros((out_size,), jnp.float32),  # BN beta default init
        "w2": 0.1 * jax.random.normal(k3, (3, 3, out_size, out_size), jnp.float32),
        "b2": 0.1 * jax.random.normal(k4, (out_size,), jnp.float32),
        "g2": jnp.ones((out_size,), jnp.float32),
        "beta2": jnp.zeros((out_size,), jnp.float32),
    }


def unet_conv2_forward(params, x_nchw, *, is_batchnorm=True):
    out_size = params["w1"].shape[-1]
    x = jnp.transpose(x_nchw, (0, 2, 3, 1))              # NCHW -> NHWC
    # Block 1: bf16, Cp-padded output fed straight into block 2.
    a1 = conv_block(x, params["w1"], params["b1"], params["g1"], params["beta1"],
                    use_bn=is_batchnorm, out_dtype=jnp.bfloat16)
    cin2 = a1.shape[-1]
    # Block 2 consumes the Cp-padded channels; its extra weight rows are zero.
    w2 = jnp.pad(params["w2"], ((0, 0), (0, 0), (0, cin2 - out_size), (0, 0)))
    a2 = conv_block(a1, w2, params["b2"], params["g2"], params["beta2"],
                    use_bn=is_batchnorm, out_dtype=jnp.float32)
    # Slice the channel padding exactly once, at the very end.
    return jnp.transpose(a2[..., :out_size], (0, 3, 1, 2))   # NHWC -> NCHW


# -----------------------------------------------------------------------------
# Pure-JAX reference (correctness check only).  Mirrors the kernel's MXU input
# precision (bf16 operands, f32 accumulation); the kernel additionally stores
# the pre-BN conv output in bf16, hence the slightly loose tolerance below.
# -----------------------------------------------------------------------------
def _ref_block(x_nhwc, w_hwio, bias, gamma, beta, *, use_bn, eps=1e-5):
    y = jax.lax.conv_general_dilated(
        x_nhwc.astype(jnp.bfloat16), w_hwio.astype(jnp.bfloat16),
        window_strides=(1, 1), padding="SAME",
        dimension_numbers=("NHWC", "HWIO", "NHWC"),
        preferred_element_type=jnp.float32) + bias
    if use_bn:
        mean = jnp.mean(y, axis=(0, 1, 2))
        var = jnp.mean((y - mean) ** 2, axis=(0, 1, 2))
        y = (y - mean) * jax.lax.rsqrt(var + eps) * gamma + beta
    return jnp.maximum(y, 0.0)


def unet_conv2_reference(params, x_nchw, *, is_batchnorm=True):
    x = jnp.transpose(x_nchw, (0, 2, 3, 1))
    x = _ref_block(x, params["w1"], params["b1"], params["g1"], params["beta1"],
                   use_bn=is_batchnorm)
    x = _ref_block(x, params["w2"], params["b2"], params["g2"], params["beta2"],
                   use_bn=is_batchnorm)
    return jnp.transpose(x, (0, 3, 1, 2))


# -----------------------------------------------------------------------------
if __name__ == "__main__":
    key = jax.random.PRNGKey(0)
    k_x, k_p = jax.random.split(key)

    N, Cin, H, W = 2, 4, 16, 16
    Cout = 8

    x = jax.random.normal(k_x, (N, Cin, H, W), jnp.float32)   # NCHW like PyTorch
    params = init_unet_conv2_params(k_p, Cin, Cout)

    # BatchNorm path (default module config).
    fwd_bn = jax.jit(functools.partial(unet_conv2_forward, is_batchnorm=True))
    out = jax.block_until_ready(fwd_bn(params, x))
    assert out.shape == (N, Cout, H, W), out.shape
    ref = jax.block_until_ready(
        unet_conv2_reference(params, x, is_batchnorm=True))
    err = float(jnp.max(jnp.abs(out - ref)))
    assert jnp.allclose(out, ref, atol=3e-2, rtol=3e-2), err

    # No-BatchNorm path.
    fwd_nobn = jax.jit(functools.partial(unet_conv2_forward, is_batchnorm=False))
    out2 = jax.block_until_ready(fwd_nobn(params, x))
    ref2 = jax.block_until_ready(
        unet_conv2_reference(params, x, is_batchnorm=False))
    err2 = float(jnp.max(jnp.abs(out2 - ref2)))
    assert jnp.allclose(out2, ref2, atol=3e-2, rtol=3e-2), err2

    print("KERNEL_OK")
</pallas_src>

<mosaic_0001>
module attributes {stable_mosaic.version = 11 : i64} {
  func.func @_conv_stats_kernel(%arg0: i32, %arg1: i32, %arg2: memref<1x8x18x4xbf16, #tpu.memory_space<vmem>>, %arg3: memref<1x2x18x4xbf16, #tpu.memory_space<vmem>>, %arg4: memref<9x4x128xbf16, #tpu.memory_space<vmem>>, %arg5: memref<1x128x128xbf16, #tpu.memory_space<vmem>>, %arg6: memref<1x1x1x128xf32, #tpu.memory_space<vmem>>, %arg7: memref<1x1x1x128xf32, #tpu.memory_space<vmem>>) attributes {dimension_semantics = [#tpu.dimension_semantics<parallel>, #tpu.dimension_semantics<parallel>], iteration_bounds = array<i64: 2, 2>, scalar_prefetch = 0 : i64, scratch_operands = 0 : i64, tpu.core_type = #tpu.core_type<tc>, window_params = [{transform_indices = @transform_0, window_bounds = array<i64: 1, 8, 18, 4>}, {transform_indices = @transform_1, window_bounds = array<i64: 1, 2, 18, 4>}, {pipeline_mode = #tpu.pipeline_mode<synchronous>, transform_indices = @transform_2, window_bounds = array<i64: 9, 4, 128>}, {transform_indices = @transform_3, window_bounds = array<i64: 1, 128, 128>}, {transform_indices = @transform_4, window_bounds = array<i64: 1, 1, 1, 128>}, {transform_indices = @transform_5, window_bounds = array<i64: 1, 1, 1, 128>}]} {
    %c0 = arith.constant 0 : index
    %c0_0 = arith.constant 0 : index
    %c0_1 = arith.constant 0 : index
    %c0_2 = arith.constant 0 : index
    %0 = vector.load %arg2[%c0, %c0_0, %c0_1, %c0_2] : memref<1x8x18x4xbf16, #tpu.memory_space<vmem>>, vector<1x8x18x4xbf16>
    %1 = vector.shape_cast %0 : vector<1x8x18x4xbf16> to vector<8x18x4xbf16>
    %c0_3 = arith.constant 0 : index
    %c0_4 = arith.constant 0 : index
    %c0_5 = arith.constant 0 : index
    %c0_6 = arith.constant 0 : index
    %2 = vector.load %arg3[%c0_3, %c0_4, %c0_5, %c0_6] : memref<1x2x18x4xbf16, #tpu.memory_space<vmem>>, vector<1x2x18x4xbf16>
    %3 = vector.shape_cast %2 : vector<1x2x18x4xbf16> to vector<2x18x4xbf16>
    %4 = tpu.concatenate %1, %3 in 0 : vector<8x18x4xbf16>, vector<2x18x4xbf16> -> vector<10x18x4xbf16>
    %5 = vector.extract_strided_slice %4 {offsets = [0, 0, 0], sizes = [8, 16, 4], strides = [1, 1, 1]} : vector<10x18x4xbf16> to vector<8x16x4xbf16>
    %6 = vector.shape_cast %5 : vector<8x16x4xbf16> to vector<128x4xbf16>
    %c0_7 = arith.constant 0 : index
    %c0_8 = arith.constant 0 : index
    %c0_9 = arith.constant 0 : index
    %7 = vector.load %arg4[%c0_7, %c0_8, %c0_9] : memref<9x4x128xbf16, #tpu.memory_space<vmem>>, vector<1x4x128xbf16>
    %8 = vector.shape_cast %7 : vector<1x4x128xbf16> to vector<4x128xbf16>
    %cst = arith.constant dense<0.000000e+00> : vector<128x128xf32>
    %9 = tpu.matmul %6, %8, %cst {dimension_numbers = #tpu.dot_dimension_numbers<[1], [0], [0], [1], [0, 0, 1, 1], [], []>} : vector<128x4xbf16>, vector<4x128xbf16>, vector<128x128xf32> -> vector<128x128xf32>
    %10 = vector.extract_strided_slice %4 {offsets = [0, 1, 0], sizes = [8, 16, 4], strides = [1, 1, 1]} : vector<10x18x4xbf16> to vector<8x16x4xbf16>
    %11 = vector.shape_cast %10 : vector<8x16x4xbf16> to vector<128x4xbf16>
    %c1 = arith.constant 1 : index
    %c0_10 = arith.constant 0 : index
    %c0_11 = arith.constant 0 : index
    %12 = vector.load %arg4[%c1, %c0_10, %c0_11] : memref<9x4x128xbf16, #tpu.memory_space<vmem>>, vector<1x4x128xbf16>
    %13 = vector.shape_cast %12 : vector<1x4x128xbf16> to vector<4x128xbf16>
    %cst_12 = arith.constant dense<0.000000e+00> : vector<128x128xf32>
    %14 = tpu.matmul %11, %13, %cst_12 {dimension_numbers = #tpu.dot_dimension_numbers<[1], [0], [0], [1], [0, 0, 1, 1], [], []>} : vector<128x4xbf16>, vector<4x128xbf16>, vector<128x128xf32> -> vector<128x128xf32>
    %15 = arith.addf %9, %14 : vector<128x128xf32>
    %16 = vector.extract_strided_slice %4 {offsets = [0, 2, 0], sizes = [8, 16, 4], strides = [1, 1, 1]} : vector<10x18x4xbf16> to vector<8x16x4xbf16>
    %17 = vector.shape_cast %16 : vector<8x16x4xbf16> to vector<128x4xbf16>
    %c2 = arith.constant 2 : index
    %c0_13 = arith.constant 0 : index
    %c0_14 = arith.constant 0 : index
    %18 = vector.load %arg4[%c2, %c0_13, %c0_14] : memref<9x4x128xbf16, #tpu.memory_space<vmem>>, vector<1x4x128xbf16>
    %19 = vector.shape_cast %18 : vector<1x4x128xbf16> to vector<4x128xbf16>
    %cst_15 = arith.constant dense<0.000000e+00> : vector<128x128xf32>
    %20 = tpu.matmul %17, %19, %cst_15 {dimension_numbers = #tpu.dot_dimension_numbers<[1], [0], [0], [1], [0, 0, 1, 1], [], []>} : vector<128x4xbf16>, vector<4x128xbf16>, vector<128x128xf32> -> vector<128x128xf32>
    %21 = arith.addf %15, %20 : vector<128x128xf32>
    %22 = vector.extract_strided_slice %4 {offsets = [1, 0, 0], sizes = [8, 16, 4], strides = [1, 1, 1]} : vector<10x18x4xbf16> to vector<8x16x4xbf16>
    %23 = vector.shape_cast %22 : vector<8x16x4xbf16> to vector<128x4xbf16>
    %c3 = arith.constant 3 : index
    %c0_16 = arith.constant 0 : index
    %c0_17 = arith.constant 0 : index
    %24 = vector.load %arg4[%c3, %c0_16, %c0_17] : memref<9x4x128xbf16, #tpu.memory_space<vmem>>, vector<1x4x128xbf16>
    %25 = vector.shape_cast %24 : vector<1x4x128xbf16> to vector<4x128xbf16>
    %cst_18 = arith.constant dense<0.000000e+00> : vector<128x128xf32>
    %26 = tpu.matmul %23, %25, %cst_18 {dimension_numbers = #tpu.dot_dimension_numbers<[1], [0], [0], [1], [0, 0, 1, 1], [], []>} : vector<128x4xbf16>, vector<4x128xbf16>, vector<128x128xf32> -> vector<128x128xf32>
    %27 = arith.addf %21, %26 : vector<128x128xf32>
    %28 = vector.extract_strided_slice %4 {offsets = [1, 1, 0], sizes = [8, 16, 4], strides = [1, 1, 1]} : vector<10x18x4xbf16> to vector<8x16x4xbf16>
    %29 = vector.shape_cast %28 : vector<8x16x4xbf16> to vector<128x4xbf16>
    %c4 = arith.constant 4 : index
    %c0_19 = arith.constant 0 : index
    %c0_20 = arith.constant 0 : index
    %30 = vector.load %arg4[%c4, %c0_19, %c0_20] : memref<9x4x128xbf16, #tpu.memory_space<vmem>>, vector<1x4x128xbf16>
    %31 = vector.shape_cast %30 : vector<1x4x128xbf16> to vector<4x128xbf16>
    %cst_21 = arith.constant dense<0.000000e+00> : vector<128x128xf32>
    %32 = tpu.matmul %29, %31, %cst_21 {dimension_numbers = #tpu.dot_dimension_numbers<[1], [0], [0], [1], [0, 0, 1, 1], [], []>} : vector<128x4xbf16>, vector<4x128xbf16>, vector<128x128xf32> -> vector<128x128xf32>
    %33 = arith.addf %27, %32 : vector<128x128xf32>
    %34 = vector.extract_strided_slice %4 {offsets = [1, 2, 0], sizes = [8, 16, 4], strides = [1, 1, 1]} : vector<10x18x4xbf16> to vector<8x16x4xbf16>
    %35 = vector.shape_cast %34 : vector<8x16x4xbf16> to vector<128x4xbf16>
    %c5 = arith.constant 5 : index
    %c0_22 = arith.constant 0 : index
    %c0_23 = arith.constant 0 : index
    %36 = vector.load %arg4[%c5, %c0_22, %c0_23] : memref<9x4x128xbf16, #tpu.memory_space<vmem>>, vector<1x4x128xbf16>
    %37 = vector.shape_cast %36 : vector<1x4x128xbf16> to vector<4x128xbf16>
    %cst_24 = arith.constant dense<0.000000e+00> : vector<128x128xf32>
    %38 = tpu.matmul %35, %37, %cst_24 {dimension_numbers = #tpu.dot_dimension_numbers<[1], [0], [0], [1], [0, 0, 1, 1], [], []>} : vector<128x4xbf16>, vector<4x128xbf16>, vector<128x128xf32> -> vector<128x128xf32>
    %39 = arith.addf %33, %38 : vector<128x128xf32>
    %40 = vector.extract_strided_slice %4 {offsets = [2, 0, 0], sizes = [8, 16, 4], strides = [1, 1, 1]} : vector<10x18x4xbf16> to vector<8x16x4xbf16>
    %41 = vector.shape_cast %40 : vector<8x16x4xbf16> to vector<128x4xbf16>
    %c6 = arith.constant 6 : index
    %c0_25 = arith.constant 0 : index
    %c0_26 = arith.constant 0 : index
    %42 = vector.load %arg4[%c6, %c0_25, %c0_26] : memref<9x4x128xbf16, #tpu.memory_space<vmem>>, vector<1x4x128xbf16>
    %43 = vector.shape_cast %42 : vector<1x4x128xbf16> to vector<4x128xbf16>
    %cst_27 = arith.constant dense<0.000000e+00> : vector<128x128xf32>
    %44 = tpu.matmul %41, %43, %cst_27 {dimension_numbers = #tpu.dot_dimension_numbers<[1], [0], [0], [1], [0, 0, 1, 1], [], []>} : vector<128x4xbf16>, vector<4x128xbf16>, vector<128x128xf32> -> vector<128x128xf32>
    %45 = arith.addf %39, %44 : vector<128x128xf32>
    %46 = vector.extract_strided_slice %4 {offsets = [2, 1, 0], sizes = [8, 16, 4], strides = [1, 1, 1]} : vector<10x18x4xbf16> to vector<8x16x4xbf16>
    %47 = vector.shape_cast %46 : vector<8x16x4xbf16> to vector<128x4xbf16>
    %c7 = arith.constant 7 : index
    %c0_28 = arith.constant 0 : index
    %c0_29 = arith.constant 0 : index
    %48 = vector.load %arg4[%c7, %c0_28, %c0_29] : memref<9x4x128xbf16, #tpu.memory_space<vmem>>, vector<1x4x128xbf16>
    %49 = vector.shape_cast %48 : vector<1x4x128xbf16> to vector<4x128xbf16>
    %cst_30 = arith.constant dense<0.000000e+00> : vector<128x128xf32>
    %50 = tpu.matmul %47, %49, %cst_30 {dimension_numbers = #tpu.dot_dimension_numbers<[1], [0], [0], [1], [0, 0, 1, 1], [], []>} : vector<128x4xbf16>, vector<4x128xbf16>, vector<128x128xf32> -> vector<128x128xf32>
    %51 = arith.addf %45, %50 : vector<128x128xf32>
    %52 = vector.extract_strided_slice %4 {offsets = [2, 2, 0], sizes = [8, 16, 4], strides = [1, 1, 1]} : vector<10x18x4xbf16> to vector<8x16x4xbf16>
    %53 = vector.shape_cast %52 : vector<8x16x4xbf16> to vector<128x4xbf16>
    %c8 = arith.constant 8 : index
    %c0_31 = arith.constant 0 : index
    %c0_32 = arith.constant 0 : index
    %54 = vector.load %arg4[%c8, %c0_31, %c0_32] : memref<9x4x128xbf16, #tpu.memory_space<vmem>>, vector<1x4x128xbf16>
    %55 = vector.shape_cast %54 : vector<1x4x128xbf16> to vector<4x128xbf16>
    %cst_33 = arith.constant dense<0.000000e+00> : vector<128x128xf32>
    %56 = tpu.matmul %53, %55, %cst_33 {dimension_numbers = #tpu.dot_dimension_numbers<[1], [0], [0], [1], [0, 0, 1, 1], [], []>} : vector<128x4xbf16>, vector<4x128xbf16>, vector<128x128xf32> -> vector<128x128xf32>
    %57 = arith.addf %51, %56 : vector<128x128xf32>
    %cst_34 = arith.constant dense<0.000000e+00> : vector<128xf32>
    %58 = vector.multi_reduction <add>, %57, %cst_34 [0] : vector<128x128xf32> to vector<128xf32>
    %59 = vector.shape_cast %58 : vector<128xf32> to vector<1x128xf32>
    %cst_35 = arith.constant 7.812500e-03 : f32
    %60 = vector.broadcast %cst_35 : f32 to vector<1x128xf32>
    %61 = arith.mulf %59, %60 : vector<1x128xf32>
    %62 = vector.broadcast %61 : vector<1x128xf32> to vector<128x128xf32>
    %63 = arith.subf %57, %62 : vector<128x128xf32>
    %c0_36 = arith.constant 0 : index
    %c0_37 = arith.constant 0 : index
    %c0_38 = arith.constant 0 : index
    %c0_39 = arith.constant 0 : index
    %64 = vector.load %arg6[%c0_36, %c0_37, %c0_38, %c0_39] : memref<1x1x1x128xf32, #tpu.memory_space<vmem>>, vector<1x1x1x128xf32>
    %65 = vector.shape_cast %64 : vector<1x1x1x128xf32> to vector<1x128xf32>
    %66 = vector.shape_cast %59 : vector<1x128xf32> to vector<1x1x1x128xf32>
    tpu.vector_store %arg6[%c0_36, %c0_37, %c0_38, %c0_39], %66 {strides = array<i32>} : memref<1x1x1x128xf32, #tpu.memory_space<vmem>>, vector<1x1x1x128xf32>,
    %67 = arith.mulf %63, %63 : vector<128x128xf32>
    %cst_40 = arith.constant dense<0.000000e+00> : vector<128xf32>
    %68 = vector.multi_reduction <add>, %67, %cst_40 [0] : vector<128x128xf32> to vector<128xf32>
    %69 = vector.shape_cast %68 : vector<128xf32> to vector<1x128xf32>
    %c0_41 = arith.constant 0 : index
    %c0_42 = arith.constant 0 : index
    %c0_43 = arith.constant 0 : index
    %c0_44 = arith.constant 0 : index
    %70 = vector.load %arg7[%c0_41, %c0_42, %c0_43, %c0_44] : memref<1x1x1x128xf32, #tpu.memory_space<vmem>>, vector<1x1x1x128xf32>
    %71 = vector.shape_cast %70 : vector<1x1x1x128xf32> to vector<1x128xf32>
    %72 = vector.shape_cast %69 : vector<1x128xf32> to vector<1x1x1x128xf32>
    tpu.vector_store %arg7[%c0_41, %c0_42, %c0_43, %c0_44], %72 {strides = array<i32>} : memref<1x1x1x128xf32, #tpu.memory_space<vmem>>, vector<1x1x1x128xf32>,
    %73 = arith.truncf %57 : vector<128x128xf32> to vector<128x128xbf16>
    %c0_45 = arith.constant 0 : index
    %c0_46 = arith.constant 0 : index
    %c0_47 = arith.constant 0 : index
    %74 = vector.load %arg5[%c0_45, %c0_46, %c0_47] : memref<1x128x128xbf16, #tpu.memory_space<vmem>>, vector<1x128x128xbf16>
    %75 = vector.shape_cast %74 : vector<1x128x128xbf16> to vector<128x128xbf16>
    %76 = vector.shape_cast %73 : vector<128x128xbf16> to vector<1x128x128xbf16>
    tpu.vector_store %arg5[%c0_45, %c0_46, %c0_47], %76 {strides = array<i32>} : memref<1x128x128xbf16, #tpu.memory_space<vmem>>, vector<1x128x128xbf16>,
    return
  }
  func.func @transform_0(%arg0: i32, %arg1: i32) -> (i32, i32, i32, i32) {
    %c0_i32 = arith.constant 0 : i32
    %c0_i32_0 = arith.constant 0 : i32
    %c0_i32_1 = arith.constant 0 : i32
    return %arg0, %arg1, %c0_i32, %c0_i32_0 : i32, i32, i32, i32
  }
  func.func @transform_1(%arg0: i32, %arg1: i32) -> (i32, i32, i32, i32) {
    %c1_i32 = arith.constant 1 : i32
    %0 = arith.addi %arg1, %c1_i32 : i32
    %c4_i32 = arith.constant 4 : i32
    %1 = arith.muli %0, %c4_i32 : i32
    %c0_i32 = arith.constant 0 : i32
    %c0_i32_0 = arith.constant 0 : i32
    %c0_i32_1 = arith.constant 0 : i32
    return %arg0, %1, %c0_i32, %c0_i32_0 : i32, i32, i32, i32
  }
  func.func @transform_2(%arg0: i32, %arg1: i32) -> (i32, i32, i32) {
    %c0_i32 = arith.constant 0 : i32
    %c0_i32_0 = arith.constant 0 : i32
    %c0_i32_1 = arith.constant 0 : i32
    %c0_i32_2 = arith.constant 0 : i32
    return %c0_i32, %c0_i32_0, %c0_i32_1 : i32, i32, i32
  }
  func.func @transform_3(%arg0: i32, %arg1: i32) -> (i32, i32, i32) {
    %c0_i32 = arith.constant 0 : i32
    %c0_i32_0 = arith.constant 0 : i32
    return %arg0, %arg1, %c0_i32 : i32, i32, i32
  }
  func.func @transform_4(%arg0: i32, %arg1: i32) -> (i32, i32, i32, i32) {
    %c0_i32 = arith.constant 0 : i32
    %c0_i32_0 = arith.constant 0 : i32
    %c0_i32_1 = arith.constant 0 : i32
    return %arg0, %arg1, %c0_i32, %c0_i32_0 : i32, i32, i32, i32
  }
  func.func @transform_5(%arg0: i32, %arg1: i32) -> (i32, i32, i32, i32) {
    %c0_i32 = arith.constant 0 : i32
    %c0_i32_0 = arith.constant 0 : i32
    %c0_i32_1 = arith.constant 0 : i32
    return %arg0, %arg1, %c0_i32, %c0_i32_0 : i32, i32, i32, i32
  }
}

module attributes {stable_mosaic.version = 11 : i64} {
  func.func @_scale_shift_relu_kernel(%arg0: i32, %arg1: i32, %arg2: memref<1x128x128xbf16, #tpu.memory_space<vmem>>, %arg3: memref<1x128xf32, #tpu.memory_space<vmem>>, %arg4: memref<1x128xf32, #tpu.memory_space<vmem>>, %arg5: memref<1x128x128xbf16, #tpu.memory_space<vmem>>) attributes {dimension_semantics = [#tpu.dimension_semantics<parallel>, #tpu.dimension_semantics<parallel>], iteration_bounds = array<i64: 2, 2>, scalar_prefetch = 0 : i64, scratch_operands = 0 : i64, tpu.core_type = #tpu.core_type<tc>, window_params = [{transform_indices = @transform_0, window_bounds = array<i64: 1, 128, 128>}, {pipeline_mode = #tpu.pipeline_mode<synchronous>, transform_indices = @transform_1, window_bounds = array<i64: 1, 128>}, {pipeline_mode = #tpu.pipeline_mode<synchronous>, transform_indices = @transform_2, window_bounds = array<i64: 1, 128>}, {transform_indices = @transform_3, window_bounds = array<i64: 1, 128, 128>}]} {
    %c0 = arith.constant 0 : index
    %c0_0 = arith.constant 0 : index
    %c0_1 = arith.constant 0 : index
    %0 = vector.load %arg2[%c0, %c0_0, %c0_1] : memref<1x128x128xbf16, #tpu.memory_space<vmem>>, vector<1x128x128xbf16>
    %1 = vector.shape_cast %0 : vector<1x128x128xbf16> to vector<128x128xbf16>
    %2 = arith.extf %1 : vector<128x128xbf16> to vector<128x128xf32>
    %c0_2 = arith.constant 0 : index
    %c0_3 = arith.constant 0 : index
    %3 = vector.load %arg3[%c0_2, %c0_3] : memref<1x128xf32, #tpu.memory_space<vmem>>, vector<1x128xf32>
    %4 = vector.broadcast %3 : vector<1x128xf32> to vector<128x128xf32>
    %5 = arith.mulf %2, %4 : vector<128x128xf32>
    %c0_4 = arith.constant 0 : index
    %c0_5 = arith.constant 0 : index
    %6 = vector.load %arg4[%c0_4, %c0_5] : memref<1x128xf32, #tpu.memory_space<vmem>>, vector<1x128xf32>
    %7 = vector.broadcast %6 : vector<1x128xf32> to vector<128x128xf32>
    %8 = arith.addf %5, %7 : vector<128x128xf32>
    %cst = arith.constant 0.000000e+00 : f32
    %9 = vector.broadcast %cst : f32 to vector<128x128xf32>
    %10 = arith.maximumf %8, %9 : vector<128x128xf32>
    %11 = arith.truncf %10 : vector<128x128xf32> to vector<128x128xbf16>
    %c0_6 = arith.constant 0 : index
    %c0_7 = arith.constant 0 : index
    %c0_8 = arith.constant 0 : index
    %12 = vector.load %arg5[%c0_6, %c0_7, %c0_8] : memref<1x128x128xbf16, #tpu.memory_space<vmem>>, vector<1x128x128xbf16>
    %13 = vector.shape_cast %12 : vector<1x128x128xbf16> to vector<128x128xbf16>
    %14 = vector.shape_cast %11 : vector<128x128xbf16> to vector<1x128x128xbf16>
    tpu.vector_store %arg5[%c0_6, %c0_7, %c0_8], %14 {strides = array<i32>} : memref<1x128x128xbf16, #tpu.memory_space<vmem>>, vector<1x128x128xbf16>,
    return
  }
  func.func @transform_0(%arg0: i32, %arg1: i32) -> (i32, i32, i32) {
    %c0_i32 = arith.constant 0 : i32
    %c0_i32_0 = arith.constant 0 : i32
    return %arg0, %arg1, %c0_i32 : i32, i32, i32
  }
  func.func @transform_1(%arg0: i32, %arg1: i32) -> (i32, i32) {
    %c0_i32 = arith.constant 0 : i32
    %c0_i32_0 = arith.constant 0 : i32
    %c0_i32_1 = arith.constant 0 : i32
    return %c0_i32, %c0_i32_0 : i32, i32
  }
  func.func @transform_2(%arg0: i32, %arg1: i32) -> (i32, i32) {
    %c0_i32 = arith.constant 0 : i32
    %c0_i32_0 = arith.constant 0 : i32
    %c0_i32_1 = arith.constant 0 : i32
    return %c0_i32, %c0_i32_0 : i32, i32
  }
  func.func @transform_3(%arg0: i32, %arg1: i32) -> (i32, i32, i32) {
    %c0_i32 = arith.constant 0 : i32
    %c0_i32_0 = arith.constant 0 : i32
    return %arg0, %arg1, %c0_i32 : i32, i32, i32
  }
}

module attributes {stable_mosaic.version = 11 : i64} {
  func.func @_conv_stats_kernel(%arg0: i32, %arg1: i32, %arg2: memref<1x8x18x128xbf16, #tpu.memory_space<vmem>>, %arg3: memref<1x2x18x128xbf16, #tpu.memory_space<vmem>>, %arg4: memref<1152x128xbf16, #tpu.memory_space<vmem>>, %arg5: memref<1x128x128xbf16, #tpu.memory_space<vmem>>, %arg6: memref<1x1x1x128xf32, #tpu.memory_space<vmem>>, %arg7: memref<1x1x1x128xf32, #tpu.memory_space<vmem>>, %arg8: memref<128x1152xbf16, #tpu.memory_space<vmem>>) attributes {dimension_semantics = [#tpu.dimension_semantics<parallel>, #tpu.dimension_semantics<parallel>], iteration_bounds = array<i64: 2, 2>, scalar_prefetch = 0 : i64, scratch_operands = 1 : i64, tpu.core_type = #tpu.core_type<tc>, window_params = [{transform_indices = @transform_0, window_bounds = array<i64: 1, 8, 18, 128>}, {transform_indices = @transform_1, window_bounds = array<i64: 1, 2, 18, 128>}, {pipeline_mode = #tpu.pipeline_mode<synchronous>, transform_indices = @transform_2, window_bounds = array<i64: 1152, 128>}, {transform_indices = @transform_3, window_bounds = array<i64: 1, 128, 128>}, {transform_indices = @transform_4, window_bounds = array<i64: 1, 1, 1, 128>}, {transform_indices = @transform_5, window_bounds = array<i64: 1, 1, 1, 128>}]} {
    %c0 = arith.constant 0 : index
    %c0_0 = arith.constant 0 : index
    %c0_1 = arith.constant 0 : index
    %c0_2 = arith.constant 0 : index
    %0 = vector.load %arg2[%c0, %c0_0, %c0_1, %c0_2] : memref<1x8x18x128xbf16, #tpu.memory_space<vmem>>, vector<1x8x18x128xbf16>
    %1 = vector.shape_cast %0 : vector<1x8x18x128xbf16> to vector<8x18x128xbf16>
    %c0_3 = arith.constant 0 : index
    %c0_4 = arith.constant 0 : index
    %c0_5 = arith.constant 0 : index
    %c0_6 = arith.constant 0 : index
    %2 = vector.load %arg3[%c0_3, %c0_4, %c0_5, %c0_6] : memref<1x2x18x128xbf16, #tpu.memory_space<vmem>>, vector<1x2x18x128xbf16>
    %3 = vector.shape_cast %2 : vector<1x2x18x128xbf16> to vector<2x18x128xbf16>
    %4 = tpu.concatenate %1, %3 in 0 : vector<8x18x128xbf16>, vector<2x18x128xbf16> -> vector<10x18x128xbf16>
    %5 = vector.extract_strided_slice %4 {offsets = [0, 0, 0], sizes = [8, 16, 128], strides = [1, 1, 1]} : vector<10x18x128xbf16> to vector<8x16x128xbf16>
    %6 = vector.shape_cast %5 : vector<8x16x128xbf16> to vector<128x128xbf16>
    %c0_7 = arith.constant 0 : index
    %c0_8 = arith.constant 0 : index
    %7 = vector.load %arg8[%c0_7, %c0_8] : memref<128x1152xbf16, #tpu.memory_space<vmem>>, vector<128x128xbf16>
    tpu.vector_store %arg8[%c0_7, %c0_8], %6 {strides = array<i32>} : memref<128x1152xbf16, #tpu.memory_space<vmem>>, vector<128x128xbf16>,
    %8 = vector.extract_strided_slice %4 {offsets = [0, 1, 0], sizes = [8, 16, 128], strides = [1, 1, 1]} : vector<10x18x128xbf16> to vector<8x16x128xbf16>
    %9 = vector.shape_cast %8 : vector<8x16x128xbf16> to vector<128x128xbf16>
    %c0_9 = arith.constant 0 : index
    %c128 = arith.constant 128 : index
    %10 = vector.load %arg8[%c0_9, %c128] : memref<128x1152xbf16, #tpu.memory_space<vmem>>, vector<128x128xbf16>
    tpu.vector_store %arg8[%c0_9, %c128], %9 {strides = array<i32>} : memref<128x1152xbf16, #tpu.memory_space<vmem>>, vector<128x128xbf16>,
    %11 = vector.extract_strided_slice %4 {offsets = [0, 2, 0], sizes = [8, 16, 128], strides = [1, 1, 1]} : vector<10x18x128xbf16> to vector<8x16x128xbf16>
    %12 = vector.shape_cast %11 : vector<8x16x128xbf16> to vector<128x128xbf16>
    %c0_10 = arith.constant 0 : index
    %c256 = arith.constant 256 : index
    %13 = vector.load %arg8[%c0_10, %c256] : memref<128x1152xbf16, #tpu.memory_space<vmem>>, vector<128x128xbf16>
    tpu.vector_store %arg8[%c0_10, %c256], %12 {strides = array<i32>} : memref<128x1152xbf16, #tpu.memory_space<vmem>>, vector<128x128xbf16>,
    %14 = vector.extract_strided_slice %4 {offsets = [1, 0, 0], sizes = [8, 16, 128], strides = [1, 1, 1]} : vector<10x18x128xbf16> to vector<8x16x128xbf16>
    %15 = vector.shape_cast %14 : vector<8x16x128xbf16> to vector<128x128xbf16>
    %c0_11 = arith.constant 0 : index
    %c384 = arith.constant 384 : index
    %16 = vector.load %arg8[%c0_11, %c384] : memref<128x1152xbf16, #tpu.memory_space<vmem>>, vector<128x128xbf16>
    tpu.vector_store %arg8[%c0_11, %c384], %15 {strides = array<i32>} : memref<128x1152xbf16, #tpu.memory_space<vmem>>, vector<128x128xbf16>,
    %17 = vector.extract_strided_slice %4 {offsets = [1, 1, 0], sizes = [8, 16, 128], strides = [1, 1, 1]} : vector<10x18x128xbf16> to vector<8x16x128xbf16>
    %18 = vector.shape_cast %17 : vector<8x16x128xbf16> to vector<128x128xbf16>
    %c0_12 = arith.constant 0 : index
    %c512 = arith.constant 512 : index
    %19 = vector.load %arg8[%c0_12, %c512] : memref<128x1152xbf16, #tpu.memory_space<vmem>>, vector<128x128xbf16>
    tpu.vector_store %arg8[%c0_12, %c512], %18 {strides = array<i32>} : memref<128x1152xbf16, #tpu.memory_space<vmem>>, vector<128x128xbf16>,
    %20 = vector.extract_strided_slice %4 {offsets = [1, 2, 0], sizes = [8, 16, 128], strides = [1, 1, 1]} : vector<10x18x128xbf16> to vector<8x16x128xbf16>
    %21 = vector.shape_cast %20 : vector<8x16x128xbf16> to vector<128x128xbf16>
    %c0_13 = arith.constant 0 : index
    %c640 = arith.constant 640 : index
    %22 = vector.load %arg8[%c0_13, %c640] : memref<128x1152xbf16, #tpu.memory_space<vmem>>, vector<128x128xbf16>
    tpu.vector_store %arg8[%c0_13, %c640], %21 {strides = array<i32>} : memref<128x1152xbf16, #tpu.memory_space<vmem>>, vector<128x128xbf16>,
    %23 = vector.extract_strided_slice %4 {offsets = [2, 0, 0], sizes = [8, 16, 128], strides = [1, 1, 1]} : vector<10x18x128xbf16> to vector<8x16x128xbf16>
    %24 = vector.shape_cast %23 : vector<8x16x128xbf16> to vector<128x128xbf16>
    %c0_14 = arith.constant 0 : index
    %c768 = arith.constant 768 : index
    %25 = vector.load %arg8[%c0_14, %c768] : memref<128x1152xbf16, #tpu.memory_space<vmem>>, vector<128x128xbf16>
    tpu.vector_store %arg8[%c0_14, %c768], %24 {strides = array<i32>} : memref<128x1152xbf16, #tpu.memory_space<vmem>>, vector<128x128xbf16>,
    %26 = vector.extract_strided_slice %4 {offsets = [2, 1, 0], sizes = [8, 16, 128], strides = [1, 1, 1]} : vector<10x18x128xbf16> to vector<8x16x128xbf16>
    %27 = vector.shape_cast %26 : vector<8x16x128xbf16> to vector<128x128xbf16>
    %c0_15 = arith.constant 0 : index
    %c896 = arith.constant 896 : index
    %28 = vector.load %arg8[%c0_15, %c896] : memref<128x1152xbf16, #tpu.memory_space<vmem>>, vector<128x128xbf16>
    tpu.vector_store %arg8[%c0_15, %c896], %27 {strides = array<i32>} : memref<128x1152xbf16, #tpu.memory_space<vmem>>, vector<128x128xbf16>,
    %29 = vector.extract_strided_slice %4 {offsets = [2, 2, 0], sizes = [8, 16, 128], strides = [1, 1, 1]} : vector<10x18x128xbf16> to vector<8x16x128xbf16>
    %30 = vector.shape_cast %29 : vector<8x16x128xbf16> to vector<128x128xbf16>
    %c0_16 = arith.constant 0 : index
    %c1024 = arith.constant 1024 : index
    %31 = vector.load %arg8[%c0_16, %c1024] : memref<128x1152xbf16, #tpu.memory_space<vmem>>, vector<128x128xbf16>
    tpu.vector_store %arg8[%c0_16, %c1024], %30 {strides = array<i32>} : memref<128x1152xbf16, #tpu.memory_space<vmem>>, vector<128x128xbf16>,
    %c0_17 = arith.constant 0 : index
    %c0_18 = arith.constant 0 : index
    %32 = vector.load %arg8[%c0_17, %c0_18] : memref<128x1152xbf16, #tpu.memory_space<vmem>>, vector<128x1152xbf16>
    %c0_19 = arith.constant 0 : index
    %c0_20 = arith.constant 0 : index
    %33 = vector.load %arg4[%c0_19, %c0_20] : memref<1152x128xbf16, #tpu.memory_space<vmem>>, vector<1152x128xbf16>
    %cst = arith.constant dense<0.000000e+00> : vector<128x128xf32>
    %34 = tpu.matmul %32, %33, %cst {dimension_numbers = #tpu.dot_dimension_numbers<[1], [0], [0], [1], [0, 0, 1, 1], [], []>} : vector<128x1152xbf16>, vector<1152x128xbf16>, vector<128x128xf32> -> vector<128x128xf32>
    %cst_21 = arith.constant dense<0.000000e+00> : vector<128xf32>
    %35 = vector.multi_reduction <add>, %34, %cst_21 [0] : vector<128x128xf32> to vector<128xf32>
    %36 = vector.shape_cast %35 : vector<128xf32> to vector<1x128xf32>
    %cst_22 = arith.constant 7.812500e-03 : f32
    %37 = vector.broadcast %cst_22 : f32 to vector<1x128xf32>
    %38 = arith.mulf %36, %37 : vector<1x128xf32>
    %39 = vector.broadcast %38 : vector<1x128xf32> to vector<128x128xf32>
    %40 = arith.subf %34, %39 : vector<128x128xf32>
    %c0_23 = arith.constant 0 : index
    %c0_24 = arith.constant 0 : index
    %c0_25 = arith.constant 0 : index
    %c0_26 = arith.constant 0 : index
    %41 = vector.load %arg6[%c0_23, %c0_24, %c0_25, %c0_26] : memref<1x1x1x128xf32, #tpu.memory_space<vmem>>, vector<1x1x1x128xf32>
    %42 = vector.shape_cast %41 : vector<1x1x1x128xf32> to vector<1x128xf32>
    %43 = vector.shape_cast %36 : vector<1x128xf32> to vector<1x1x1x128xf32>
    tpu.vector_store %arg6[%c0_23, %c0_24, %c0_25, %c0_26], %43 {strides = array<i32>} : memref<1x1x1x128xf32, #tpu.memory_space<vmem>>, vector<1x1x1x128xf32>,
    %44 = arith.mulf %40, %40 : vector<128x128xf32>
    %cst_27 = arith.constant dense<0.000000e+00> : vector<128xf32>
    %45 = vector.multi_reduction <add>, %44, %cst_27 [0] : vector<128x128xf32> to vector<128xf32>
    %46 = vector.shape_cast %45 : vector<128xf32> to vector<1x128xf32>
    %c0_28 = arith.constant 0 : index
    %c0_29 = arith.constant 0 : index
    %c0_30 = arith.constant 0 : index
    %c0_31 = arith.constant 0 : index
    %47 = vector.load %arg7[%c0_28, %c0_29, %c0_30, %c0_31] : memref<1x1x1x128xf32, #tpu.memory_space<vmem>>, vector<1x1x1x128xf32>
    %48 = vector.shape_cast %47 : vector<1x1x1x128xf32> to vector<1x128xf32>
    %49 = vector.shape_cast %46 : vector<1x128xf32> to vector<1x1x1x128xf32>
    tpu.vector_store %arg7[%c0_28, %c0_29, %c0_30, %c0_31], %49 {strides = array<i32>} : memref<1x1x1x128xf32, #tpu.memory_space<vmem>>, vector<1x1x1x128xf32>,
    %50 = arith.truncf %34 : vector<128x128xf32> to vector<128x128xbf16>
    %c0_32 = arith.constant 0 : index
    %c0_33 = arith.constant 0 : index
    %c0_34 = arith.constant 0 : index
    %51 = vector.load %arg5[%c0_32, %c0_33, %c0_34] : memref<1x128x128xbf16, #tpu.memory_space<vmem>>, vector<1x128x128xbf16>
    %52 = vector.shape_cast %51 : vector<1x128x128xbf16> to vector<128x128xbf16>
    %53 = vector.shape_cast %50 : vector<128x128xbf16> to vector<1x128x128xbf16>
    tpu.vector_store %arg5[%c0_32, %c0_33, %c0_34], %53 {strides = array<i32>} : memref<1x128x128xbf16, #tpu.memory_space<vmem>>, vector<1x128x128xbf16>,
    return
  }
  func.func @transform_0(%arg0: i32, %arg1: i32) -> (i32, i32, i32, i32) {
    %c0_i32 = arith.constant 0 : i32
    %c0_i32_0 = arith.constant 0 : i32
    %c0_i32_1 = arith.constant 0 : i32
    return %arg0, %arg1, %c0_i32, %c0_i32_0 : i32, i32, i32, i32
  }
  func.func @transform_1(%arg0: i32, %arg1: i32) -> (i32, i32, i32, i32) {
    %c1_i32 = arith.constant 1 : i32
    %0 = arith.addi %arg1, %c1_i32 : i32
    %c4_i32 = arith.constant 4 : i32
    %1 = arith.muli %0, %c4_i32 : i32
    %c0_i32 = arith.constant 0 : i32
    %c0_i32_0 = arith.constant 0 : i32
    %c0_i32_1 = arith.constant 0 : i32
    return %arg0, %1, %c0_i32, %c0_i32_0 : i32, i32, i32, i32
  }
  func.func @transform_2(%arg0: i32, %arg1: i32) -> (i32, i32) {
    %c0_i32 = arith.constant 0 : i32
    %c0_i32_0 = arith.constant 0 : i32
    %c0_i32_1 = arith.constant 0 : i32
    return %c0_i32, %c0_i32_0 : i32, i32
  }
  func.func @transform_3(%arg0: i32, %arg1: i32) -> (i32, i32, i32) {
    %c0_i32 = arith.constant 0 : i32
    %c0_i32_0 = arith.constant 0 : i32
    return %arg0, %arg1, %c0_i32 : i32, i32, i32
  }
  func.func @transform_4(%arg0: i32, %arg1: i32) -> (i32, i32, i32, i32) {
    %c0_i32 = arith.constant 0 : i32
    %c0_i32_0 = arith.constant 0 : i32
    %c0_i32_1 = arith.constant 0 : i32
    return %arg0, %arg1, %c0_i32, %c0_i32_0 : i32, i32, i32, i32
  }
  func.func @transform_5(%arg0: i32, %arg1: i32) -> (i32, i32, i32, i32) {
    %c0_i32 = arith.constant 0 : i32
    %c0_i32_0 = arith.constant 0 : i32
    %c0_i32_1 = arith.constant 0 : i32
    return %arg0, %arg1, %c0_i32, %c0_i32_0 : i32, i32, i32, i32
  }
}

module attributes {stable_mosaic.version = 11 : i64} {
  func.func @_scale_shift_relu_kernel(%arg0: i32, %arg1: i32, %arg2: memref<1x128x128xbf16, #tpu.memory_space<vmem>>, %arg3: memref<1x128xf32, #tpu.memory_space<vmem>>, %arg4: memref<1x128xf32, #tpu.memory_space<vmem>>, %arg5: memref<1x128x128xf32, #tpu.memory_space<vmem>>) attributes {dimension_semantics = [#tpu.dimension_semantics<parallel>, #tpu.dimension_semantics<parallel>], iteration_bounds = array<i64: 2, 2>, scalar_prefetch = 0 : i64, scratch_operands = 0 : i64, tpu.core_type = #tpu.core_type<tc>, window_params = [{transform_indices = @transform_0, window_bounds = array<i64: 1, 128, 128>}, {pipeline_mode = #tpu.pipeline_mode<synchronous>, transform_indices = @transform_1, window_bounds = array<i64: 1, 128>}, {pipeline_mode = #tpu.pipeline_mode<synchronous>, transform_indices = @transform_2, window_bounds = array<i64: 1, 128>}, {transform_indices = @transform_3, window_bounds = array<i64: 1, 128, 128>}]} {
    %c0 = arith.constant 0 : index
    %c0_0 = arith.constant 0 : index
    %c0_1 = arith.constant 0 : index
    %0 = vector.load %arg2[%c0, %c0_0, %c0_1] : memref<1x128x128xbf16, #tpu.memory_space<vmem>>, vector<1x128x128xbf16>
    %1 = vector.shape_cast %0 : vector<1x128x128xbf16> to vector<128x128xbf16>
    %2 = arith.extf %1 : vector<128x128xbf16> to vector<128x128xf32>
    %c0_2 = arith.constant 0 : index
    %c0_3 = arith.constant 0 : index
    %3 = vector.load %arg3[%c0_2, %c0_3] : memref<1x128xf32, #tpu.memory_space<vmem>>, vector<1x128xf32>
    %4 = vector.broadcast %3 : vector<1x128xf32> to vector<128x128xf32>
    %5 = arith.mulf %2, %4 : vector<128x128xf32>
    %c0_4 = arith.constant 0 : index
    %c0_5 = arith.constant 0 : index
    %6 = vector.load %arg4[%c0_4, %c0_5] : memref<1x128xf32, #tpu.memory_space<vmem>>, vector<1x128xf32>
    %7 = vector.broadcast %6 : vector<1x128xf32> to vector<128x128xf32>
    %8 = arith.addf %5, %7 : vector<128x128xf32>
    %cst = arith.constant 0.000000e+00 : f32
    %9 = vector.broadcast %cst : f32 to vector<128x128xf32>
    %10 = arith.maximumf %8, %9 : vector<128x128xf32>
    %c0_6 = arith.constant 0 : index
    %c0_7 = arith.constant 0 : index
    %c0_8 = arith.constant 0 : index
    %11 = vector.load %arg5[%c0_6, %c0_7, %c0_8] : memref<1x128x128xf32, #tpu.memory_space<vmem>>, vector<1x128x128xf32>
    %12 = vector.shape_cast %11 : vector<1x128x128xf32> to vector<128x128xf32>
    %13 = vector.shape_cast %10 : vector<128x128xf32> to vector<1x128x128xf32>
    tpu.vector_store %arg5[%c0_6, %c0_7, %c0_8], %13 {strides = array<i32>} : memref<1x128x128xf32, #tpu.memory_space<vmem>>, vector<1x128x128xf32>,
    return
  }
  func.func @transform_0(%arg0: i32, %arg1: i32) -> (i32, i32, i32) {
    %c0_i32 = arith.constant 0 : i32
    %c0_i32_0 = arith.constant 0 : i32
    return %arg0, %arg1, %c0_i32 : i32, i32, i32
  }
  func.func @transform_1(%arg0: i32, %arg1: i32) -> (i32, i32) {
    %c0_i32 = arith.constant 0 : i32
    %c0_i32_0 = arith.constant 0 : i32
    %c0_i32_1 = arith.constant 0 : i32
    return %c0_i32, %c0_i32_0 : i32, i32
  }
  func.func @transform_2(%arg0: i32, %arg1: i32) -> (i32, i32) {
    %c0_i32 = arith.constant 0 : i32
    %c0_i32_0 = arith.constant 0 : i32
    %c0_i32_1 = arith.constant 0 : i32
    return %c0_i32, %c0_i32_0 : i32, i32
  }
  func.func @transform_3(%arg0: i32, %arg1: i32) -> (i32, i32, i32) {
    %c0_i32 = arith.constant 0 : i32
    %c0_i32_0 = arith.constant 0 : i32
    return %arg0, %arg1, %c0_i32 : i32, i32, i32
  }
}

</mosaic_0001>

<llo_original>
// kernel: unet_conv2_forward.5
$region0: #{unet_conv2_forward.5}
  #allocation0 [shape = 'u32[]', space=smem, size = 0x4, offset = 0x4, fixed_abs, tag = 'smem constant byte address 0x4 - core index']
  #allocation1 [shape = 'u32[72,128]{1,0:T(1,128)}', space=vmem, size = 0x9000, scoped, tag = 'internal scratch']
  %s0 = inlined_call_operand.vmem [shape: bf16[2,256,128], index: 0, kind: input, shape index: {}]
  %s1 = inlined_call_operand.vmem [shape: f32[1,128], index: 1, kind: input, shape index: {}]
  %s2 = inlined_call_operand.vmem [shape: f32[1,128], index: 2, kind: input, shape index: {}]
  %s3 = inlined_call_operand.vmem [shape: bf16[2,256,128], index: 3, kind: output, shape index: {}]
  %s4 = sld [smem:[#allocation0]]
  $region45: #{unet_conv2_forward.5} parent=0
    _
  %s6 = ssub.s32 1, %s4
  %s7 = scalar_select 0, %s6, %s4
  loop: start=0, step=1, limit=6
  $region2: #{unet_conv2_forward.5} parent=0 // loop_pre_header
    _
  $region3: #{unet_conv2_forward.5} parent=0 // loop_header
    %s9 = sphi 0, %s13
    %p10 = scmp.ge.s32.totalorder %s9, 6
    %s16 = sphi 0, %s28
    %s17 = sphi 0, %s24
    %s18 = sphi 0, %s16
    %s19 = sphi 0, %s17
    %s20 = sphi 0, %s18
    %s21 = sphi 0, %s19
    %s33 = sphi 0, %s35
    %s36 = sphi 0, %s33
    %s37 = sphi 0, %s36
    %s53 = sphi 0, %s37
    %s57 = sphi 0, %s57
    %s59 = sphi 0, %s57
    %s60 = sphi 0, %s59
    %s74 = sphi 0, %s60
    %s78 = sphi 0, %s78
    %s80 = sphi 0, %s78
    %s81 = sphi 0, %s80
    %s95 = sphi 0, %s81
    %s103 = sphi 0, %s105
    %s106 = sphi 0, %s103
    %s107 = sphi 0, %s106
    %s123 = sphi 0, %s107
  $region4: #{unet_conv2_forward.5} parent=0 // loop_header_branch
    %12 = sbr.rel (%p10) target = $region8
  $region5: #{unet_conv2_forward.5} parent=0 // loop_body
    %s14 = ssub.s32 %s9, 1
    %s15 = ssub.s32 %s9, 2
    %s22 = sadd.s32 1, %s17
    %p23 = scmp.ge.s32.totalorder %s22, 2
    %s24 = scalar_select %p23, 0, %s22
    %s25 = sadd.s32 1, %s16
    %s26 = scalar_select %p23, %s25, %s16
    %p27 = scmp.ge.s32.totalorder %s26, 2
    %s28 = scalar_select %p27, 0, %s26
    %s29 = ssub.s32 %s16, %s28
    %s30 = ssub.s32 %s17, %s24
    %s31 = sor.u32 %s29, %s30
    %p32 = scmp.eq.s32.totalorder %s31, 0
    %s34 = sadd.s32 %s33, 1
    %s35 = scalar_select %p32, %s33, %s34
    %p38 = pneg %p32
    %p39 = scmp.eq.s32.totalorder %s9, 3
    %p40 = por %p38, %p39
    %p41 = scmp.ne.s32.totalorder %s33, %s36
    %p42 = scmp.eq.s32.totalorder %s9, 0
    %p43 = por %p41, %p42
    %p44 = scmp.ne.s32.totalorder %s33, %s36
    %p45 = scmp.eq.s32.totalorder %s14, 3
    %p46 = por %p44, %p45
    %p47 = scmp.ne.s32.totalorder %s36, %s37
    %p48 = scmp.eq.s32.totalorder %s14, 0
    %p49 = por %p47, %p48
    %p50 = scmp.ne.s32.totalorder %s36, %s37
    %p51 = scmp.eq.s32.totalorder %s15, 3
    %p52 = por %p50, %p51
    %p54 = scmp.ne.s32.totalorder %s37, %s53
    %p55 = scmp.eq.s32.totalorder %s15, 0
    %p56 = por %p54, %p55
    %s58 = sadd.s32 %s57, 1
    %p61 = scmp.eq.s32.totalorder %s9, 3
    %p62 = scmp.ne.s32.totalorder %s57, %s59
    %p63 = scmp.eq.s32.totalorder %s9, 0
    %p64 = por %p62, %p63
    %p65 = scmp.ne.s32.totalorder %s57, %s59
    %p66 = scmp.eq.s32.totalorder %s14, 3
    %p67 = por %p65, %p66
    %p68 = scmp.ne.s32.totalorder %s59, %s60
    %p69 = scmp.eq.s32.totalorder %s14, 0
    %p70 = por %p68, %p69
    %p71 = scmp.ne.s32.totalorder %s59, %s60
    %p72 = scmp.eq.s32.totalorder %s15, 3
    %p73 = por %p71, %p72
    %p75 = scmp.ne.s32.totalorder %s60, %s74
    %p76 = scmp.eq.s32.totalorder %s15, 0
    %p77 = por %p75, %p76
    %s79 = sadd.s32 %s78, 1
    %p82 = scmp.eq.s32.totalorder %s9, 3
    %p83 = scmp.ne.s32.totalorder %s78, %s80
    %p84 = scmp.eq.s32.totalorder %s9, 0
    %p85 = por %p83, %p84
    %p86 = scmp.ne.s32.totalorder %s78, %s80
    %p87 = scmp.eq.s32.totalorder %s14, 3
    %p88 = por %p86, %p87
    %p89 = scmp.ne.s32.totalorder %s80, %s81
    %p90 = scmp.eq.s32.totalorder %s14, 0
    %p91 = por %p89, %p90
    %p92 = scmp.ne.s32.totalorder %s80, %s81
    %p93 = scmp.eq.s32.totalorder %s15, 3
    %p94 = por %p92, %p93
    %p96 = scmp.ne.s32.totalorder %s81, %s95
    %p97 = scmp.eq.s32.totalorder %s15, 0
    %p98 = por %p96, %p97
    %s99 = ssub.s32 %s16, %s28
    %s100 = ssub.s32 %s17, %s24
    %s101 = sor.u32 %s99, %s100
    %p102 = scmp.eq.s32.totalorder %s101, 0
    %s104 = sadd.s32 %s103, 1
    %s105 = scalar_select %p102, %s103, %s104
    %p108 = pneg %p102
    %p109 = scmp.eq.s32.totalorder %s9, 3
    %p110 = por %p108, %p109
    %p111 = scmp.ne.s32.totalorder %s103, %s106
    %p112 = scmp.eq.s32.totalorder %s9, 0
    %p113 = por %p111, %p112
    %p114 = scmp.ne.s32.totalorder %s103, %s106
    %p115 = scmp.eq.s32.totalorder %s14, 3
    %p116 = por %p114, %p115
    %p117 = scmp.ne.s32.totalorder %s106, %s107
    %p118 = scmp.eq.s32.totalorder %s14, 0
    %p119 = por %p117, %p118
    %p120 = scmp.ne.s32.totalorder %s106, %s107
    %p121 = scmp.eq.s32.totalorder %s15, 3
    %p122 = por %p120, %p121
    %p124 = scmp.ne.s32.totalorder %s107, %s123
    %p125 = scmp.eq.s32.totalorder %s15, 0
    %p126 = por %p124, %p125
    %p127 = scmp.le.s32.totalorder 1, %s9
    %p128 = scmp.lt.s32.totalorder %s9, 5
    %p129 = pnand %p127, %p128
    %p130 = pneg %p129
    // Predicated region
    $region9: #{unet_conv2_forward.5} parent=5 // pred_check
      _
    $region10: #{unet_conv2_forward.5} parent=5 // pred_check_branch
      %132 = sbr.rel (%p129) target = $region12
    $region11: #{unet_conv2_forward.5} parent=5 // pred_region
      %s133 = ssub.s32 %s9, 1
      // Predicated region
      $region13: #{unet_conv2_forward.5} parent=11 // pred_check
        %p134 = pneg %p70
      $region14: #{unet_conv2_forward.5} parent=11 // pred_check_branch
        %136 = sbr.rel (%p134) target = $region16
      $region15: #{unet_conv2_forward.5} parent=11 // pred_region
        _
      $region16: #{unet_conv2_forward.5} parent=11 // pred_fallthru
        _
      // Predicated region
      $region17: #{unet_conv2_forward.5} parent=11 // pred_check
        %p137 = pneg %p91
      $region18: #{unet_conv2_forward.5} parent=11 // pred_check_branch
        %139 = sbr.rel (%p137) target = $region20
      $region19: #{unet_conv2_forward.5} parent=11 // pred_region
        _
      $region20: #{unet_conv2_forward.5} parent=11 // pred_fallthru
        _
    $region12: #{unet_conv2_forward.5} parent=5 // pred_fallthru
      _
    %p140 = scmp.lt.s32.totalorder %s9, 4
    // Predicated region
    $region21: #{unet_conv2_forward.5} parent=5 // pred_check
      %p141 = pneg %p140
    $region22: #{unet_conv2_forward.5} parent=5 // pred_check_branch
      %143 = sbr.rel (%p141) target = $region24
    $region23: #{unet_conv2_forward.5} parent=5 // pred_region
      // Predicated region
      $region25: #{unet_conv2_forward.5} parent=23 // pred_check
        %p144 = pneg %p43
      $region26: #{unet_conv2_forward.5} parent=23 // pred_check_branch
        %146 = sbr.rel (%p144) target = $region28
      $region27: #{unet_conv2_forward.5} parent=23 // pred_region
        %s147 = smul.u32 16, %s17
        %p148 = scmp.lt.s32.totalorder %s16, 1
        %s149 = scalar_select %p148, %s16, 1
        %p150 = scmp.lt.s32.totalorder %s147, 31
        %s151 = scalar_select %p150, %s147, 31
        %s152 = smul.addr %s149, 32
        %s153 = sadd.s32 %s151, %s152
        %s154 = smul.addr %s153, 4
        %s155 = scalar_lea.vmem %s0, %s154
        %s156 = smul.u32 16, %s17
      $region28: #{unet_conv2_forward.5} parent=23 // pred_fallthru
        _
    $region24: #{unet_conv2_forward.5} parent=5 // pred_fallthru
      _
    %p157 = scmp.le.s32.totalorder 1, %s9
    %p158 = scmp.lt.s32.totalorder %s9, 5
    %p159 = pnand %p157, %p158
    %p160 = pneg %p159
    // Predicated region
    $region29: #{unet_conv2_forward.5} parent=5 // pred_check
      _
    $region30: #{unet_conv2_forward.5} parent=5 // pred_check_branch
      %162 = sbr.rel (%p159) target = $region32
    $region31: #{unet_conv2_forward.5} parent=5 // pred_region
      %s163 = ssub.s32 %s9, 1
      %s164 = smul.u32 16, %s19
      %p165 = scmp.lt.s32.totalorder %s18, 1
      %s166 = scalar_select %p165, %s18, 1
      %p167 = scmp.lt.s32.totalorder %s164, 31
      %s168 = scalar_select %p167, %s164, 31
      %s169 = smul.addr %s166, 32
      %s170 = sadd.s32 %s168, %s169
      %s171 = smul.addr %s170, 4
      %s172 = scalar_lea.vmem %s0, %s171
      %p173 = pneg %p49
      %p174 = pneg %p46
      %p175 = pneg %p70
      %p176 = pneg %p67
      %p177 = pneg %p91
      %p178 = pneg %p88
      %p179 = pneg %p119
      %p180 = pneg %p116
      %s181 = smul.u32 16, %s19
      %p182 = scmp.lt.s32.totalorder %s18, 1
      %s183 = scalar_select %p182, %s18, 1
      %p184 = scmp.lt.s32.totalorder %s181, 31
      %s185 = scalar_select %p184, %s181, 31
      %s186 = smul.addr %s183, 32
      %s187 = sadd.s32 %s185, %s186
      %s188 = smul.addr %s187, 4
      %s189 = scalar_lea.vmem %s3, %s188
      %s190 = smul.u32 16, %s19
      %p191 = scmp.lt.s32.totalorder %s18, 1
      %s192 = scalar_select %p191, %s18, 1
      %p193 = scmp.lt.s32.totalorder %s190, 31
      %s194 = scalar_select %p193, %s190, 31
      %s195 = smul.addr %s192, 32
      %s196 = sadd.s32 %s194, %s195
      %s197 = smul.addr %s196, 4
      %s198 = scalar_lea.vmem %s0, %s197
      %s199 = smul.u32 16, %s19
      %s200 = smul.u32 16, %s19
      %p201 = scmp.lt.s32.totalorder %s18, 1
      %s202 = scalar_select %p201, %s18, 1
      %p203 = scmp.lt.s32.totalorder %s200, 31
      %s204 = scalar_select %p203, %s200, 31
      %s205 = smul.addr %s202, 32
      %s206 = sadd.s32 %s204, %s205
      %s207 = smul.addr %s206, 4
      %s208 = scalar_lea.vmem %s3, %s207
      %s209 = smul.u32 16, %s19
      %v210 = vld [vmem:[%s198] sm:$0xf]
      %v211 = vld [vmem:[%s198 + $0x4] sm:$0xf]
      %v212 = vld [vmem:[%s198 + $0x8] sm:$0xf]
      %v213 = vld [vmem:[%s198 + $0xc] sm:$0xf]
      %v214 = vld [vmem:[%s198 + $0x10] sm:$0xf]
      %v215 = vld [vmem:[%s198 + $0x14] sm:$0xf]
      %v216 = vld [vmem:[%s198 + $0x18] sm:$0xf]
      %v217 = vld [vmem:[%s198 + $0x1c] sm:$0xf]
      %v218 = vld [vmem:[%s198 + $0x20] sm:$0xf]
      %v219 = vld [vmem:[%s198 + $0x24] sm:$0xf]
      %v220 = vld [vmem:[%s198 + $0x28] sm:$0xf]
      %v221 = vld [vmem:[%s198 + $0x2c] sm:$0xf]
      %v222 = vld [vmem:[%s198 + $0x30] sm:$0xf]
      %v223 = vld [vmem:[%s198 + $0x34] sm:$0xf]
      %v224 = vld [vmem:[%s198 + $0x38] sm:$0xf]
      %v225 = vld [vmem:[%s198 + $0x3c] sm:$0xf]
      %v226 = vunpack.c.l.bf16 %v210
      %v227 = vunpack.c.l.bf16 %v211
      %v228 = vunpack.c.l.bf16 %v212
      %v229 = vunpack.c.l.bf16 %v213
      %v230 = vunpack.c.l.bf16 %v214
      %v231 = vunpack.c.l.bf16 %v215
      %v232 = vunpack.c.l.bf16 %v216
      %v233 = vunpack.c.l.bf16 %v217
      %v234 = vunpack.c.l.bf16 %v218
      %v235 = vunpack.c.l.bf16 %v219
      %v236 = vunpack.c.l.bf16 %v220
      %v237 = vunpack.c.l.bf16 %v221
      %v238 = vunpack.c.l.bf16 %v222
      %v239 = vunpack.c.l.bf16 %v223
      %v240 = vunpack.c.l.bf16 %v224
      %v241 = vunpack.c.l.bf16 %v225
      %v242 = vld [vmem:[%s1] sm:$0x1]
      %v244 = vperm.slane %v242, 0
      %v246 = vmul.f32 %v226, %v244
      %v247 = vmul.f32 %v227, %v244
      %v248 = vmul.f32 %v228, %v244
      %v249 = vmul.f32 %v229, %v244
      %v250 = vmul.f32 %v230, %v244
      %v251 = vmul.f32 %v231, %v244
      %v252 = vmul.f32 %v232, %v244
      %v253 = vmul.f32 %v233, %v244
      %v254 = vmul.f32 %v234, %v244
      %v255 = vmul.f32 %v235, %v244
      %v256 = vmul.f32 %v236, %v244
      %v257 = vmul.f32 %v237, %v244
      %v258 = vmul.f32 %v238, %v244
      %v259 = vmul.f32 %v239, %v244
      %v260 = vmul.f32 %v240, %v244
      %v261 = vmul.f32 %v241, %v244
      %v262 = vld [vmem:[%s2] sm:$0x1]
      %v264 = vperm.slane %v262, 0
      %v266 = vadd.f32 %v246, %v264
      %v267 = vadd.f32 %v247, %v264
      %v268 = vadd.f32 %v248, %v264
      %v269 = vadd.f32 %v249, %v264
      %v270 = vadd.f32 %v250, %v264
      %v271 = vadd.f32 %v251, %v264
      %v272 = vadd.f32 %v252, %v264
      %v273 = vadd.f32 %v253, %v264
      %v274 = vadd.f32 %v254, %v264
      %v275 = vadd.f32 %v255, %v264
      %v276 = vadd.f32 %v256, %v264
      %v277 = vadd.f32 %v257, %v264
      %v278 = vadd.f32 %v258, %v264
      %v279 = vadd.f32 %v259, %v264
      %v280 = vadd.f32 %v260, %v264
      %v281 = vadd.f32 %v261, %v264
      %v282 = vmax.f32 %v266, 0.0
      %v283 = vmax.f32 %v267, 0.0
      %v284 = vmax.f32 %v268, 0.0
      %v285 = vmax.f32 %v269, 0.0
      %v286 = vmax.f32 %v270, 0.0
      %v287 = vmax.f32 %v271, 0.0
      %v288 = vmax.f32 %v272, 0.0
      %v289 = vmax.f32 %v273, 0.0
      %v290 = vmax.f32 %v274, 0.0
      %v291 = vmax.f32 %v275, 0.0
      %v292 = vmax.f32 %v276, 0.0
      %v293 = vmax.f32 %v277, 0.0
      %v294 = vmax.f32 %v278, 0.0
      %v295 = vmax.f32 %v279, 0.0
      %v296 = vmax.f32 %v280, 0.0
      %v297 = vmax.f32 %v281, 0.0
      %v298 = vpack.c.bf16 %v282, %v282
      %v299 = vpack.c.bf16 %v283, %v283
      %v300 = vpack.c.bf16 %v284, %v284
      %v301 = vpack.c.bf16 %v285, %v285
      %v302 = vpack.c.bf16 %v286, %v286
      %v303 = vpack.c.bf16 %v287, %v287
      %v304 = vpack.c.bf16 %v288, %v288
      %v305 = vpack.c.bf16 %v289, %v289
      %v306 = vpack.c.bf16 %v290, %v290
      %v307 = vpack.c.bf16 %v291, %v291
      %v308 = vpack.c.bf16 %v292, %v292
      %v309 = vpack.c.bf16 %v293, %v293
      %v310 = vpack.c.bf16 %v294, %v294
      %v311 = vpack.c.bf16 %v295, %v295
      %v312 = vpack.c.bf16 %v296, %v296
      %v313 = vpack.c.bf16 %v297, %v297
      %314 = vst [vmem:[%s208] sm:$0xf] %v298
      %315 = vst [vmem:[%s208 + $0x4] sm:$0xf] %v299
      %316 = vst [vmem:[%s208 + $0x8] sm:$0xf] %v300
      %317 = vst [vmem:[%s208 + $0xc] sm:$0xf] %v301
      %318 = vst [vmem:[%s208 + $0x10] sm:$0xf] %v302
      %319 = vst [vmem:[%s208 + $0x14] sm:$0xf] %v303
      %320 = vst [vmem:[%s208 + $0x18] sm:$0xf] %v304
      %321 = vst [vmem:[%s208 + $0x1c] sm:$0xf] %v305
      %322 = vst [vmem:[%s208 + $0x20] sm:$0xf] %v306
      %323 = vst [vmem:[%s208 + $0x24] sm:$0xf] %v307
      %324 = vst [vmem:[%s208 + $0x28] sm:$0xf] %v308
      %325 = vst [vmem:[%s208 + $0x2c] sm:$0xf] %v309
      %326 = vst [vmem:[%s208 + $0x30] sm:$0xf] %v310
      %327 = vst [vmem:[%s208 + $0x34] sm:$0xf] %v311
      %328 = vst [vmem:[%s208 + $0x38] sm:$0xf] %v312
      %329 = vst [vmem:[%s208 + $0x3c] sm:$0xf] %v313
      %s330 = smul.u32 16, %s19
      %p331 = scmp.lt.s32.totalorder %s18, 1
      %s332 = scalar_select %p331, %s18, 1
      %p333 = scmp.lt.s32.totalorder %s330, 31
      %s334 = scalar_select %p333, %s330, 31
      %s335 = smul.addr %s332, 32
      %s336 = sadd.s32 %s334, %s335
      %s337 = smul.addr %s336, 4
      %s338 = scalar_lea.vmem %s3, %s337
      // Predicated region
      $region33: #{unet_conv2_forward.5} parent=31 // pred_check
        %p339 = pneg %p116
      $region34: #{unet_conv2_forward.5} parent=31 // pred_check_branch
        %341 = sbr.rel (%p339) target = $region36
      $region35: #{unet_conv2_forward.5} parent=31 // pred_region
        %s342 = smul.u32 16, %s19
      $region36: #{unet_conv2_forward.5} parent=31 // pred_fallthru
        _
    $region32: #{unet_conv2_forward.5} parent=5 // pred_fallthru
      _
    %p343 = scmp.le.s32.totalorder 2, %s9
    // Predicated region
    $region37: #{unet_conv2_forward.5} parent=5 // pred_check
      %p344 = pneg %p343
    $region38: #{unet_conv2_forward.5} parent=5 // pred_check_branch
      %346 = sbr.rel (%p344) target = $region40
    $region39: #{unet_conv2_forward.5} parent=5 // pred_region
      %s347 = ssub.s32 %s9, 2
      // Predicated region
      $region41: #{unet_conv2_forward.5} parent=39 // pred_check
        %p348 = pneg %p122
      $region42: #{unet_conv2_forward.5} parent=39 // pred_check_branch
        %350 = sbr.rel (%p348) target = $region44
      $region43: #{unet_conv2_forward.5} parent=39 // pred_region
        %s351 = smul.u32 16, %s21
        %p352 = scmp.lt.s32.totalorder %s20, 1
        %s353 = scalar_select %p352, %s20, 1
        %p354 = scmp.lt.s32.totalorder %s351, 31
        %s355 = scalar_select %p354, %s351, 31
        %s356 = smul.addr %s353, 32
        %s357 = sadd.s32 %s355, %s356
        %s358 = smul.addr %s357, 4
        %s359 = scalar_lea.vmem %s3, %s358
      $region44: #{unet_conv2_forward.5} parent=39 // pred_fallthru
        _
    $region40: #{unet_conv2_forward.5} parent=5 // pred_fallthru
      _
  $region6: #{unet_conv2_forward.5} parent=0 // loop_footer
    %s13 = sadd.s32 1, %s9
  $region7: #{unet_conv2_forward.5} parent=0 // loop_footer_branch
    %8 = sbr.rel target = $region3
  $region8: #{unet_conv2_forward.5} parent=0 // loop_exit
    _

// kernel: unet_conv2_forward.7
$region0: #{unet_conv2_forward.7}
  #allocation0 [shape = 'u32[]', space=smem, size = 0x4, offset = 0x4, fixed_abs, tag = 'smem constant byte address 0x4 - core index']
  #allocation1 [shape = 'u32[72,128]{1,0:T(1,128)}', space=vmem, size = 0x9000, scoped, tag = 'internal scratch']
  %s0 = inlined_call_operand.vmem [shape: bf16[2,256,128], index: 0, kind: input, shape index: {}]
  %s1 = inlined_call_operand.vmem [shape: f32[1,128], index: 1, kind: input, shape index: {}]
  %s2 = inlined_call_operand.vmem [shape: f32[1,128], index: 2, kind: input, shape index: {}]
  %s3 = inlined_call_operand.vmem [shape: f32[2,256,128], index: 3, kind: output, shape index: {}]
  %s4 = sld [smem:[#allocation0]]
  $region45: #{unet_conv2_forward.7} parent=0
    _
  %s6 = ssub.s32 1, %s4
  %s7 = scalar_select 0, %s6, %s4
  loop: start=0, step=1, limit=6
  $region2: #{unet_conv2_forward.7} parent=0 // loop_pre_header
    _
  $region3: #{unet_conv2_forward.7} parent=0 // loop_header
    %s9 = sphi 0, %s13
    %p10 = scmp.ge.s32.totalorder %s9, 6
    %s16 = sphi 0, %s28
    %s17 = sphi 0, %s24
    %s18 = sphi 0, %s16
    %s19 = sphi 0, %s17
    %s20 = sphi 0, %s18
    %s21 = sphi 0, %s19
    %s33 = sphi 0, %s35
    %s36 = sphi 0, %s33
    %s37 = sphi 0, %s36
    %s53 = sphi 0, %s37
    %s57 = sphi 0, %s57
    %s59 = sphi 0, %s57
    %s60 = sphi 0, %s59
    %s74 = sphi 0, %s60
    %s78 = sphi 0, %s78
    %s80 = sphi 0, %s78
    %s81 = sphi 0, %s80
    %s95 = sphi 0, %s81
    %s103 = sphi 0, %s105
    %s106 = sphi 0, %s103
    %s107 = sphi 0, %s106
    %s123 = sphi 0, %s107
  $region4: #{unet_conv2_forward.7} parent=0 // loop_header_branch
    %12 = sbr.rel (%p10) target = $region8
  $region5: #{unet_conv2_forward.7} parent=0 // loop_body
    %s14 = ssub.s32 %s9, 1
    %s15 = ssub.s32 %s9, 2
    %s22 = sadd.s32 1, %s17
    %p23 = scmp.ge.s32.totalorder %s22, 2
    %s24 = scalar_select %p23, 0, %s22
    %s25 = sadd.s32 1, %s16
    %s26 = scalar_select %p23, %s25, %s16
    %p27 = scmp.ge.s32.totalorder %s26, 2
    %s28 = scalar_select %p27, 0, %s26
    %s29 = ssub.s32 %s16, %s28
    %s30 = ssub.s32 %s17, %s24
    %s31 = sor.u32 %s29, %s30
    %p32 = scmp.eq.s32.totalorder %s31, 0
    %s34 = sadd.s32 %s33, 1
    %s35 = scalar_select %p32, %s33, %s34
    %p38 = pneg %p32
    %p39 = scmp.eq.s32.totalorder %s9, 3
    %p40 = por %p38, %p39
    %p41 = scmp.ne.s32.totalorder %s33, %s36
    %p42 = scmp.eq.s32.totalorder %s9, 0
    %p43 = por %p41, %p42
    %p44 = scmp.ne.s32.totalorder %s33, %s36
    %p45 = scmp.eq.s32.totalorder %s14, 3
    %p46 = por %p44, %p45
    %p47 = scmp.ne.s32.totalorder %s36, %s37
    %p48 = scmp.eq.s32.totalorder %s14, 0
    %p49 = por %p47, %p48
    %p50 = scmp.ne.s32.totalorder %s36, %s37
    %p51 = scmp.eq.s32.totalorder %s15, 3
    %p52 = por %p50, %p51
    %p54 = scmp.ne.s32.totalorder %s37, %s53
    %p55 = scmp.eq.s32.totalorder %s15, 0
    %p56 = por %p54, %p55
    %s58 = sadd.s32 %s57, 1
    %p61 = scmp.eq.s32.totalorder %s9, 3
    %p62 = scmp.ne.s32.totalorder %s57, %s59
    %p63 = scmp.eq.s32.totalorder %s9, 0
    %p64 = por %p62, %p63
    %p65 = scmp.ne.s32.totalorder %s57, %s59
    %p66 = scmp.eq.s32.totalorder %s14, 3
    %p67 = por %p65, %p66
    %p68 = scmp.ne.s32.totalorder %s59, %s60
    %p69 = scmp.eq.s32.totalorder %s14, 0
    %p70 = por %p68, %p69
    %p71 = scmp.ne.s32.totalorder %s59, %s60
    %p72 = scmp.eq.s32.totalorder %s15, 3
    %p73 = por %p71, %p72
    %p75 = scmp.ne.s32.totalorder %s60, %s74
    %p76 = scmp.eq.s32.totalorder %s15, 0
    %p77 = por %p75, %p76
    %s79 = sadd.s32 %s78, 1
    %p82 = scmp.eq.s32.totalorder %s9, 3
    %p83 = scmp.ne.s32.totalorder %s78, %s80
    %p84 = scmp.eq.s32.totalorder %s9, 0
    %p85 = por %p83, %p84
    %p86 = scmp.ne.s32.totalorder %s78, %s80
    %p87 = scmp.eq.s32.totalorder %s14, 3
    %p88 = por %p86, %p87
    %p89 = scmp.ne.s32.totalorder %s80, %s81
    %p90 = scmp.eq.s32.totalorder %s14, 0
    %p91 = por %p89, %p90
    %p92 = scmp.ne.s32.totalorder %s80, %s81
    %p93 = scmp.eq.s32.totalorder %s15, 3
    %p94 = por %p92, %p93
    %p96 = scmp.ne.s32.totalorder %s81, %s95
    %p97 = scmp.eq.s32.totalorder %s15, 0
    %p98 = por %p96, %p97
    %s99 = ssub.s32 %s16, %s28
    %s100 = ssub.s32 %s17, %s24
    %s101 = sor.u32 %s99, %s100
    %p102 = scmp.eq.s32.totalorder %s101, 0
    %s104 = sadd.s32 %s103, 1
    %s105 = scalar_select %p102, %s103, %s104
    %p108 = pneg %p102
    %p109 = scmp.eq.s32.totalorder %s9, 3
    %p110 = por %p108, %p109
    %p111 = scmp.ne.s32.totalorder %s103, %s106
    %p112 = scmp.eq.s32.totalorder %s9, 0
    %p113 = por %p111, %p112
    %p114 = scmp.ne.s32.totalorder %s103, %s106
    %p115 = scmp.eq.s32.totalorder %s14, 3
    %p116 = por %p114, %p115
    %p117 = scmp.ne.s32.totalorder %s106, %s107
    %p118 = scmp.eq.s32.totalorder %s14, 0
    %p119 = por %p117, %p118
    %p120 = scmp.ne.s32.totalorder %s106, %s107
    %p121 = scmp.eq.s32.totalorder %s15, 3
    %p122 = por %p120, %p121
    %p124 = scmp.ne.s32.totalorder %s107, %s123
    %p125 = scmp.eq.s32.totalorder %s15, 0
    %p126 = por %p124, %p125
    %p127 = scmp.le.s32.totalorder 1, %s9
    %p128 = scmp.lt.s32.totalorder %s9, 5
    %p129 = pnand %p127, %p128
    %p130 = pneg %p129
    // Predicated region
    $region9: #{unet_conv2_forward.7} parent=5 // pred_check
      _
    $region10: #{unet_conv2_forward.7} parent=5 // pred_check_branch
      %132 = sbr.rel (%p129) target = $region12
    $region11: #{unet_conv2_forward.7} parent=5 // pred_region
      %s133 = ssub.s32 %s9, 1
      // Predicated region
      $region13: #{unet_conv2_forward.7} parent=11 // pred_check
        %p134 = pneg %p70
      $region14: #{unet_conv2_forward.7} parent=11 // pred_check_branch
        %136 = sbr.rel (%p134) target = $region16
      $region15: #{unet_conv2_forward.7} parent=11 // pred_region
        _
      $region16: #{unet_conv2_forward.7} parent=11 // pred_fallthru
        _
      // Predicated region
      $region17: #{unet_conv2_forward.7} parent=11 // pred_check
        %p137 = pneg %p91
      $region18: #{unet_conv2_forward.7} parent=11 // pred_check_branch
        %139 = sbr.rel (%p137) target = $region20
      $region19: #{unet_conv2_forward.7} parent=11 // pred_region
        _
      $region20: #{unet_conv2_forward.7} parent=11 // pred_fallthru
        _
    $region12: #{unet_conv2_forward.7} parent=5 // pred_fallthru
      _
    %p140 = scmp.lt.s32.totalorder %s9, 4
    // Predicated region
    $region21: #{unet_conv2_forward.7} parent=5 // pred_check
      %p141 = pneg %p140
    $region22: #{unet_conv2_forward.7} parent=5 // pred_check_branch
      %143 = sbr.rel (%p141) target = $region24
    $region23: #{unet_conv2_forward.7} parent=5 // pred_region
      // Predicated region
      $region25: #{unet_conv2_forward.7} parent=23 // pred_check
        %p144 = pneg %p43
      $region26: #{unet_conv2_forward.7} parent=23 // pred_check_branch
        %146 = sbr.rel (%p144) target = $region28
      $region27: #{unet_conv2_forward.7} parent=23 // pred_region
        %s147 = smul.u32 16, %s17
        %p148 = scmp.lt.s32.totalorder %s16, 1
        %s149 = scalar_select %p148, %s16, 1
        %p150 = scmp.lt.s32.totalorder %s147, 31
        %s151 = scalar_select %p150, %s147, 31
        %s152 = smul.addr %s149, 32
        %s153 = sadd.s32 %s151, %s152
        %s154 = smul.addr %s153, 4
        %s155 = scalar_lea.vmem %s0, %s154
        %s156 = smul.u32 16, %s17
      $region28: #{unet_conv2_forward.7} parent=23 // pred_fallthru
        _
    $region24: #{unet_conv2_forward.7} parent=5 // pred_fallthru
      _
    %p157 = scmp.le.s32.totalorder 1, %s9
    %p158 = scmp.lt.s32.totalorder %s9, 5
    %p159 = pnand %p157, %p158
    %p160 = pneg %p159
    // Predicated region
    $region29: #{unet_conv2_forward.7} parent=5 // pred_check
      _
    $region30: #{unet_conv2_forward.7} parent=5 // pred_check_branch
      %162 = sbr.rel (%p159) target = $region32
    $region31: #{unet_conv2_forward.7} parent=5 // pred_region
      %s163 = ssub.s32 %s9, 1
      %s164 = smul.u32 16, %s19
      %p165 = scmp.lt.s32.totalorder %s18, 1
      %s166 = scalar_select %p165, %s18, 1
      %p167 = scmp.lt.s32.totalorder %s164, 31
      %s168 = scalar_select %p167, %s164, 31
      %s169 = smul.addr %s166, 32
      %s170 = sadd.s32 %s168, %s169
      %s171 = smul.addr %s170, 4
      %s172 = scalar_lea.vmem %s0, %s171
      %p173 = pneg %p49
      %p174 = pneg %p46
      %p175 = pneg %p70
      %p176 = pneg %p67
      %p177 = pneg %p91
      %p178 = pneg %p88
      %p179 = pneg %p119
      %p180 = pneg %p116
      %s181 = smul.u32 16, %s19
      %p182 = scmp.lt.s32.totalorder %s18, 1
      %s183 = scalar_select %p182, %s18, 1
      %p184 = scmp.lt.s32.totalorder %s181, 31
      %s185 = scalar_select %p184, %s181, 31
      %s186 = smul.addr %s183, 32
      %s187 = sadd.s32 %s185, %s186
      %s188 = smul.addr %s187, 8
      %s189 = scalar_lea.vmem %s3, %s188
      %s190 = smul.u32 16, %s19
      %p191 = scmp.lt.s32.totalorder %s18, 1
      %s192 = scalar_select %p191, %s18, 1
      %p193 = scmp.lt.s32.totalorder %s190, 31
      %s194 = scalar_select %p193, %s190, 31
      %s195 = smul.addr %s192, 32
      %s196 = sadd.s32 %s194, %s195
      %s197 = smul.addr %s196, 4
      %s198 = scalar_lea.vmem %s0, %s197
      %s199 = smul.u32 16, %s19
      %s200 = smul.u32 16, %s19
      %p201 = scmp.lt.s32.totalorder %s18, 1
      %s202 = scalar_select %p201, %s18, 1
      %p203 = scmp.lt.s32.totalorder %s200, 31
      %s204 = scalar_select %p203, %s200, 31
      %s205 = smul.addr %s202, 32
      %s206 = sadd.s32 %s204, %s205
      %s207 = smul.addr %s206, 8
      %s208 = scalar_lea.vmem %s3, %s207
      %s209 = smul.u32 16, %s19
      %v210 = vld [vmem:[%s198] sm:$0xf]
      %v211 = vld [vmem:[%s198 + $0x4] sm:$0xf]
      %v212 = vld [vmem:[%s198 + $0x8] sm:$0xf]
      %v213 = vld [vmem:[%s198 + $0xc] sm:$0xf]
      %v214 = vld [vmem:[%s198 + $0x10] sm:$0xf]
      %v215 = vld [vmem:[%s198 + $0x14] sm:$0xf]
      %v216 = vld [vmem:[%s198 + $0x18] sm:$0xf]
      %v217 = vld [vmem:[%s198 + $0x1c] sm:$0xf]
      %v218 = vld [vmem:[%s198 + $0x20] sm:$0xf]
      %v219 = vld [vmem:[%s198 + $0x24] sm:$0xf]
      %v220 = vld [vmem:[%s198 + $0x28] sm:$0xf]
      %v221 = vld [vmem:[%s198 + $0x2c] sm:$0xf]
      %v222 = vld [vmem:[%s198 + $0x30] sm:$0xf]
      %v223 = vld [vmem:[%s198 + $0x34] sm:$0xf]
      %v224 = vld [vmem:[%s198 + $0x38] sm:$0xf]
      %v225 = vld [vmem:[%s198 + $0x3c] sm:$0xf]
      %v226 = vunpack.c.l.bf16 %v210
      %v227 = vunpack.c.l.bf16 %v211
      %v228 = vunpack.c.l.bf16 %v212
      %v229 = vunpack.c.l.bf16 %v213
      %v230 = vunpack.c.l.bf16 %v214
      %v231 = vunpack.c.l.bf16 %v215
      %v232 = vunpack.c.l.bf16 %v216
      %v233 = vunpack.c.l.bf16 %v217
      %v234 = vunpack.c.l.bf16 %v218
      %v235 = vunpack.c.l.bf16 %v219
      %v236 = vunpack.c.l.bf16 %v220
      %v237 = vunpack.c.l.bf16 %v221
      %v238 = vunpack.c.l.bf16 %v222
      %v239 = vunpack.c.l.bf16 %v223
      %v240 = vunpack.c.l.bf16 %v224
      %v241 = vunpack.c.l.bf16 %v225
      %v242 = vld [vmem:[%s1] sm:$0x1]
      %v244 = vperm.slane %v242, 0
      %v246 = vmul.f32 %v226, %v244
      %v247 = vmul.f32 %v227, %v244
      %v248 = vmul.f32 %v228, %v244
      %v249 = vmul.f32 %v229, %v244
      %v250 = vmul.f32 %v230, %v244
      %v251 = vmul.f32 %v231, %v244
      %v252 = vmul.f32 %v232, %v244
      %v253 = vmul.f32 %v233, %v244
      %v254 = vmul.f32 %v234, %v244
      %v255 = vmul.f32 %v235, %v244
      %v256 = vmul.f32 %v236, %v244
      %v257 = vmul.f32 %v237, %v244
      %v258 = vmul.f32 %v238, %v244
      %v259 = vmul.f32 %v239, %v244
      %v260 = vmul.f32 %v240, %v244
      %v261 = vmul.f32 %v241, %v244
      %v262 = vld [vmem:[%s2] sm:$0x1]
      %v264 = vperm.slane %v262, 0
      %v266 = vadd.f32 %v246, %v264
      %v267 = vadd.f32 %v247, %v264
      %v268 = vadd.f32 %v248, %v264
      %v269 = vadd.f32 %v249, %v264
      %v270 = vadd.f32 %v250, %v264
      %v271 = vadd.f32 %v251, %v264
      %v272 = vadd.f32 %v252, %v264
      %v273 = vadd.f32 %v253, %v264
      %v274 = vadd.f32 %v254, %v264
      %v275 = vadd.f32 %v255, %v264
      %v276 = vadd.f32 %v256, %v264
      %v277 = vadd.f32 %v257, %v264
      %v278 = vadd.f32 %v258, %v264
      %v279 = vadd.f32 %v259, %v264
      %v280 = vadd.f32 %v260, %v264
      %v281 = vadd.f32 %v261, %v264
      %v282 = vmax.f32 %v266, 0.0
      %v283 = vmax.f32 %v267, 0.0
      %v284 = vmax.f32 %v268, 0.0
      %v285 = vmax.f32 %v269, 0.0
      %v286 = vmax.f32 %v270, 0.0
      %v287 = vmax.f32 %v271, 0.0
      %v288 = vmax.f32 %v272, 0.0
      %v289 = vmax.f32 %v273, 0.0
      %v290 = vmax.f32 %v274, 0.0
      %v291 = vmax.f32 %v275, 0.0
      %v292 = vmax.f32 %v276, 0.0
      %v293 = vmax.f32 %v277, 0.0
      %v294 = vmax.f32 %v278, 0.0
      %v295 = vmax.f32 %v279, 0.0
      %v296 = vmax.f32 %v280, 0.0
      %v297 = vmax.f32 %v281, 0.0
      %298 = vst [vmem:[%s208] sm:$0xff] %v282
      %299 = vst [vmem:[%s208 + $0x8] sm:$0xff] %v283
      %300 = vst [vmem:[%s208 + $0x10] sm:$0xff] %v284
      %301 = vst [vmem:[%s208 + $0x18] sm:$0xff] %v285
      %302 = vst [vmem:[%s208 + $0x20] sm:$0xff] %v286
      %303 = vst [vmem:[%s208 + $0x28] sm:$0xff] %v287
      %304 = vst [vmem:[%s208 + $0x30] sm:$0xff] %v288
      %305 = vst [vmem:[%s208 + $0x38] sm:$0xff] %v289
      %306 = vst [vmem:[%s208 + $0x40] sm:$0xff] %v290
      %307 = vst [vmem:[%s208 + $0x48] sm:$0xff] %v291
      %308 = vst [vmem:[%s208 + $0x50] sm:$0xff] %v292
      %309 = vst [vmem:[%s208 + $0x58] sm:$0xff] %v293
      %310 = vst [vmem:[%s208 + $0x60] sm:$0xff] %v294
      %311 = vst [vmem:[%s208 + $0x68] sm:$0xff] %v295
      %312 = vst [vmem:[%s208 + $0x70] sm:$0xff] %v296
      %313 = vst [vmem:[%s208 + $0x78] sm:$0xff] %v297
      %s314 = smul.u32 16, %s19
      %p315 = scmp.lt.s32.totalorder %s18, 1
      %s316 = scalar_select %p315, %s18, 1
      %p317 = scmp.lt.s32.totalorder %s314, 31
      %s318 = scalar_select %p317, %s314, 31
      %s319 = smul.addr %s316, 32
      %s320 = sadd.s32 %s318, %s319
      %s321 = smul.addr %s320, 8
      %s322 = scalar_lea.vmem %s3, %s321
      // Predicated region
      $region33: #{unet_conv2_forward.7} parent=31 // pred_check
        %p323 = pneg %p116
      $region34: #{unet_conv2_forward.7} parent=31 // pred_check_branch
        %325 = sbr.rel (%p323) target = $region36
      $region35: #{unet_conv2_forward.7} parent=31 // pred_region
        %s326 = smul.u32 16, %s19
      $region36: #{unet_conv2_forward.7} parent=31 // pred_fallthru
        _
    $region32: #{unet_conv2_forward.7} parent=5 // pred_fallthru
      _
    %p327 = scmp.le.s32.totalorder 2, %s9
    // Predicated region
    $region37: #{unet_conv2_forward.7} parent=5 // pred_check
      %p328 = pneg %p327
    $region38: #{unet_conv2_forward.7} parent=5 // pred_check_branch
      %330 = sbr.rel (%p328) target = $region40
    $region39: #{unet_conv2_forward.7} parent=5 // pred_region
      %s331 = ssub.s32 %s9, 2
      // Predicated region
      $region41: #{unet_conv2_forward.7} parent=39 // pred_check
        %p332 = pneg %p122
      $region42: #{unet_conv2_forward.7} parent=39 // pred_check_branch
        %334 = sbr.rel (%p332) target = $region44
      $region43: #{unet_conv2_forward.7} parent=39 // pred_region
        %s335 = smul.u32 16, %s21
        %p336 = scmp.lt.s32.totalorder %s20, 1
        %s337 = scalar_select %p336, %s20, 1
        %p338 = scmp.lt.s32.totalorder %s335, 31
        %s339 = scalar_select %p338, %s335, 31
        %s340 = smul.addr %s337, 32
        %s341 = sadd.s32 %s339, %s340
        %s342 = smul.addr %s341, 8
        %s343 = scalar_lea.vmem %s3, %s342
      $region44: #{unet_conv2_forward.7} parent=39 // pred_fallthru
        _
    $region40: #{unet_conv2_forward.7} parent=5 // pred_fallthru
      _
  $region6: #{unet_conv2_forward.7} parent=0 // loop_footer
    %s13 = sadd.s32 1, %s9
  $region7: #{unet_conv2_forward.7} parent=0 // loop_footer_branch
    %8 = sbr.rel target = $region3
  $region8: #{unet_conv2_forward.7} parent=0 // loop_exit
    _

// kernel: unet_conv2_forward.4
$region0: #{unet_conv2_forward.4}
  #allocation0 [shape = 'u32[]', space=smem, size = 0x4, offset = 0x4, fixed_abs, tag = 'smem constant byte address 0x4 - core index']
  #allocation1 [shape = 'u32[72,128]{1,0:T(1,128)}', space=vmem, size = 0x9000, scoped, tag = 'internal scratch']
  %s0 = inlined_call_operand.vmem [shape: bf16[2,18,18,4], index: 0, kind: input, shape index: {}, may-alias: {0,1}]
  %s1 = inlined_call_operand.vmem [shape: bf16[2,18,18,4], index: 1, kind: input, shape index: {}, may-alias: {0,1}]
  %s2 = inlined_call_operand.vmem [shape: bf16[9,4,128], index: 2, kind: input, shape index: {}]
  %s3 = inlined_call_operand.vmem [shape: bf16[2,256,128], index: 3, kind: output, shape index: {0}]
  %s4 = inlined_call_operand.vmem [shape: f32[2,2,1,128], index: 4, kind: output, shape index: {1}]
  %s5 = inlined_call_operand.vmem [shape: f32[2,2,1,128], index: 5, kind: output, shape index: {2}]
  %6 = xla_tuple %s3, %s4, %s5
  %s7 = sld [smem:[#allocation0]]
  $region61: #{unet_conv2_forward.4} parent=0
    _
  %s9 = ssub.s32 1, %s7
  %s10 = scalar_select 0, %s9, %s7
  loop: start=0, step=1, limit=6
  $region2: #{unet_conv2_forward.4} parent=0 // loop_pre_header
    _
  $region3: #{unet_conv2_forward.4} parent=0 // loop_header
    %s12 = sphi 0, %s16
    %p13 = scmp.ge.s32.totalorder %s12, 6
    %s19 = sphi 0, %s31
    %s20 = sphi 0, %s27
    %s21 = sphi 0, %s19
    %s22 = sphi 0, %s20
    %s23 = sphi 0, %s21
    %s24 = sphi 0, %s22
    %s36 = sphi 0, %s38
    %s39 = sphi 0, %s36
    %s40 = sphi 0, %s39
    %s56 = sphi 0, %s40
    %s68 = sphi 0, %s70
    %s71 = sphi 0, %s68
    %s72 = sphi 0, %s71
    %s88 = sphi 0, %s72
    %s92 = sphi 0, %s92
    %s94 = sphi 0, %s92
    %s95 = sphi 0, %s94
    %s109 = sphi 0, %s95
    %s117 = sphi 0, %s119
    %s120 = sphi 0, %s117
    %s121 = sphi 0, %s120
    %s137 = sphi 0, %s121
    %s145 = sphi 0, %s147
    %s148 = sphi 0, %s145
    %s149 = sphi 0, %s148
    %s165 = sphi 0, %s149
    %s173 = sphi 0, %s175
    %s176 = sphi 0, %s173
    %s177 = sphi 0, %s176
    %s193 = sphi 0, %s177
  $region4: #{unet_conv2_forward.4} parent=0 // loop_header_branch
    %15 = sbr.rel (%p13) target = $region8
  $region5: #{unet_conv2_forward.4} parent=0 // loop_body
    %s17 = ssub.s32 %s12, 1
    %s18 = ssub.s32 %s12, 2
    %s25 = sadd.s32 1, %s20
    %p26 = scmp.ge.s32.totalorder %s25, 2
    %s27 = scalar_select %p26, 0, %s25
    %s28 = sadd.s32 1, %s19
    %s29 = scalar_select %p26, %s28, %s19
    %p30 = scmp.ge.s32.totalorder %s29, 2
    %s31 = scalar_select %p30, 0, %s29
    %s32 = ssub.s32 %s19, %s31
    %s33 = ssub.s32 %s20, %s27
    %s34 = sor.u32 %s32, %s33
    %p35 = scmp.eq.s32.totalorder %s34, 0
    %s37 = sadd.s32 %s36, 1
    %s38 = scalar_select %p35, %s36, %s37
    %p41 = pneg %p35
    %p42 = scmp.eq.s32.totalorder %s12, 3
    %p43 = por %p41, %p42
    %p44 = scmp.ne.s32.totalorder %s36, %s39
    %p45 = scmp.eq.s32.totalorder %s12, 0
    %p46 = por %p44, %p45
    %p47 = scmp.ne.s32.totalorder %s36, %s39
    %p48 = scmp.eq.s32.totalorder %s17, 3
    %p49 = por %p47, %p48
    %p50 = scmp.ne.s32.totalorder %s39, %s40
    %p51 = scmp.eq.s32.totalorder %s17, 0
    %p52 = por %p50, %p51
    %p53 = scmp.ne.s32.totalorder %s39, %s40
    %p54 = scmp.eq.s32.totalorder %s18, 3
    %p55 = por %p53, %p54
    %p57 = scmp.ne.s32.totalorder %s40, %s56
    %p58 = scmp.eq.s32.totalorder %s18, 0
    %p59 = por %p57, %p58
    %s60 = sadd.s32 %s20, 1
    %s61 = smul.u32 %s60, 4
    %s62 = sadd.s32 %s27, 1
    %s63 = smul.u32 %s62, 4
    %s64 = ssub.s32 %s19, %s31
    %s65 = ssub.s32 %s61, %s63
    %s66 = sor.u32 %s64, %s65
    %p67 = scmp.eq.s32.totalorder %s66, 0
    %s69 = sadd.s32 %s68, 1
    %s70 = scalar_select %p67, %s68, %s69
    %p73 = pneg %p67
    %p74 = scmp.eq.s32.totalorder %s12, 3
    %p75 = por %p73, %p74
    %p76 = scmp.ne.s32.totalorder %s68, %s71
    %p77 = scmp.eq.s32.totalorder %s12, 0
    %p78 = por %p76, %p77
    %p79 = scmp.ne.s32.totalorder %s68, %s71
    %p80 = scmp.eq.s32.totalorder %s17, 3
    %p81 = por %p79, %p80
    %p82 = scmp.ne.s32.totalorder %s71, %s72
    %p83 = scmp.eq.s32.totalorder %s17, 0
    %p84 = por %p82, %p83
    %p85 = scmp.ne.s32.totalorder %s71, %s72
    %p86 = scmp.eq.s32.totalorder %s18, 3
    %p87 = por %p85, %p86
    %p89 = scmp.ne.s32.totalorder %s72, %s88
    %p90 = scmp.eq.s32.totalorder %s18, 0
    %p91 = por %p89, %p90
    %s93 = sadd.s32 %s92, 1
    %p96 = scmp.eq.s32.totalorder %s12, 3
    %p97 = scmp.ne.s32.totalorder %s92, %s94
    %p98 = scmp.eq.s32.totalorder %s12, 0
    %p99 = por %p97, %p98
    %p100 = scmp.ne.s32.totalorder %s92, %s94
    %p101 = scmp.eq.s32.totalorder %s17, 3
    %p102 = por %p100, %p101
    %p103 = scmp.ne.s32.totalorder %s94, %s95
    %p104 = scmp.eq.s32.totalorder %s17, 0
    %p105 = por %p103, %p104
    %p106 = scmp.ne.s32.totalorder %s94, %s95
    %p107 = scmp.eq.s32.totalorder %s18, 3
    %p108 = por %p106, %p107
    %p110 = scmp.ne.s32.totalorder %s95, %s109
    %p111 = scmp.eq.s32.totalorder %s18, 0
    %p112 = por %p110, %p111
    %s113 = ssub.s32 %s19, %s31
    %s114 = ssub.s32 %s20, %s27
    %s115 = sor.u32 %s113, %s114
    %p116 = scmp.eq.s32.totalorder %s115, 0
    %s118 = sadd.s32 %s117, 1
    %s119 = scalar_select %p116, %s117, %s118
    %p122 = pneg %p116
    %p123 = scmp.eq.s32.totalorder %s12, 3
    %p124 = por %p122, %p123
    %p125 = scmp.ne.s32.totalorder %s117, %s120
    %p126 = scmp.eq.s32.totalorder %s12, 0
    %p127 = por %p125, %p126
    %p128 = scmp.ne.s32.totalorder %s117, %s120
    %p129 = scmp.eq.s32.totalorder %s17, 3
    %p130 = por %p128, %p129
    %p131 = scmp.ne.s32.totalorder %s120, %s121
    %p132 = scmp.eq.s32.totalorder %s17, 0
    %p133 = por %p131, %p132
    %p134 = scmp.ne.s32.totalorder %s120, %s121
    %p135 = scmp.eq.s32.totalorder %s18, 3
    %p136 = por %p134, %p135
    %p138 = scmp.ne.s32.totalorder %s121, %s137
    %p139 = scmp.eq.s32.totalorder %s18, 0
    %p140 = por %p138, %p139
    %s141 = ssub.s32 %s19, %s31
    %s142 = ssub.s32 %s20, %s27
    %s143 = sor.u32 %s141, %s142
    %p144 = scmp.eq.s32.totalorder %s143, 0
    %s146 = sadd.s32 %s145, 1
    %s147 = scalar_select %p144, %s145, %s146
    %p150 = pneg %p144
    %p151 = scmp.eq.s32.totalorder %s12, 3
    %p152 = por %p150, %p151
    %p153 = scmp.ne.s32.totalorder %s145, %s148
    %p154 = scmp.eq.s32.totalorder %s12, 0
    %p155 = por %p153, %p154
    %p156 = scmp.ne.s32.totalorder %s145, %s148
    %p157 = scmp.eq.s32.totalorder %s17, 3
    %p158 = por %p156, %p157
    %p159 = scmp.ne.s32.totalorder %s148, %s149
    %p160 = scmp.eq.s32.totalorder %s17, 0
    %p161 = por %p159, %p160
    %p162 = scmp.ne.s32.totalorder %s148, %s149
    %p163 = scmp.eq.s32.totalorder %s18, 3
    %p164 = por %p162, %p163
    %p166 = scmp.ne.s32.totalorder %s149, %s165
    %p167 = scmp.eq.s32.totalorder %s18, 0
    %p168 = por %p166, %p167
    %s169 = ssub.s32 %s19, %s31
    %s170 = ssub.s32 %s20, %s27
    %s171 = sor.u32 %s169, %s170
    %p172 = scmp.eq.s32.totalorder %s171, 0
    %s174 = sadd.s32 %s173, 1
    %s175 = scalar_select %p172, %s173, %s174
    %p178 = pneg %p172
    %p179 = scmp.eq.s32.totalorder %s12, 3
    %p180 = por %p178, %p179
    %p181 = scmp.ne.s32.totalorder %s173, %s176
    %p182 = scmp.eq.s32.totalorder %s12, 0
    %p183 = por %p181, %p182
    %p184 = scmp.ne.s32.totalorder %s173, %s176
    %p185 = scmp.eq.s32.totalorder %s17, 3
    %p186 = por %p184, %p185
    %p187 = scmp.ne.s32.totalorder %s176, %s177
    %p188 = scmp.eq.s32.totalorder %s17, 0
    %p189 = por %p187, %p188
    %p190 = scmp.ne.s32.totalorder %s176, %s177
    %p191 = scmp.eq.s32.totalorder %s18, 3
    %p192 = por %p190, %p191
    %p194 = scmp.ne.s32.totalorder %s177, %s193
    %p195 = scmp.eq.s32.totalorder %s18, 0
    %p196 = por %p194, %p195
    %p197 = scmp.le.s32.totalorder 1, %s12
    %p198 = scmp.lt.s32.totalorder %s12, 5
    %p199 = pnand %p197, %p198
    %p200 = pneg %p199
    // Predicated region
    $region9: #{unet_conv2_forward.4} parent=5 // pred_check
      _
    $region10: #{unet_conv2_forward.4} parent=5 // pred_check_branch
      %202 = sbr.rel (%p199) target = $region12
    $region11: #{unet_conv2_forward.4} parent=5 // pred_region
      %s203 = ssub.s32 %s12, 1
      // Predicated region
      $region13: #{unet_conv2_forward.4} parent=11 // pred_check
        %p204 = pneg %p105
      $region14: #{unet_conv2_forward.4} parent=11 // pred_check_branch
        %206 = sbr.rel (%p204) target = $region16
      $region15: #{unet_conv2_forward.4} parent=11 // pred_region
        _
      $region16: #{unet_conv2_forward.4} parent=11 // pred_fallthru
        _
    $region12: #{unet_conv2_forward.4} parent=5 // pred_fallthru
      _
    %p207 = scmp.lt.s32.totalorder %s12, 4
    // Predicated region
    $region17: #{unet_conv2_forward.4} parent=5 // pred_check
      %p208 = pneg %p207
    $region18: #{unet_conv2_forward.4} parent=5 // pred_check_branch
      %210 = sbr.rel (%p208) target = $region20
    $region19: #{unet_conv2_forward.4} parent=5 // pred_region
      // Predicated region
      $region21: #{unet_conv2_forward.4} parent=19 // pred_check
        %p211 = pneg %p46
      $region22: #{unet_conv2_forward.4} parent=19 // pred_check_branch
        %213 = sbr.rel (%p211) target = $region24
      $region23: #{unet_conv2_forward.4} parent=19 // pred_region
        %s214 = smul.u32 8, %s20
        %s215 = ssub.s32 18, %s214
        %p216 = scmp.lt.s32.totalorder %s215, 8
        %s217 = scalar_select %p216, %s215, 8
        %s218 = smul.u32 4, %s217
        %s219 = smul.u32 %s218, 3
        %p220 = scmp.lt.s32.totalorder %s19, 1
        %s221 = scalar_select %p220, %s19, 1
        %p222 = scmp.lt.s32.totalorder %s214, 17
        %s223 = scalar_select %p222, %s214, 17
        %s224 = smul.addr %s223, 3
        %s225 = smul.addr %s221, 54
        %s226 = sadd.s32 %s224, %s225
        %s227 = smul.addr %s226, 4
        %s228 = scalar_lea.vmem %s0, %s227
        %s229 = smul.u32 8, %s20
        %s230 = ssub.s32 18, %s229
        %p231 = scmp.lt.s32.totalorder %s230, 8
        %s232 = scalar_select %p231, %s230, 8
        %s233 = smul.u32 4, %s232
        %s234 = smul.u32 %s233, 3
      $region24: #{unet_conv2_forward.4} parent=19 // pred_fallthru
        _
      // Predicated region
      $region25: #{unet_conv2_forward.4} parent=19 // pred_check
        %p235 = pneg %p78
      $region26: #{unet_conv2_forward.4} parent=19 // pred_check_branch
        %237 = sbr.rel (%p235) target = $region28
      $region27: #{unet_conv2_forward.4} parent=19 // pred_region
        %s238 = sadd.s32 %s20, 1
        %s239 = smul.u32 %s238, 4
        %s240 = smul.u32 2, %s239
        %p241 = scmp.lt.s32.totalorder %s19, 1
        %s242 = scalar_select %p241, %s19, 1
        %p243 = scmp.lt.s32.totalorder %s240, 17
        %s244 = scalar_select %p243, %s240, 17
        %s245 = smul.addr %s244, 3
        %s246 = smul.addr %s242, 54
        %s247 = sadd.s32 %s245, %s246
        %s248 = smul.addr %s247, 4
        %s249 = scalar_lea.vmem %s1, %s248
        %s250 = sadd.s32 %s20, 1
        %s251 = smul.u32 %s250, 4
        %s252 = smul.u32 2, %s251
      $region28: #{unet_conv2_forward.4} parent=19 // pred_fallthru
        _
    $region20: #{unet_conv2_forward.4} parent=5 // pred_fallthru
      _
    %p253 = scmp.le.s32.totalorder 1, %s12
    %p254 = scmp.lt.s32.totalorder %s12, 5
    %p255 = pnand %p253, %p254
    %p256 = pneg %p255
    // Predicated region
    $region29: #{unet_conv2_forward.4} parent=5 // pred_check
      _
    $region30: #{unet_conv2_forward.4} parent=5 // pred_check_branch
      %258 = sbr.rel (%p255) target = $region32
    $region31: #{unet_conv2_forward.4} parent=5 // pred_region
      %s259 = ssub.s32 %s12, 1
      %s260 = smul.u32 8, %s22
      %s261 = ssub.s32 18, %s260
      %p262 = scmp.lt.s32.totalorder %s261, 8
      %s263 = scalar_select %p262, %s261, 8
      %s264 = smul.u32 4, %s263
      %s265 = smul.u32 %s264, 3
      %p266 = scmp.lt.s32.totalorder %s21, 1
      %s267 = scalar_select %p266, %s21, 1
      %p268 = scmp.lt.s32.totalorder %s260, 17
      %s269 = scalar_select %p268, %s260, 17
      %s270 = smul.addr %s269, 3
      %s271 = smul.addr %s267, 54
      %s272 = sadd.s32 %s270, %s271
      %s273 = smul.addr %s272, 4
      %s274 = scalar_lea.vmem %s0, %s273
      %p275 = pneg %p52
      %p276 = pneg %p49
      %s277 = sadd.s32 %s22, 1
      %s278 = smul.u32 %s277, 4
      %s279 = smul.u32 2, %s278
      %p280 = scmp.lt.s32.totalorder %s21, 1
      %s281 = scalar_select %p280, %s21, 1
      %p282 = scmp.lt.s32.totalorder %s279, 17
      %s283 = scalar_select %p282, %s279, 17
      %s284 = smul.addr %s283, 3
      %s285 = smul.addr %s281, 54
      %s286 = sadd.s32 %s284, %s285
      %s287 = smul.addr %s286, 4
      %s288 = scalar_lea.vmem %s1, %s287
      %p289 = pneg %p84
      %p290 = pneg %p81
      %p291 = pneg %p105
      %p292 = pneg %p102
      %p293 = pneg %p133
      %p294 = pneg %p130
      %s295 = smul.u32 16, %s22
      %p296 = scmp.lt.s32.totalorder %s21, 1
      %s297 = scalar_select %p296, %s21, 1
      %p298 = scmp.lt.s32.totalorder %s295, 31
      %s299 = scalar_select %p298, %s295, 31
      %s300 = smul.addr %s297, 32
      %s301 = sadd.s32 %s299, %s300
      %s302 = smul.addr %s301, 4
      %s303 = scalar_lea.vmem %s3, %s302
      %p304 = pneg %p161
      %p305 = pneg %p158
      %p306 = scmp.lt.s32.totalorder %s21, 1
      %s307 = scalar_select %p306, %s21, 1
      %p308 = scmp.lt.s32.totalorder %s22, 1
      %s309 = scalar_select %p308, %s22, 1
      %s310 = smul.addr %s307, 2
      %s311 = sadd.s32 %s309, %s310
      %s312 = scalar_lea.vmem %s4, %s311
      %p313 = pneg %p189
      %p314 = pneg %p186
      %p315 = scmp.lt.s32.totalorder %s21, 1
      %s316 = scalar_select %p315, %s21, 1
      %p317 = scmp.lt.s32.totalorder %s22, 1
      %s318 = scalar_select %p317, %s22, 1
      %s319 = smul.addr %s316, 2
      %s320 = sadd.s32 %s318, %s319
      %s321 = scalar_lea.vmem %s5, %s320
      %s322 = smul.u32 8, %s22
      %s323 = ssub.s32 18, %s322
      %p324 = scmp.lt.s32.totalorder %s323, 8
      %s325 = scalar_select %p324, %s323, 8
      %s326 = smul.u32 4, %s325
      %s327 = smul.u32 %s326, 3
      %p328 = scmp.lt.s32.totalorder %s21, 1
      %s329 = scalar_select %p328, %s21, 1
      %p330 = scmp.lt.s32.totalorder %s322, 17
      %s331 = scalar_select %p330, %s322, 17
      %s332 = smul.addr %s331, 3
      %s333 = smul.addr %s329, 54
      %s334 = sadd.s32 %s332, %s333
      %s335 = smul.addr %s334, 4
      %s336 = scalar_lea.vmem %s0, %s335
      %s337 = smul.u32 8, %s22
      %s338 = ssub.s32 18, %s337
      %p339 = scmp.lt.s32.totalorder %s338, 8
      %s340 = scalar_select %p339, %s338, 8
      %s341 = smul.u32 4, %s340
      %s342 = smul.u32 %s341, 3
      %s343 = sadd.s32 %s22, 1
      %s344 = smul.u32 %s343, 4
      %s345 = smul.u32 2, %s344
      %p346 = scmp.lt.s32.totalorder %s21, 1
      %s347 = scalar_select %p346, %s21, 1
      %p348 = scmp.lt.s32.totalorder %s345, 17
      %s349 = scalar_select %p348, %s345, 17
      %s350 = smul.addr %s349, 3
      %s351 = smul.addr %s347, 54
      %s352 = sadd.s32 %s350, %s351
      %s353 = smul.addr %s352, 4
      %s354 = scalar_lea.vmem %s1, %s353
      %s355 = sadd.s32 %s22, 1
      %s356 = smul.u32 %s355, 4
      %s357 = smul.u32 2, %s356
      %s358 = smul.u32 16, %s22
      %p359 = scmp.lt.s32.totalorder %s21, 1
      %s360 = scalar_select %p359, %s21, 1
      %p361 = scmp.lt.s32.totalorder %s358, 31
      %s362 = scalar_select %p361, %s358, 31
      %s363 = smul.addr %s360, 32
      %s364 = sadd.s32 %s362, %s363
      %s365 = smul.addr %s364, 4
      %s366 = scalar_lea.vmem %s3, %s365
      %s367 = smul.u32 16, %s22
      %p368 = scmp.lt.s32.totalorder %s21, 1
      %s369 = scalar_select %p368, %s21, 1
      %p370 = scmp.lt.s32.totalorder %s22, 1
      %s371 = scalar_select %p370, %s22, 1
      %s372 = smul.addr %s369, 2
      %s373 = sadd.s32 %s371, %s372
      %s374 = scalar_lea.vmem %s4, %s373
      %p375 = scmp.lt.s32.totalorder %s21, 1
      %s376 = scalar_select %p375, %s21, 1
      %p377 = scmp.lt.s32.totalorder %s22, 1
      %s378 = scalar_select %p377, %s22, 1
      %s379 = smul.addr %s376, 2
      %s380 = sadd.s32 %s378, %s379
      %s381 = scalar_lea.vmem %s5, %s380
      %v383 = vld [vmem:[%s336] sm:$0xf]
      %v384 = vld [vmem:[%s336 + $0x4] sm:$0xf]
      %v385 = vld [vmem:[%s336 + $0x8] sm:$0x1]
      %v386 = vld [vmem:[%s336 + $0xc] sm:$0xf]
      %v387 = vld [vmem:[%s336 + $0x10] sm:$0xf]
      %v388 = vld [vmem:[%s336 + $0x14] sm:$0x1]
      %v389 = vld [vmem:[%s336 + $0x18] sm:$0xf]
      %v390 = vld [vmem:[%s336 + $0x1c] sm:$0xf]
      %v391 = vld [vmem:[%s336 + $0x20] sm:$0x1]
      %v392 = vld [vmem:[%s336 + $0x24] sm:$0xf]
      %v393 = vld [vmem:[%s336 + $0x28] sm:$0xf]
      %v394 = vld [vmem:[%s336 + $0x2c] sm:$0x1]
      %v395 = vld [vmem:[%s336 + $0x30] sm:$0xf]
      %v396 = vld [vmem:[%s336 + $0x34] sm:$0xf]
      %v397 = vld [vmem:[%s336 + $0x38] sm:$0x1]
      %v398 = vld [vmem:[%s336 + $0x3c] sm:$0xf]
      %v399 = vld [vmem:[%s336 + $0x40] sm:$0xf]
      %v400 = vld [vmem:[%s336 + $0x44] sm:$0x1]
      %v401 = vld [vmem:[%s336 + $0x48] sm:$0xf]
      %v402 = vld [vmem:[%s336 + $0x4c] sm:$0xf]
      %v403 = vld [vmem:[%s336 + $0x50] sm:$0x1]
      %v404 = vld [vmem:[%s336 + $0x54] sm:$0xf]
      %v405 = vld [vmem:[%s336 + $0x58] sm:$0xf]
      %v406 = vld [vmem:[%s336 + $0x5c] sm:$0x1]
      %v407 = vld [vmem:[%s354] sm:$0xf]
      %v408 = vld [vmem:[%s354 + $0x4] sm:$0xf]
      %v409 = vld [vmem:[%s354 + $0x8] sm:$0x1]
      %v410 = vld [vmem:[%s354 + $0xc] sm:$0xf]
      %v411 = vld [vmem:[%s354 + $0x10] sm:$0xf]
      %v412 = vld [vmem:[%s354 + $0x14] sm:$0x1]
      %v413 = vld [vmem:[%s2] sm:$0x3]
      %vm414 = vsmask.f32 3328
      %vm415 = vsmask.f32 7440
      %vm416 = vmor %vm414, %vm415
      %v418 = vshrl.u32 %v383, 16
      %v420 = vrot.slane %v418, 4
      %v421 = vshll.u32 %v383, 16
      %v423 = vrot.slane %v421, 5
      %v424 = vor.u32 %v420, %v423
      %v425 = vrot.slane %v424, 4
      %v427 = vshll.u32 %v384, 16
      %v429 = vrot.slane %v427, 5
      %v430 = vsel %vm416, %v425, %v429
      %v431 = vshrl.u32 %v384, 16
      %v433 = vrot.slane %v431, 4
      %v434 = vor.u32 %v433, %v429
      %v435 = vrot.slane %v434, 4
      %v437 = vshll.u32 %v385, 16
      %v439 = vrot.slane %v437, 5
      %v440 = vsel %vm416, %v435, %v439
      %v442 = vshrl.u32 %v386, 16
      %v444 = vrot.slane %v442, 4
      %v445 = vshll.u32 %v386, 16
      %v447 = vrot.slane %v445, 5
      %v448 = vor.u32 %v444, %v447
      %v449 = vrot.slane %v448, 4
      %v451 = vshll.u32 %v387, 16
      %v453 = vrot.slane %v451, 5
      %v454 = vsel %vm416, %v449, %v453
      %v455 = vshrl.u32 %v387, 16
      %v457 = vrot.slane %v455, 4
      %v458 = vor.u32 %v457, %v453
      %v459 = vrot.slane %v458, 4
      %v461 = vshll.u32 %v388, 16
      %v463 = vrot.slane %v461, 5
      %v464 = vsel %vm416, %v459, %v463
      %v466 = vshrl.u32 %v389, 16
      %v468 = vrot.slane %v466, 4
      %v469 = vshll.u32 %v389, 16
      %v471 = vrot.slane %v469, 5
      %v472 = vor.u32 %v468, %v471
      %v473 = vrot.slane %v472, 4
      %v475 = vshll.u32 %v390, 16
      %v477 = vrot.slane %v475, 5
      %v478 = vsel %vm416, %v473, %v477
      %v479 = vshrl.u32 %v390, 16
      %v481 = vrot.slane %v479, 4
      %v482 = vor.u32 %v481, %v477
      %v483 = vrot.slane %v482, 4
      %v485 = vshll.u32 %v391, 16
      %v487 = vrot.slane %v485, 5
      %v488 = vsel %vm416, %v483, %v487
      %v490 = vshrl.u32 %v392, 16
      %v492 = vrot.slane %v490, 4
      %v493 = vshll.u32 %v392, 16
      %v495 = vrot.slane %v493, 5
      %v496 = vor.u32 %v492, %v495
      %v497 = vrot.slane %v496, 4
      %v499 = vshll.u32 %v393, 16
      %v501 = vrot.slane %v499, 5
      %v502 = vsel %vm416, %v497, %v501
      %v503 = vshrl.u32 %v393, 16
      %v505 = vrot.slane %v503, 4
      %v506 = vor.u32 %v505, %v501
      %v507 = vrot.slane %v506, 4
      %v509 = vshll.u32 %v394, 16
      %v511 = vrot.slane %v509, 5
      %v512 = vsel %vm416, %v507, %v511
      %v514 = vshrl.u32 %v395, 16
      %v516 = vrot.slane %v514, 4
      %v517 = vshll.u32 %v395, 16
      %v519 = vrot.slane %v517, 5
      %v520 = vor.u32 %v516, %v519
      %v521 = vrot.slane %v520, 4
      %v523 = vshll.u32 %v396, 16
      %v525 = vrot.slane %v523, 5
      %v526 = vsel %vm416, %v521, %v525
      %v527 = vshrl.u32 %v396, 16
      %v529 = vrot.slane %v527, 4
      %v530 = vor.u32 %v529, %v525
      %v531 = vrot.slane %v530, 4
      %v533 = vshll.u32 %v397, 16
      %v535 = vrot.slane %v533, 5
      %v536 = vsel %vm416, %v531, %v535
      %v538 = vshrl.u32 %v398, 16
      %v540 = vrot.slane %v538, 4
      %v541 = vshll.u32 %v398, 16
      %v543 = vrot.slane %v541, 5
      %v544 = vor.u32 %v540, %v543
      %v545 = vrot.slane %v544, 4
      %v547 = vshll.u32 %v399, 16
      %v549 = vrot.slane %v547, 5
      %v550 = vsel %vm416, %v545, %v549
      %v551 = vshrl.u32 %v399, 16
      %v553 = vrot.slane %v551, 4
      %v554 = vor.u32 %v553, %v549
      %v555 = vrot.slane %v554, 4
      %v557 = vshll.u32 %v400, 16
      %v559 = vrot.slane %v557, 5
      %v560 = vsel %vm416, %v555, %v559
      %v562 = vshrl.u32 %v401, 16
      %v564 = vrot.slane %v562, 4
      %v565 = vshll.u32 %v401, 16
      %v567 = vrot.slane %v565, 5
      %v568 = vor.u32 %v564, %v567
      %v569 = vrot.slane %v568, 4
      %v571 = vshll.u32 %v402, 16
      %v573 = vrot.slane %v571, 5
      %v574 = vsel %vm416, %v569, %v573
      %v575 = vshrl.u32 %v402, 16
      %v577 = vrot.slane %v575, 4
      %v578 = vor.u32 %v577, %v573
      %v579 = vrot.slane %v578, 4
      %v581 = vshll.u32 %v403, 16
      %v583 = vrot.slane %v581, 5
      %v584 = vsel %vm416, %v579, %v583
      %v586 = vshrl.u32 %v404, 16
      %v588 = vrot.slane %v586, 4
      %v589 = vshll.u32 %v404, 16
      %v591 = vrot.slane %v589, 5
      %v592 = vor.u32 %v588, %v591
      %v593 = vrot.slane %v592, 4
      %v595 = vshll.u32 %v405, 16
      %v597 = vrot.slane %v595, 5
      %v598 = vsel %vm416, %v593, %v597
      %v599 = vshrl.u32 %v405, 16
      %v601 = vrot.slane %v599, 4
      %v602 = vor.u32 %v601, %v597
      %v603 = vrot.slane %v602, 4
      %v605 = vshll.u32 %v406, 16
      %v607 = vrot.slane %v605, 5
      %v608 = vsel %vm416, %v603, %v607
      %s609 = scalar_lea.vmem %s2, 2
      %v610 = vld [vmem:[%s609] sm:$0x3]
      %v611 = vunpack.c.l.b16 %v430
      %v612 = vunpack.c.l.b16 %v440
      %v613 = vunpack.c.l.b16 %v454
      %v614 = vunpack.c.l.b16 %v464
      %v615 = vunpack.c.l.b16 %v478
      %v616 = vunpack.c.l.b16 %v488
      %v617 = vunpack.c.l.b16 %v502
      %v618 = vunpack.c.l.b16 %v512
      %v619 = vunpack.c.l.b16 %v526
      %v620 = vunpack.c.l.b16 %v536
      %v621 = vunpack.c.l.b16 %v550
      %v622 = vunpack.c.l.b16 %v560
      %v623 = vunpack.c.l.b16 %v574
      %v624 = vunpack.c.l.b16 %v584
      %v625 = vunpack.c.l.b16 %v598
      %v626 = vunpack.c.l.b16 %v608
      %v627 = vpack.c.b16 %v612, %v611
      %v628 = vpack.c.b16 %v614, %v613
      %v629 = vpack.c.b16 %v616, %v615
      %v630 = vpack.c.b16 %v618, %v617
      %v631 = vpack.c.b16 %v620, %v619
      %v632 = vpack.c.b16 %v622, %v621
      %v633 = vpack.c.b16 %v624, %v623
      %v634 = vpack.c.b16 %v626, %v625
      %vm635 = vcmask 31744
      %v637 = vsel %vm635, %v627, 0
      %v640 = vsel %vm635, %v628, 0
      %v643 = vsel %vm635, %v629, 0
      %v646 = vsel %vm635, %v630, 0
      %v649 = vsel %vm635, %v631, 0
      %v652 = vsel %vm635, %v632, 0
      %v655 = vsel %vm635, %v633, 0
      %v658 = vsel %vm635, %v634, 0
      %vm660 = vcmask 1041408
      %v662 = vsel %vm660, %v610, 0
      %664 = vmatpush.bf16.msra.mxu0 0
      %665 = vmatpush.bf16.msra.mxu0 0
      %666 = vmatpush.bf16.msra.mxu0 0
      %667 = vmatpush.bf16.msra.mxu0 0
      %668 = vmatpush.bf16.msra.mxu0 0
      %669 = vmatpush.bf16.msra.mxu0 0
      %670 = vmatpush.bf16.msra.mxu0 0
      %671 = vmatpush.bf16.msra.mxu0 %v662
      %672 = vmatmul.bf16.gmra.mxu0 %v637
      %v673 = vpop.f32.mrf.mxu0
      %v674 = vadd.f32 0.0, %v673
      %v675 = vpop.f32.mrf.mxu0
      %v676 = vadd.f32 0.0, %v675
      %677 = vmatmul.bf16.gmra.mxu0 %v640
      %v678 = vpop.f32.mrf.mxu0
      %v679 = vadd.f32 0.0, %v678
      %v680 = vpop.f32.mrf.mxu0
      %v681 = vadd.f32 0.0, %v680
      %682 = vmatmul.bf16.gmra.mxu0 %v643
      %v683 = vpop.f32.mrf.mxu0
      %v684 = vadd.f32 0.0, %v683
      %v685 = vpop.f32.mrf.mxu0
      %v686 = vadd.f32 0.0, %v685
      %687 = vmatmul.bf16.gmra.mxu0 %v646
      %v688 = vpop.f32.mrf.mxu0
      %v689 = vadd.f32 0.0, %v688
      %v690 = vpop.f32.mrf.mxu0
      %v691 = vadd.f32 0.0, %v690
      %692 = vmatmul.bf16.gmra.mxu0 %v649
      %v693 = vpop.f32.mrf.mxu0
      %v694 = vadd.f32 0.0, %v693
      %v695 = vpop.f32.mrf.mxu0
      %v696 = vadd.f32 0.0, %v695
      %697 = vmatmul.bf16.gmra.mxu0 %v652
      %v698 = vpop.f32.mrf.mxu0
      %v699 = vadd.f32 0.0, %v698
      %v700 = vpop.f32.mrf.mxu0
      %v701 = vadd.f32 0.0, %v700
      %702 = vmatmul.bf16.gmra.mxu0 %v655
      %v703 = vpop.f32.mrf.mxu0
      %v704 = vadd.f32 0.0, %v703
      %v705 = vpop.f32.mrf.mxu0
      %v706 = vadd.f32 0.0, %v705
      %707 = vmatmul.bf16.gmra.mxu0 %v658
      %v708 = vpop.f32.mrf.mxu0
      %v709 = vadd.f32 0.0, %v708
      %v710 = vpop.f32.mrf.mxu0
      %v711 = vadd.f32 0.0, %v710
      %712 = vdwg.mxu0
      %v729 = vunpack.c.l.b16 %v383
      %v730 = vunpack.c.l.b16 %v384
      %v731 = vunpack.c.l.b16 %v386
      %v732 = vunpack.c.l.b16 %v387
      %v733 = vunpack.c.l.b16 %v389
      %v734 = vunpack.c.l.b16 %v390
      %v735 = vunpack.c.l.b16 %v392
      %v736 = vunpack.c.l.b16 %v393
      %v737 = vunpack.c.l.b16 %v395
      %v738 = vunpack.c.l.b16 %v396
      %v739 = vunpack.c.l.b16 %v398
      %v740 = vunpack.c.l.b16 %v399
      %v741 = vunpack.c.l.b16 %v401
      %v742 = vunpack.c.l.b16 %v402
      %v743 = vunpack.c.l.b16 %v404
      %v744 = vunpack.c.l.b16 %v405
      %v745 = vpack.c.b16 %v730, %v729
      %v746 = vpack.c.b16 %v732, %v731
      %v747 = vpack.c.b16 %v734, %v733
      %v748 = vpack.c.b16 %v736, %v735
      %v749 = vpack.c.b16 %v738, %v737
      %v750 = vpack.c.b16 %v740, %v739
      %v751 = vpack.c.b16 %v742, %v741
      %v752 = vpack.c.b16 %v744, %v743
      %v754 = vsel %vm635, %v745, 0
      %v757 = vsel %vm635, %v746, 0
      %v760 = vsel %vm635, %v747, 0
      %v763 = vsel %vm635, %v748, 0
      %v766 = vsel %vm635, %v749, 0
      %v769 = vsel %vm635, %v750, 0
      %v772 = vsel %vm635, %v751, 0
      %v775 = vsel %vm635, %v752, 0
      %v778 = vsel %vm660, %v413, 0
      %780 = vmatpush.bf16.msra.mxu0 0
      %781 = vmatpush.bf16.msra.mxu0 0
      %782 = vmatpush.bf16.msra.mxu0 0
      %783 = vmatpush.bf16.msra.mxu0 0
      %784 = vmatpush.bf16.msra.mxu0 0
      %785 = vmatpush.bf16.msra.mxu0 0
      %786 = vmatpush.bf16.msra.mxu0 0
      %787 = vmatpush.bf16.msra.mxu0 %v778
      %788 = vmatmul.bf16.gmra.mxu0 %v754
      %v789 = vpop.f32.mrf.mxu0
      %v790 = vadd.f32 %v674, %v789
      %v791 = vpop.f32.mrf.mxu0
      %v792 = vadd.f32 %v676, %v791
      %793 = vmatmul.bf16.gmra.mxu0 %v757
      %v794 = vpop.f32.mrf.mxu0
      %v795 = vadd.f32 %v679, %v794
      %v796 = vpop.f32.mrf.mxu0
      %v797 = vadd.f32 %v681, %v796
      %798 = vmatmul.bf16.gmra.mxu0 %v760
      %v799 = vpop.f32.mrf.mxu0
      %v800 = vadd.f32 %v684, %v799
      %v801 = vpop.f32.mrf.mxu0
      %v802 = vadd.f32 %v686, %v801
      %803 = vmatmul.bf16.gmra.mxu0 %v763
      %v804 = vpop.f32.mrf.mxu0
      %v805 = vadd.f32 %v689, %v804
      %v806 = vpop.f32.mrf.mxu0
      %v807 = vadd.f32 %v691, %v806
      %808 = vmatmul.bf16.gmra.mxu0 %v766
      %v809 = vpop.f32.mrf.mxu0
      %v810 = vadd.f32 %v694, %v809
      %v811 = vpop.f32.mrf.mxu0
      %v812 = vadd.f32 %v696, %v811
      %813 = vmatmul.bf16.gmra.mxu0 %v769
      %v814 = vpop.f32.mrf.mxu0
      %v815 = vadd.f32 %v699, %v814
      %v816 = vpop.f32.mrf.mxu0
      %v817 = vadd.f32 %v701, %v816
      %818 = vmatmul.bf16.gmra.mxu0 %v772
      %v819 = vpop.f32.mrf.mxu0
      %v820 = vadd.f32 %v704, %v819
      %v821 = vpop.f32.mrf.mxu0
      %v822 = vadd.f32 %v706, %v821
      %823 = vmatmul.bf16.gmra.mxu0 %v775
      %v824 = vpop.f32.mrf.mxu0
      %v825 = vadd.f32 %v709, %v824
      %v826 = vpop.f32.mrf.mxu0
      %v827 = vadd.f32 %v711, %v826
      %828 = vdwg.mxu0
      %vm837 = vcmask 1042432
      %vm838 = vcmask 1046532
      %vm839 = vmor %vm837, %vm838
      %v840 = vrot.slane %v383, 5
      %v841 = vrot.slane %v840, 4
      %v842 = vrot.slane %v384, 5
      %v843 = vsel %vm839, %v841, %v842
      %v844 = vrot.slane %v842, 4
      %v845 = vrot.slane %v385, 5
      %v846 = vsel %vm839, %v844, %v845
      %v847 = vrot.slane %v386, 5
      %v848 = vrot.slane %v847, 4
      %v849 = vrot.slane %v387, 5
      %v850 = vsel %vm839, %v848, %v849
      %v851 = vrot.slane %v849, 4
      %v852 = vrot.slane %v388, 5
      %v853 = vsel %vm839, %v851, %v852
      %v854 = vrot.slane %v389, 5
      %v855 = vrot.slane %v854, 4
      %v856 = vrot.slane %v390, 5
      %v857 = vsel %vm839, %v855, %v856
      %v858 = vrot.slane %v856, 4
      %v859 = vrot.slane %v391, 5
      %v860 = vsel %vm839, %v858, %v859
      %v861 = vrot.slane %v392, 5
      %v862 = vrot.slane %v861, 4
      %v863 = vrot.slane %v393, 5
      %v864 = vsel %vm839, %v862, %v863
      %v865 = vrot.slane %v863, 4
      %v866 = vrot.slane %v394, 5
      %v867 = vsel %vm839, %v865, %v866
      %v868 = vrot.slane %v395, 5
      %v869 = vrot.slane %v868, 4
      %v870 = vrot.slane %v396, 5
      %v871 = vsel %vm839, %v869, %v870
      %v872 = vrot.slane %v870, 4
      %v873 = vrot.slane %v397, 5
      %v874 = vsel %vm839, %v872, %v873
      %v875 = vrot.slane %v398, 5
      %v876 = vrot.slane %v875, 4
      %v877 = vrot.slane %v399, 5
      %v878 = vsel %vm839, %v876, %v877
      %v879 = vrot.slane %v877, 4
      %v880 = vrot.slane %v400, 5
      %v881 = vsel %vm839, %v879, %v880
      %v882 = vrot.slane %v401, 5
      %v883 = vrot.slane %v882, 4
      %v884 = vrot.slane %v402, 5
      %v885 = vsel %vm839, %v883, %v884
      %v886 = vrot.slane %v884, 4
      %v887 = vrot.slane %v403, 5
      %v888 = vsel %vm839, %v886, %v887
      %v889 = vrot.slane %v404, 5
      %v890 = vrot.slane %v889, 4
      %v891 = vrot.slane %v405, 5
      %v892 = vsel %vm839, %v890, %v891
      %v893 = vrot.slane %v891, 4
      %v894 = vrot.slane %v406, 5
      %v895 = vsel %vm839, %v893, %v894
      %s896 = scalar_lea.vmem %s2, 4
      %v897 = vld [vmem:[%s896] sm:$0x3]
      %v898 = vunpack.c.l.b16 %v843
      %v899 = vunpack.c.l.b16 %v846
      %v900 = vunpack.c.l.b16 %v850
      %v901 = vunpack.c.l.b16 %v853
      %v902 = vunpack.c.l.b16 %v857
      %v903 = vunpack.c.l.b16 %v860
      %v904 = vunpack.c.l.b16 %v864
      %v905 = vunpack.c.l.b16 %v867
      %v906 = vunpack.c.l.b16 %v871
      %v907 = vunpack.c.l.b16 %v874
      %v908 = vunpack.c.l.b16 %v878
      %v909 = vunpack.c.l.b16 %v881
      %v910 = vunpack.c.l.b16 %v885
      %v911 = vunpack.c.l.b16 %v888
      %v912 = vunpack.c.l.b16 %v892
      %v913 = vunpack.c.l.b16 %v895
      %v914 = vpack.c.b16 %v899, %v898
      %v915 = vpack.c.b16 %v901, %v900
      %v916 = vpack.c.b16 %v903, %v902
      %v917 = vpack.c.b16 %v905, %v904
      %v918 = vpack.c.b16 %v907, %v906
      %v919 = vpack.c.b16 %v909, %v908
      %v920 = vpack.c.b16 %v911, %v910
      %v921 = vpack.c.b16 %v913, %v912
      %v923 = vsel %vm635, %v914, 0
      %v926 = vsel %vm635, %v915, 0
      %v929 = vsel %vm635, %v916, 0
      %v932 = vsel %vm635, %v917, 0
      %v935 = vsel %vm635, %v918, 0
      %v938 = vsel %vm635, %v919, 0
      %v941 = vsel %vm635, %v920, 0
      %v944 = vsel %vm635, %v921, 0
      %v947 = vsel %vm660, %v897, 0
      %949 = vmatpush.bf16.msra.mxu0 0
      %950 = vmatpush.bf16.msra.mxu0 0
      %951 = vmatpush.bf16.msra.mxu0 0
      %952 = vmatpush.bf16.msra.mxu0 0
      %953 = vmatpush.bf16.msra.mxu0 0
      %954 = vmatpush.bf16.msra.mxu0 0
      %955 = vmatpush.bf16.msra.mxu0 0
      %956 = vmatpush.bf16.msra.mxu0 %v947
      %957 = vmatmul.bf16.gmra.mxu0 %v923
      %v958 = vpop.f32.mrf.mxu0
      %v959 = vadd.f32 0.0, %v958
      %v960 = vpop.f32.mrf.mxu0
      %v961 = vadd.f32 0.0, %v960
      %962 = vmatmul.bf16.gmra.mxu0 %v926
      %v963 = vpop.f32.mrf.mxu0
      %v964 = vadd.f32 0.0, %v963
      %v965 = vpop.f32.mrf.mxu0
      %v966 = vadd.f32 0.0, %v965
      %967 = vmatmul.bf16.gmra.mxu0 %v929
      %v968 = vpop.f32.mrf.mxu0
      %v969 = vadd.f32 0.0, %v968
      %v970 = vpop.f32.mrf.mxu0
      %v971 = vadd.f32 0.0, %v970
      %972 = vmatmul.bf16.gmra.mxu0 %v932
      %v973 = vpop.f32.mrf.mxu0
      %v974 = vadd.f32 0.0, %v973
      %v975 = vpop.f32.mrf.mxu0
      %v976 = vadd.f32 0.0, %v975
      %977 = vmatmul.bf16.gmra.mxu0 %v935
      %v978 = vpop.f32.mrf.mxu0
      %v979 = vadd.f32 0.0, %v978
      %v980 = vpop.f32.mrf.mxu0
      %v981 = vadd.f32 0.0, %v980
      %982 = vmatmul.bf16.gmra.mxu0 %v938
      %v983 = vpop.f32.mrf.mxu0
      %v984 = vadd.f32 0.0, %v983
      %v985 = vpop.f32.mrf.mxu0
      %v986 = vadd.f32 0.0, %v985
      %987 = vmatmul.bf16.gmra.mxu0 %v941
      %v988 = vpop.f32.mrf.mxu0
      %v989 = vadd.f32 0.0, %v988
      %v990 = vpop.f32.mrf.mxu0
      %v991 = vadd.f32 0.0, %v990
      %992 = vmatmul.bf16.gmra.mxu0 %v944
      %v993 = vpop.f32.mrf.mxu0
      %v994 = vadd.f32 0.0, %v993
      %v995 = vpop.f32.mrf.mxu0
      %v996 = vadd.f32 0.0, %v995
      %997 = vdwg.mxu0
      %v998 = vadd.f32 %v790, %v959
      %v999 = vadd.f32 %v792, %v961
      %v1000 = vadd.f32 %v795, %v964
      %v1001 = vadd.f32 %v797, %v966
      %v1002 = vadd.f32 %v800, %v969
      %v1003 = vadd.f32 %v802, %v971
      %v1004 = vadd.f32 %v805, %v974
      %v1005 = vadd.f32 %v807, %v976
      %v1006 = vadd.f32 %v810, %v979
      %v1007 = vadd.f32 %v812, %v981
      %v1008 = vadd.f32 %v815, %v984
      %v1009 = vadd.f32 %v817, %v986
      %v1010 = vadd.f32 %v820, %v989
      %v1011 = vadd.f32 %v822, %v991
      %v1012 = vadd.f32 %v825, %v994
      %v1013 = vadd.f32 %v827, %v996
      %s1014 = scalar_lea.vmem %s2, 6
      %v1015 = vld [vmem:[%s1014] sm:$0x3]
      %v1018 = vunpack.c.l.b16 %v407
      %v1019 = vunpack.c.l.b16 %v408
      %v1020 = vpack.c.b16 %v1019, %v1018
      %v1022 = vsel %vm635, %v1020, 0
      %v1025 = vsel %vm660, %v1015, 0
      %1027 = vmatpush.bf16.msra.mxu0 0
      %1028 = vmatpush.bf16.msra.mxu0 0
      %1029 = vmatpush.bf16.msra.mxu0 0
      %1030 = vmatpush.bf16.msra.mxu0 0
      %1031 = vmatpush.bf16.msra.mxu0 0
      %1032 = vmatpush.bf16.msra.mxu0 0
      %1033 = vmatpush.bf16.msra.mxu0 0
      %1034 = vmatpush.bf16.msra.mxu0 %v1025
      %1035 = vmatmul.bf16.gmra.mxu0 %v757
      %v1036 = vpop.f32.mrf.mxu0
      %v1037 = vadd.f32 0.0, %v1036
      %v1038 = vpop.f32.mrf.mxu0
      %v1039 = vadd.f32 0.0, %v1038
      %1040 = vmatmul.bf16.gmra.mxu0 %v760
      %v1041 = vpop.f32.mrf.mxu0
      %v1042 = vadd.f32 0.0, %v1041
      %v1043 = vpop.f32.mrf.mxu0
      %v1044 = vadd.f32 0.0, %v1043
      %1045 = vmatmul.bf16.gmra.mxu0 %v763
      %v1046 = vpop.f32.mrf.mxu0
      %v1047 = vadd.f32 0.0, %v1046
      %v1048 = vpop.f32.mrf.mxu0
      %v1049 = vadd.f32 0.0, %v1048
      %1050 = vmatmul.bf16.gmra.mxu0 %v766
      %v1051 = vpop.f32.mrf.mxu0
      %v1052 = vadd.f32 0.0, %v1051
      %v1053 = vpop.f32.mrf.mxu0
      %v1054 = vadd.f32 0.0, %v1053
      %1055 = vmatmul.bf16.gmra.mxu0 %v769
      %v1056 = vpop.f32.mrf.mxu0
      %v1057 = vadd.f32 0.0, %v1056
      %v1058 = vpop.f32.mrf.mxu0
      %v1059 = vadd.f32 0.0, %v1058
      %1060 = vmatmul.bf16.gmra.mxu0 %v772
      %v1061 = vpop.f32.mrf.mxu0
      %v1062 = vadd.f32 0.0, %v1061
      %v1063 = vpop.f32.mrf.mxu0
      %v1064 = vadd.f32 0.0, %v1063
      %1065 = vmatmul.bf16.gmra.mxu0 %v775
      %v1066 = vpop.f32.mrf.mxu0
      %v1067 = vadd.f32 0.0, %v1066
      %v1068 = vpop.f32.mrf.mxu0
      %v1069 = vadd.f32 0.0, %v1068
      %1070 = vmatmul.bf16.gmra.mxu0 %v1022
      %v1071 = vpop.f32.mrf.mxu0
      %v1072 = vadd.f32 0.0, %v1071
      %v1073 = vpop.f32.mrf.mxu0
      %v1074 = vadd.f32 0.0, %v1073
      %1075 = vdwg.mxu0
      %v1076 = vadd.f32 %v998, %v1037
      %v1077 = vadd.f32 %v999, %v1039
      %v1078 = vadd.f32 %v1000, %v1042
      %v1079 = vadd.f32 %v1001, %v1044
      %v1080 = vadd.f32 %v1002, %v1047
      %v1081 = vadd.f32 %v1003, %v1049
      %v1082 = vadd.f32 %v1004, %v1052
      %v1083 = vadd.f32 %v1005, %v1054
      %v1084 = vadd.f32 %v1006, %v1057
      %v1085 = vadd.f32 %v1007, %v1059
      %v1086 = vadd.f32 %v1008, %v1062
      %v1087 = vadd.f32 %v1009, %v1064
      %v1088 = vadd.f32 %v1010, %v1067
      %v1089 = vadd.f32 %v1011, %v1069
      %v1090 = vadd.f32 %v1012, %v1072
      %v1091 = vadd.f32 %v1013, %v1074
      %v1093 = vshrl.u32 %v407, 16
      %v1095 = vrot.slane %v1093, 4
      %v1096 = vshll.u32 %v407, 16
      %v1098 = vrot.slane %v1096, 5
      %v1099 = vor.u32 %v1095, %v1098
      %v1100 = vrot.slane %v1099, 4
      %v1102 = vshll.u32 %v408, 16
      %v1104 = vrot.slane %v1102, 5
      %v1105 = vsel %vm416, %v1100, %v1104
      %v1106 = vshrl.u32 %v408, 16
      %v1108 = vrot.slane %v1106, 4
      %v1109 = vor.u32 %v1108, %v1104
      %v1110 = vrot.slane %v1109, 4
      %v1112 = vshll.u32 %v409, 16
      %v1114 = vrot.slane %v1112, 5
      %v1115 = vsel %vm416, %v1110, %v1114
      %s1116 = scalar_lea.vmem %s2, 8
      %v1117 = vld [vmem:[%s1116] sm:$0x3]
      %v1118 = vunpack.c.l.b16 %v1105
      %v1119 = vunpack.c.l.b16 %v1115
      %v1120 = vpack.c.b16 %v1119, %v1118
      %v1122 = vsel %vm635, %v1120, 0
      %v1125 = vsel %vm660, %v1117, 0
      %1127 = vmatpush.bf16.msra.mxu0 0
      %1128 = vmatpush.bf16.msra.mxu0 0
      %1129 = vmatpush.bf16.msra.mxu0 0
      %1130 = vmatpush.bf16.msra.mxu0 0
      %1131 = vmatpush.bf16.msra.mxu0 0
      %1132 = vmatpush.bf16.msra.mxu0 0
      %1133 = vmatpush.bf16.msra.mxu0 0
      %1134 = vmatpush.bf16.msra.mxu0 %v1125
      %1135 = vmatmul.bf16.gmra.mxu0 %v640
      %v1136 = vpop.f32.mrf.mxu0
      %v1137 = vadd.f32 0.0, %v1136
      %v1138 = vpop.f32.mrf.mxu0
      %v1139 = vadd.f32 0.0, %v1138
      %1140 = vmatmul.bf16.gmra.mxu0 %v643
      %v1141 = vpop.f32.mrf.mxu0
      %v1142 = vadd.f32 0.0, %v1141
      %v1143 = vpop.f32.mrf.mxu0
      %v1144 = vadd.f32 0.0, %v1143
      %1145 = vmatmul.bf16.gmra.mxu0 %v646
      %v1146 = vpop.f32.mrf.mxu0
      %v1147 = vadd.f32 0.0, %v1146
      %v1148 = vpop.f32.mrf.mxu0
      %v1149 = vadd.f32 0.0, %v1148
      %1150 = vmatmul.bf16.gmra.mxu0 %v649
      %v1151 = vpop.f32.mrf.mxu0
      %v1152 = vadd.f32 0.0, %v1151
      %v1153 = vpop.f32.mrf.mxu0
      %v1154 = vadd.f32 0.0, %v1153
      %1155 = vmatmul.bf16.gmra.mxu0 %v652
      %v1156 = vpop.f32.mrf.mxu0
      %v1157 = vadd.f32 0.0, %v1156
      %v1158 = vpop.f32.mrf.mxu0
      %v1159 = vadd.f32 0.0, %v1158
      %1160 = vmatmul.bf16.gmra.mxu0 %v655
      %v1161 = vpop.f32.mrf.mxu0
      %v1162 = vadd.f32 0.0, %v1161
      %v1163 = vpop.f32.mrf.mxu0
      %v1164 = vadd.f32 0.0, %v1163
      %1165 = vmatmul.bf16.gmra.mxu0 %v658
      %v1166 = vpop.f32.mrf.mxu0
      %v1167 = vadd.f32 0.0, %v1166
      %v1168 = vpop.f32.mrf.mxu0
      %v1169 = vadd.f32 0.0, %v1168
      %1170 = vmatmul.bf16.gmra.mxu0 %v1122
      %v1171 = vpop.f32.mrf.mxu0
      %v1172 = vadd.f32 0.0, %v1171
      %v1173 = vpop.f32.mrf.mxu0
      %v1174 = vadd.f32 0.0, %v1173
      %1175 = vdwg.mxu0
      %v1176 = vadd.f32 %v1076, %v1137
      %v1177 = vadd.f32 %v1077, %v1139
      %v1178 = vadd.f32 %v1078, %v1142
      %v1179 = vadd.f32 %v1079, %v1144
      %v1180 = vadd.f32 %v1080, %v1147
      %v1181 = vadd.f32 %v1081, %v1149
      %v1182 = vadd.f32 %v1082, %v1152
      %v1183 = vadd.f32 %v1083, %v1154
      %v1184 = vadd.f32 %v1084, %v1157
      %v1185 = vadd.f32 %v1085, %v1159
      %v1186 = vadd.f32 %v1086, %v1162
      %v1187 = vadd.f32 %v1087, %v1164
      %v1188 = vadd.f32 %v1088, %v1167
      %v1189 = vadd.f32 %v1089, %v1169
      %v1190 = vadd.f32 %v1090, %v1172
      %v1191 = vadd.f32 %v1091, %v1174
      %v1193 = vrot.slane %v407, 5
      %v1194 = vrot.slane %v1193, 4
      %v1195 = vrot.slane %v408, 5
      %v1196 = vsel %vm839, %v1194, %v1195
      %v1197 = vrot.slane %v1195, 4
      %v1198 = vrot.slane %v409, 5
      %v1199 = vsel %vm839, %v1197, %v1198
      %s1200 = scalar_lea.vmem %s2, 10
      %v1201 = vld [vmem:[%s1200] sm:$0x3]
      %v1202 = vunpack.c.l.b16 %v1196
      %v1203 = vunpack.c.l.b16 %v1199
      %v1204 = vpack.c.b16 %v1203, %v1202
      %v1206 = vsel %vm635, %v1204, 0
      %v1209 = vsel %vm660, %v1201, 0
      %1211 = vmatpush.bf16.msra.mxu0 0
      %1212 = vmatpush.bf16.msra.mxu0 0
      %1213 = vmatpush.bf16.msra.mxu0 0
      %1214 = vmatpush.bf16.msra.mxu0 0
      %1215 = vmatpush.bf16.msra.mxu0 0
      %1216 = vmatpush.bf16.msra.mxu0 0
      %1217 = vmatpush.bf16.msra.mxu0 0
      %1218 = vmatpush.bf16.msra.mxu0 %v1209
      %1219 = vmatmul.bf16.gmra.mxu0 %v926
      %v1220 = vpop.f32.mrf.mxu0
      %v1221 = vadd.f32 0.0, %v1220
      %v1222 = vpop.f32.mrf.mxu0
      %v1223 = vadd.f32 0.0, %v1222
      %1224 = vmatmul.bf16.gmra.mxu0 %v929
      %v1225 = vpop.f32.mrf.mxu0
      %v1226 = vadd.f32 0.0, %v1225
      %v1227 = vpop.f32.mrf.mxu0
      %v1228 = vadd.f32 0.0, %v1227
      %1229 = vmatmul.bf16.gmra.mxu0 %v932
      %v1230 = vpop.f32.mrf.mxu0
      %v1231 = vadd.f32 0.0, %v1230
      %v1232 = vpop.f32.mrf.mxu0
      %v1233 = vadd.f32 0.0, %v1232
      %1234 = vmatmul.bf16.gmra.mxu0 %v935
      %v1235 = vpop.f32.mrf.mxu0
      %v1236 = vadd.f32 0.0, %v1235
      %v1237 = vpop.f32.mrf.mxu0
      %v1238 = vadd.f32 0.0, %v1237
      %1239 = vmatmul.bf16.gmra.mxu0 %v938
      %v1240 = vpop.f32.mrf.mxu0
      %v1241 = vadd.f32 0.0, %v1240
      %v1242 = vpop.f32.mrf.mxu0
      %v1243 = vadd.f32 0.0, %v1242
      %1244 = vmatmul.bf16.gmra.mxu0 %v941
      %v1245 = vpop.f32.mrf.mxu0
      %v1246 = vadd.f32 0.0, %v1245
      %v1247 = vpop.f32.mrf.mxu0
      %v1248 = vadd.f32 0.0, %v1247
      %1249 = vmatmul.bf16.gmra.mxu0 %v944
      %v1250 = vpop.f32.mrf.mxu0
      %v1251 = vadd.f32 0.0, %v1250
      %v1252 = vpop.f32.mrf.mxu0
      %v1253 = vadd.f32 0.0, %v1252
      %1254 = vmatmul.bf16.gmra.mxu0 %v1206
      %v1255 = vpop.f32.mrf.mxu0
      %v1256 = vadd.f32 0.0, %v1255
      %v1257 = vpop.f32.mrf.mxu0
      %v1258 = vadd.f32 0.0, %v1257
      %1259 = vdwg.mxu0
      %v1260 = vadd.f32 %v1176, %v1221
      %v1261 = vadd.f32 %v1177, %v1223
      %v1262 = vadd.f32 %v1178, %v1226
      %v1263 = vadd.f32 %v1179, %v1228
      %v1264 = vadd.f32 %v1180, %v1231
      %v1265 = vadd.f32 %v1181, %v1233
      %v1266 = vadd.f32 %v1182, %v1236
      %v1267 = vadd.f32 %v1183, %v1238
      %v1268 = vadd.f32 %v1184, %v1241
      %v1269 = vadd.f32 %v1185, %v1243
      %v1270 = vadd.f32 %v1186, %v1246
      %v1271 = vadd.f32 %v1187, %v1248
      %v1272 = vadd.f32 %v1188, %v1251
      %v1273 = vadd.f32 %v1189, %v1253
      %v1274 = vadd.f32 %v1190, %v1256
      %v1275 = vadd.f32 %v1191, %v1258
      %s1276 = scalar_lea.vmem %s2, 12
      %v1277 = vld [vmem:[%s1276] sm:$0x3]
      %v1280 = vunpack.c.l.b16 %v410
      %v1281 = vunpack.c.l.b16 %v411
      %v1282 = vpack.c.b16 %v1281, %v1280
      %v1284 = vsel %vm635, %v1282, 0
      %v1287 = vsel %vm660, %v1277, 0
      %1289 = vmatpush.bf16.msra.mxu0 0
      %1290 = vmatpush.bf16.msra.mxu0 0
      %1291 = vmatpush.bf16.msra.mxu0 0
      %1292 = vmatpush.bf16.msra.mxu0 0
      %1293 = vmatpush.bf16.msra.mxu0 0
      %1294 = vmatpush.bf16.msra.mxu0 0
      %1295 = vmatpush.bf16.msra.mxu0 0
      %1296 = vmatpush.bf16.msra.mxu0 %v1287
      %1297 = vmatmul.bf16.gmra.mxu0 %v760
      %v1298 = vpop.f32.mrf.mxu0
      %v1299 = vadd.f32 0.0, %v1298
      %v1300 = vpop.f32.mrf.mxu0
      %v1301 = vadd.f32 0.0, %v1300
      %1302 = vmatmul.bf16.gmra.mxu0 %v763
      %v1303 = vpop.f32.mrf.mxu0
      %v1304 = vadd.f32 0.0, %v1303
      %v1305 = vpop.f32.mrf.mxu0
      %v1306 = vadd.f32 0.0, %v1305
      %1307 = vmatmul.bf16.gmra.mxu0 %v766
      %v1308 = vpop.f32.mrf.mxu0
      %v1309 = vadd.f32 0.0, %v1308
      %v1310 = vpop.f32.mrf.mxu0
      %v1311 = vadd.f32 0.0, %v1310
      %1312 = vmatmul.bf16.gmra.mxu0 %v769
      %v1313 = vpop.f32.mrf.mxu0
      %v1314 = vadd.f32 0.0, %v1313
      %v1315 = vpop.f32.mrf.mxu0
      %v1316 = vadd.f32 0.0, %v1315
      %1317 = vmatmul.bf16.gmra.mxu0 %v772
      %v1318 = vpop.f32.mrf.mxu0
      %v1319 = vadd.f32 0.0, %v1318
      %v1320 = vpop.f32.mrf.mxu0
      %v1321 = vadd.f32 0.0, %v1320
      %1322 = vmatmul.bf16.gmra.mxu0 %v775
      %v1323 = vpop.f32.mrf.mxu0
      %v1324 = vadd.f32 0.0, %v1323
      %v1325 = vpop.f32.mrf.mxu0
      %v1326 = vadd.f32 0.0, %v1325
      %1327 = vmatmul.bf16.gmra.mxu0 %v1022
      %v1328 = vpop.f32.mrf.mxu0
      %v1329 = vadd.f32 0.0, %v1328
      %v1330 = vpop.f32.mrf.mxu0
      %v1331 = vadd.f32 0.0, %v1330
      %1332 = vmatmul.bf16.gmra.mxu0 %v1284
      %v1333 = vpop.f32.mrf.mxu0
      %v1334 = vadd.f32 0.0, %v1333
      %v1335 = vpop.f32.mrf.mxu0
      %v1336 = vadd.f32 0.0, %v1335
      %1337 = vdwg.mxu0
      %v1338 = vadd.f32 %v1260, %v1299
      %v1339 = vadd.f32 %v1261, %v1301
      %v1340 = vadd.f32 %v1262, %v1304
      %v1341 = vadd.f32 %v1263, %v1306
      %v1342 = vadd.f32 %v1264, %v1309
      %v1343 = vadd.f32 %v1265, %v1311
      %v1344 = vadd.f32 %v1266, %v1314
      %v1345 = vadd.f32 %v1267, %v1316
      %v1346 = vadd.f32 %v1268, %v1319
      %v1347 = vadd.f32 %v1269, %v1321
      %v1348 = vadd.f32 %v1270, %v1324
      %v1349 = vadd.f32 %v1271, %v1326
      %v1350 = vadd.f32 %v1272, %v1329
      %v1351 = vadd.f32 %v1273, %v1331
      %v1352 = vadd.f32 %v1274, %v1334
      %v1353 = vadd.f32 %v1275, %v1336
      %v1355 = vshrl.u32 %v410, 16
      %v1357 = vrot.slane %v1355, 4
      %v1358 = vshll.u32 %v410, 16
      %v1360 = vrot.slane %v1358, 5
      %v1361 = vor.u32 %v1357, %v1360
      %v1362 = vrot.slane %v1361, 4
      %v1364 = vshll.u32 %v411, 16
      %v1366 = vrot.slane %v1364, 5
      %v1367 = vsel %vm416, %v1362, %v1366
      %v1368 = vshrl.u32 %v411, 16
      %v1370 = vrot.slane %v1368, 4
      %v1371 = vor.u32 %v1370, %v1366
      %v1372 = vrot.slane %v1371, 4
      %v1374 = vshll.u32 %v412, 16
      %v1376 = vrot.slane %v1374, 5
      %v1377 = vsel %vm416, %v1372, %v1376
      %s1378 = scalar_lea.vmem %s2, 14
      %v1379 = vld [vmem:[%s1378] sm:$0x3]
      %v1380 = vunpack.c.l.b16 %v1367
      %v1381 = vunpack.c.l.b16 %v1377
      %v1382 = vpack.c.b16 %v1381, %v1380
      %v1384 = vsel %vm635, %v1382, 0
      %v1387 = vsel %vm660, %v1379, 0
      %1389 = vmatpush.bf16.msra.mxu0 0
      %1390 = vmatpush.bf16.msra.mxu0 0
      %1391 = vmatpush.bf16.msra.mxu0 0
      %1392 = vmatpush.bf16.msra.mxu0 0
      %1393 = vmatpush.bf16.msra.mxu0 0
      %1394 = vmatpush.bf16.msra.mxu0 0
      %1395 = vmatpush.bf16.msra.mxu0 0
      %1396 = vmatpush.bf16.msra.mxu0 %v1387
      %1397 = vmatmul.bf16.gmra.mxu0 %v643
      %v1398 = vpop.f32.mrf.mxu0
      %v1399 = vadd.f32 0.0, %v1398
      %v1400 = vpop.f32.mrf.mxu0
      %v1401 = vadd.f32 0.0, %v1400
      %1402 = vmatmul.bf16.gmra.mxu0 %v646
      %v1403 = vpop.f32.mrf.mxu0
      %v1404 = vadd.f32 0.0, %v1403
      %v1405 = vpop.f32.mrf.mxu0
      %v1406 = vadd.f32 0.0, %v1405
      %1407 = vmatmul.bf16.gmra.mxu0 %v649
      %v1408 = vpop.f32.mrf.mxu0
      %v1409 = vadd.f32 0.0, %v1408
      %v1410 = vpop.f32.mrf.mxu0
      %v1411 = vadd.f32 0.0, %v1410
      %1412 = vmatmul.bf16.gmra.mxu0 %v652
      %v1413 = vpop.f32.mrf.mxu0
      %v1414 = vadd.f32 0.0, %v1413
      %v1415 = vpop.f32.mrf.mxu0
      %v1416 = vadd.f32 0.0, %v1415
      %1417 = vmatmul.bf16.gmra.mxu0 %v655
      %v1418 = vpop.f32.mrf.mxu0
      %v1419 = vadd.f32 0.0, %v1418
      %v1420 = vpop.f32.mrf.mxu0
      %v1421 = vadd.f32 0.0, %v1420
      %1422 = vmatmul.bf16.gmra.mxu0 %v658
      %v1423 = vpop.f32.mrf.mxu0
      %v1424 = vadd.f32 0.0, %v1423
      %v1425 = vpop.f32.mrf.mxu0
      %v1426 = vadd.f32 0.0, %v1425
      %1427 = vmatmul.bf16.gmra.mxu0 %v1122
      %v1428 = vpop.f32.mrf.mxu0
      %v1429 = vadd.f32 0.0, %v1428
      %v1430 = vpop.f32.mrf.mxu0
      %v1431 = vadd.f32 0.0, %v1430
      %1432 = vmatmul.bf16.gmra.mxu0 %v1384
      %v1433 = vpop.f32.mrf.mxu0
      %v1434 = vadd.f32 0.0, %v1433
      %v1435 = vpop.f32.mrf.mxu0
      %v1436 = vadd.f32 0.0, %v1435
      %1437 = vdwg.mxu0
      %v1438 = vadd.f32 %v1338, %v1399
      %v1439 = vadd.f32 %v1339, %v1401
      %v1440 = vadd.f32 %v1340, %v1404
      %v1441 = vadd.f32 %v1341, %v1406
      %v1442 = vadd.f32 %v1342, %v1409
      %v1443 = vadd.f32 %v1343, %v1411
      %v1444 = vadd.f32 %v1344, %v1414
      %v1445 = vadd.f32 %v1345, %v1416
      %v1446 = vadd.f32 %v1346, %v1419
      %v1447 = vadd.f32 %v1347, %v1421
      %v1448 = vadd.f32 %v1348, %v1424
      %v1449 = vadd.f32 %v1349, %v1426
      %v1450 = vadd.f32 %v1350, %v1429
      %v1451 = vadd.f32 %v1351, %v1431
      %v1452 = vadd.f32 %v1352, %v1434
      %v1453 = vadd.f32 %v1353, %v1436
      %v1455 = vrot.slane %v410, 5
      %v1456 = vrot.slane %v1455, 4
      %v1457 = vrot.slane %v411, 5
      %v1458 = vsel %vm839, %v1456, %v1457
      %v1459 = vrot.slane %v1457, 4
      %v1460 = vrot.slane %v412, 5
      %v1461 = vsel %vm839, %v1459, %v1460
      %s1462 = scalar_lea.vmem %s2, 16
      %v1463 = vld [vmem:[%s1462] sm:$0x3]
      %v1464 = vunpack.c.l.b16 %v1458
      %v1465 = vunpack.c.l.b16 %v1461
      %v1466 = vpack.c.b16 %v1465, %v1464
      %v1468 = vsel %vm635, %v1466, 0
      %v1471 = vsel %vm660, %v1463, 0
      %1473 = vmatpush.bf16.msra.mxu0 0
      %1474 = vmatpush.bf16.msra.mxu0 0
      %1475 = vmatpush.bf16.msra.mxu0 0
      %1476 = vmatpush.bf16.msra.mxu0 0
      %1477 = vmatpush.bf16.msra.mxu0 0
      %1478 = vmatpush.bf16.msra.mxu0 0
      %1479 = vmatpush.bf16.msra.mxu0 0
      %1480 = vmatpush.bf16.msra.mxu0 %v1471
      %1481 = vmatmul.bf16.gmra.mxu0 %v929
      %v1482 = vpop.f32.mrf.mxu0
      %v1483 = vadd.f32 0.0, %v1482
      %v1484 = vpop.f32.mrf.mxu0
      %v1485 = vadd.f32 0.0, %v1484
      %1486 = vmatmul.bf16.gmra.mxu0 %v932
      %v1487 = vpop.f32.mrf.mxu0
      %v1488 = vadd.f32 0.0, %v1487
      %v1489 = vpop.f32.mrf.mxu0
      %v1490 = vadd.f32 0.0, %v1489
      %1491 = vmatmul.bf16.gmra.mxu0 %v935
      %v1492 = vpop.f32.mrf.mxu0
      %v1493 = vadd.f32 0.0, %v1492
      %v1494 = vpop.f32.mrf.mxu0
      %v1495 = vadd.f32 0.0, %v1494
      %1496 = vmatmul.bf16.gmra.mxu0 %v938
      %v1497 = vpop.f32.mrf.mxu0
      %v1498 = vadd.f32 0.0, %v1497
      %v1499 = vpop.f32.mrf.mxu0
      %v1500 = vadd.f32 0.0, %v1499
      %1501 = vmatmul.bf16.gmra.mxu0 %v941
      %v1502 = vpop.f32.mrf.mxu0
      %v1503 = vadd.f32 0.0, %v1502
      %v1504 = vpop.f32.mrf.mxu0
      %v1505 = vadd.f32 0.0, %v1504
      %1506 = vmatmul.bf16.gmra.mxu0 %v944
      %v1507 = vpop.f32.mrf.mxu0
      %v1508 = vadd.f32 0.0, %v1507
      %v1509 = vpop.f32.mrf.mxu0
      %v1510 = vadd.f32 0.0, %v1509
      %1511 = vmatmul.bf16.gmra.mxu0 %v1206
      %v1512 = vpop.f32.mrf.mxu0
      %v1513 = vadd.f32 0.0, %v1512
      %v1514 = vpop.f32.mrf.mxu0
      %v1515 = vadd.f32 0.0, %v1514
      %1516 = vmatmul.bf16.gmra.mxu0 %v1468
      %v1517 = vpop.f32.mrf.mxu0
      %v1518 = vadd.f32 0.0, %v1517
      %v1519 = vpop.f32.mrf.mxu0
      %v1520 = vadd.f32 0.0, %v1519
      %1521 = vdwg.mxu0
      %v1522 = vadd.f32 %v1438, %v1483
      %v1523 = vadd.f32 %v1439, %v1485
      %v1524 = vadd.f32 %v1440, %v1488
      %v1525 = vadd.f32 %v1441, %v1490
      %v1526 = vadd.f32 %v1442, %v1493
      %v1527 = vadd.f32 %v1443, %v1495
      %v1528 = vadd.f32 %v1444, %v1498
      %v1529 = vadd.f32 %v1445, %v1500
      %v1530 = vadd.f32 %v1446, %v1503
      %v1531 = vadd.f32 %v1447, %v1505
      %v1532 = vadd.f32 %v1448, %v1508
      %v1533 = vadd.f32 %v1449, %v1510
      %v1534 = vadd.f32 %v1450, %v1513
      %v1535 = vadd.f32 %v1451, %v1515
      %v1536 = vadd.f32 %v1452, %v1518
      %v1537 = vadd.f32 %v1453, %v1520
      %v1538 = vadd.f32 %v1522, %v1523
      %v1539 = vadd.f32 %v1538, %v1524
      %v1540 = vadd.f32 %v1539, %v1525
      %v1541 = vadd.f32 %v1540, %v1526
      %v1542 = vadd.f32 %v1541, %v1527
      %v1543 = vadd.f32 %v1542, %v1528
      %v1544 = vadd.f32 %v1543, %v1529
      %v1545 = vadd.f32 %v1544, %v1530
      %v1546 = vadd.f32 %v1545, %v1531
      %v1547 = vadd.f32 %v1546, %v1532
      %v1548 = vadd.f32 %v1547, %v1533
      %v1549 = vadd.f32 %v1548, %v1534
      %v1550 = vadd.f32 %v1549, %v1535
      %v1551 = vadd.f32 %v1550, %v1536
      %v1552 = vadd.f32 %v1551, %v1537
      %v1553 = vrot.slane %v1552, 4
      %v1554 = vadd.f32 %v1552, %v1553
      %v1555 = vrot.slane %v1554, 2
      %v1556 = vadd.f32 %v1554, %v1555
      %v1557 = vrot.slane %v1556, 1
      %v1558 = vadd.f32 %v1556, %v1557
      %v1559 = vmul.f32 %v1558, 0.0078125
      %v1560 = vsub.f32 %v1522, %v1559
      %v1561 = vsub.f32 %v1523, %v1559
      %v1562 = vsub.f32 %v1524, %v1559
      %v1563 = vsub.f32 %v1525, %v1559
      %v1564 = vsub.f32 %v1526, %v1559
      %v1565 = vsub.f32 %v1527, %v1559
      %v1566 = vsub.f32 %v1528, %v1559
      %v1567 = vsub.f32 %v1529, %v1559
      %v1568 = vsub.f32 %v1530, %v1559
      %v1569 = vsub.f32 %v1531, %v1559
      %v1570 = vsub.f32 %v1532, %v1559
      %v1571 = vsub.f32 %v1533, %v1559
      %v1572 = vsub.f32 %v1534, %v1559
      %v1573 = vsub.f32 %v1535, %v1559
      %v1574 = vsub.f32 %v1536, %v1559
      %v1575 = vsub.f32 %v1537, %v1559
      %1576 = vst [vmem:[%s374] sm:$0x1] %v1558
      %v1577 = vmul.f32 %v1560, %v1560
      %v1578 = vmul.f32 %v1561, %v1561
      %v1579 = vmul.f32 %v1562, %v1562
      %v1580 = vmul.f32 %v1563, %v1563
      %v1581 = vmul.f32 %v1564, %v1564
      %v1582 = vmul.f32 %v1565, %v1565
      %v1583 = vmul.f32 %v1566, %v1566
      %v1584 = vmul.f32 %v1567, %v1567
      %v1585 = vmul.f32 %v1568, %v1568
      %v1586 = vmul.f32 %v1569, %v1569
      %v1587 = vmul.f32 %v1570, %v1570
      %v1588 = vmul.f32 %v1571, %v1571
      %v1589 = vmul.f32 %v1572, %v1572
      %v1590 = vmul.f32 %v1573, %v1573
      %v1591 = vmul.f32 %v1574, %v1574
      %v1592 = vmul.f32 %v1575, %v1575
      %v1593 = vadd.f32 %v1577, %v1578
      %v1594 = vadd.f32 %v1593, %v1579
      %v1595 = vadd.f32 %v1594, %v1580
      %v1596 = vadd.f32 %v1595, %v1581
      %v1597 = vadd.f32 %v1596, %v1582
      %v1598 = vadd.f32 %v1597, %v1583
      %v1599 = vadd.f32 %v1598, %v1584
      %v1600 = vadd.f32 %v1599, %v1585
      %v1601 = vadd.f32 %v1600, %v1586
      %v1602 = vadd.f32 %v1601, %v1587
      %v1603 = vadd.f32 %v1602, %v1588
      %v1604 = vadd.f32 %v1603, %v1589
      %v1605 = vadd.f32 %v1604, %v1590
      %v1606 = vadd.f32 %v1605, %v1591
      %v1607 = vadd.f32 %v1606, %v1592
      %v1608 = vrot.slane %v1607, 4
      %v1609 = vadd.f32 %v1607, %v1608
      %v1610 = vrot.slane %v1609, 2
      %v1611 = vadd.f32 %v1609, %v1610
      %v1612 = vrot.slane %v1611, 1
      %v1613 = vadd.f32 %v1611, %v1612
      %1614 = vst [vmem:[%s381] sm:$0x1] %v1613
      %v1615 = vpack.c.bf16 %v1522, %v1522
      %v1616 = vpack.c.bf16 %v1523, %v1523
      %v1617 = vpack.c.bf16 %v1524, %v1524
      %v1618 = vpack.c.bf16 %v1525, %v1525
      %v1619 = vpack.c.bf16 %v1526, %v1526
      %v1620 = vpack.c.bf16 %v1527, %v1527
      %v1621 = vpack.c.bf16 %v1528, %v1528
      %v1622 = vpack.c.bf16 %v1529, %v1529
      %v1623 = vpack.c.bf16 %v1530, %v1530
      %v1624 = vpack.c.bf16 %v1531, %v1531
      %v1625 = vpack.c.bf16 %v1532, %v1532
      %v1626 = vpack.c.bf16 %v1533, %v1533
      %v1627 = vpack.c.bf16 %v1534, %v1534
      %v1628 = vpack.c.bf16 %v1535, %v1535
      %v1629 = vpack.c.bf16 %v1536, %v1536
      %v1630 = vpack.c.bf16 %v1537, %v1537
      %1631 = vst [vmem:[%s366] sm:$0xf] %v1615
      %1632 = vst [vmem:[%s366 + $0x4] sm:$0xf] %v1616
      %1633 = vst [vmem:[%s366 + $0x8] sm:$0xf] %v1617
      %1634 = vst [vmem:[%s366 + $0xc] sm:$0xf] %v1618
      %1635 = vst [vmem:[%s366 + $0x10] sm:$0xf] %v1619
      %1636 = vst [vmem:[%s366 + $0x14] sm:$0xf] %v1620
      %1637 = vst [vmem:[%s366 + $0x18] sm:$0xf] %v1621
      %1638 = vst [vmem:[%s366 + $0x1c] sm:$0xf] %v1622
      %1639 = vst [vmem:[%s366 + $0x20] sm:$0xf] %v1623
      %1640 = vst [vmem:[%s366 + $0x24] sm:$0xf] %v1624
      %1641 = vst [vmem:[%s366 + $0x28] sm:$0xf] %v1625
      %1642 = vst [vmem:[%s366 + $0x2c] sm:$0xf] %v1626
      %1643 = vst [vmem:[%s366 + $0x30] sm:$0xf] %v1627
      %1644 = vst [vmem:[%s366 + $0x34] sm:$0xf] %v1628
      %1645 = vst [vmem:[%s366 + $0x38] sm:$0xf] %v1629
      %1646 = vst [vmem:[%s366 + $0x3c] sm:$0xf] %v1630
      %s1647 = smul.u32 16, %s22
      %p1648 = scmp.lt.s32.totalorder %s21, 1
      %s1649 = scalar_select %p1648, %s21, 1
      %p1650 = scmp.lt.s32.totalorder %s1647, 31
      %s1651 = scalar_select %p1650, %s1647, 31
      %s1652 = smul.addr %s1649, 32
      %s1653 = sadd.s32 %s1651, %s1652
      %s1654 = smul.addr %s1653, 4
      %s1655 = scalar_lea.vmem %s3, %s1654
      %p1656 = scmp.lt.s32.totalorder %s21, 1
      %s1657 = scalar_select %p1656, %s21, 1
      %p1658 = scmp.lt.s32.totalorder %s22, 1
      %s1659 = scalar_select %p1658, %s22, 1
      %s1660 = smul.addr %s1657, 2
      %s1661 = sadd.s32 %s1659, %s1660
      %s1662 = scalar_lea.vmem %s4, %s1661
      %p1663 = scmp.lt.s32.totalorder %s21, 1
      %s1664 = scalar_select %p1663, %s21, 1
      %p1665 = scmp.lt.s32.totalorder %s22, 1
      %s1666 = scalar_select %p1665, %s22, 1
      %s1667 = smul.addr %s1664, 2
      %s1668 = sadd.s32 %s1666, %s1667
      %s1669 = scalar_lea.vmem %s5, %s1668
      // Predicated region
      $region33: #{unet_conv2_forward.4} parent=31 // pred_check
        %p1670 = pneg %p130
      $region34: #{unet_conv2_forward.4} parent=31 // pred_check_branch
        %1672 = sbr.rel (%p1670) target = $region36
      $region35: #{unet_conv2_forward.4} parent=31 // pred_region
        %s1673 = smul.u32 16, %s22
      $region36: #{unet_conv2_forward.4} parent=31 // pred_fallthru
        _
      // Predicated region
      $region37: #{unet_conv2_forward.4} parent=31 // pred_check
        %p1674 = pneg %p158
      $region38: #{unet_conv2_forward.4} parent=31 // pred_check_branch
        %1676 = sbr.rel (%p1674) target = $region40
      $region39: #{unet_conv2_forward.4} parent=31 // pred_region
        _
      $region40: #{unet_conv2_forward.4} parent=31 // pred_fallthru
        _
      // Predicated region
      $region41: #{unet_conv2_forward.4} parent=31 // pred_check
        %p1677 = pneg %p186
      $region42: #{unet_conv2_forward.4} parent=31 // pred_check_branch
        %1679 = sbr.rel (%p1677) target = $region44
      $region43: #{unet_conv2_forward.4} parent=31 // pred_region
        _
      $region44: #{unet_conv2_forward.4} parent=31 // pred_fallthru
        _
    $region32: #{unet_conv2_forward.4} parent=5 // pred_fallthru
      _
    %p1680 = scmp.le.s32.totalorder 2, %s12
    // Predicated region
    $region45: #{unet_conv2_forward.4} parent=5 // pred_check
      %p1681 = pneg %p1680
    $region46: #{unet_conv2_forward.4} parent=5 // pred_check_branch
      %1683 = sbr.rel (%p1681) target = $region48
    $region47: #{unet_conv2_forward.4} parent=5 // pred_region
      %s1684 = ssub.s32 %s12, 2
      // Predicated region
      $region49: #{unet_conv2_forward.4} parent=47 // pred_check
        %p1685 = pneg %p136
      $region50: #{unet_conv2_forward.4} parent=47 // pred_check_branch
        %1687 = sbr.rel (%p1685) target = $region52
      $region51: #{unet_conv2_forward.4} parent=47 // pred_region
        %s1688 = smul.u32 16, %s24
        %p1689 = scmp.lt.s32.totalorder %s23, 1
        %s1690 = scalar_select %p1689, %s23, 1
        %p1691 = scmp.lt.s32.totalorder %s1688, 31
        %s1692 = scalar_select %p1691, %s1688, 31
        %s1693 = smul.addr %s1690, 32
        %s1694 = sadd.s32 %s1692, %s1693
        %s1695 = smul.addr %s1694, 4
        %s1696 = scalar_lea.vmem %s3, %s1695
      $region52: #{unet_conv2_forward.4} parent=47 // pred_fallthru
        _
      // Predicated region
      $region53: #{unet_conv2_forward.4} parent=47 // pred_check
        %p1697 = pneg %p164
      $region54: #{unet_conv2_forward.4} parent=47 // pred_check_branch
        %1699 = sbr.rel (%p1697) target = $region56
      $region55: #{unet_conv2_forward.4} parent=47 // pred_region
        %p1700 = scmp.lt.s32.totalorder %s23, 1
        %s1701 = scalar_select %p1700, %s23, 1
        %p1702 = scmp.lt.s32.totalorder %s24, 1
        %s1703 = scalar_select %p1702, %s24, 1
        %s1704 = smul.addr %s1701, 2
        %s1705 = sadd.s32 %s1703, %s1704
        %s1706 = scalar_lea.vmem %s4, %s1705
      $region56: #{unet_conv2_forward.4} parent=47 // pred_fallthru
        _
      // Predicated region
      $region57: #{unet_conv2_forward.4} parent=47 // pred_check
        %p1707 = pneg %p192
      $region58: #{unet_conv2_forward.4} parent=47 // pred_check_branch
        %1709 = sbr.rel (%p1707) target = $region60
      $region59: #{unet_conv2_forward.4} parent=47 // pred_region
        %p1710 = scmp.lt.s32.totalorder %s23, 1
        %s1711 = scalar_select %p1710, %s23, 1
        %p1712 = scmp.lt.s32.totalorder %s24, 1
        %s1713 = scalar_select %p1712, %s24, 1
        %s1714 = smul.addr %s1711, 2
        %s1715 = sadd.s32 %s1713, %s1714
        %s1716 = scalar_lea.vmem %s5, %s1715
      $region60: #{unet_conv2_forward.4} parent=47 // pred_fallthru
        _
    $region48: #{unet_conv2_forward.4} parent=5 // pred_fallthru
      _
  $region6: #{unet_conv2_forward.4} parent=0 // loop_footer
    %s16 = sadd.s32 1, %s12
  $region7: #{unet_conv2_forward.4} parent=0 // loop_footer_branch
    %11 = sbr.rel target = $region3
  $region8: #{unet_conv2_forward.4} parent=0 // loop_exit
    _

// kernel: unet_conv2_forward.6
$region0: #{unet_conv2_forward.6}
  #allocation0 [shape = 'u32[]', space=smem, size = 0x4, offset = 0x4, fixed_abs, tag = 'smem constant byte address 0x4 - core index']
  #allocation1 [shape = 'u32[72,128]{1,0:T(1,128)}', space=vmem, size = 0x9000, scoped, tag = 'internal scratch']
  #allocation2 [shape = 'bf16[128,1152]{1,0:T(8,128)(2,1)}', space=vmem, size = 0x48000, scoped, tag = 'scratch operand']
  %s0 = inlined_call_operand.vmem [shape: bf16[2,18,18,128], index: 0, kind: input, shape index: {}, may-alias: {0,1}]
  %s1 = inlined_call_operand.vmem [shape: bf16[2,18,18,128], index: 1, kind: input, shape index: {}, may-alias: {0,1}]
  %s2 = inlined_call_operand.vmem [shape: bf16[1152,128], index: 2, kind: input, shape index: {}]
  %s3 = inlined_call_operand.vmem [shape: bf16[2,256,128], index: 3, kind: output, shape index: {0}]
  %s4 = inlined_call_operand.vmem [shape: f32[2,2,1,128], index: 4, kind: output, shape index: {1}]
  %s5 = inlined_call_operand.vmem [shape: f32[2,2,1,128], index: 5, kind: output, shape index: {2}]
  %6 = xla_tuple %s3, %s4, %s5
  %s7 = sld [smem:[#allocation0]]
  $region61: #{unet_conv2_forward.6} parent=0
    _
  %s9 = ssub.s32 1, %s7
  %s10 = scalar_select 0, %s9, %s7
  loop: start=0, step=1, limit=6
  $region2: #{unet_conv2_forward.6} parent=0 // loop_pre_header
    _
  $region3: #{unet_conv2_forward.6} parent=0 // loop_header
    %s12 = sphi 0, %s16
    %p13 = scmp.ge.s32.totalorder %s12, 6
    %s19 = sphi 0, %s31
    %s20 = sphi 0, %s27
    %s21 = sphi 0, %s19
    %s22 = sphi 0, %s20
    %s23 = sphi 0, %s21
    %s24 = sphi 0, %s22
    %s36 = sphi 0, %s38
    %s39 = sphi 0, %s36
    %s40 = sphi 0, %s39
    %s56 = sphi 0, %s40
    %s68 = sphi 0, %s70
    %s71 = sphi 0, %s68
    %s72 = sphi 0, %s71
    %s88 = sphi 0, %s72
    %s92 = sphi 0, %s92
    %s94 = sphi 0, %s92
    %s95 = sphi 0, %s94
    %s109 = sphi 0, %s95
    %s117 = sphi 0, %s119
    %s120 = sphi 0, %s117
    %s121 = sphi 0, %s120
    %s137 = sphi 0, %s121
    %s145 = sphi 0, %s147
    %s148 = sphi 0, %s145
    %s149 = sphi 0, %s148
    %s165 = sphi 0, %s149
    %s173 = sphi 0, %s175
    %s176 = sphi 0, %s173
    %s177 = sphi 0, %s176
    %s193 = sphi 0, %s177
  $region4: #{unet_conv2_forward.6} parent=0 // loop_header_branch
    %15 = sbr.rel (%p13) target = $region8
  $region5: #{unet_conv2_forward.6} parent=0 // loop_body
    %s17 = ssub.s32 %s12, 1
    %s18 = ssub.s32 %s12, 2
    %s25 = sadd.s32 1, %s20
    %p26 = scmp.ge.s32.totalorder %s25, 2
    %s27 = scalar_select %p26, 0, %s25
    %s28 = sadd.s32 1, %s19
    %s29 = scalar_select %p26, %s28, %s19
    %p30 = scmp.ge.s32.totalorder %s29, 2
    %s31 = scalar_select %p30, 0, %s29
    %s32 = ssub.s32 %s19, %s31
    %s33 = ssub.s32 %s20, %s27
    %s34 = sor.u32 %s32, %s33
    %p35 = scmp.eq.s32.totalorder %s34, 0
    %s37 = sadd.s32 %s36, 1
    %s38 = scalar_select %p35, %s36, %s37
    %p41 = pneg %p35
    %p42 = scmp.eq.s32.totalorder %s12, 3
    %p43 = por %p41, %p42
    %p44 = scmp.ne.s32.totalorder %s36, %s39
    %p45 = scmp.eq.s32.totalorder %s12, 0
    %p46 = por %p44, %p45
    %p47 = scmp.ne.s32.totalorder %s36, %s39
    %p48 = scmp.eq.s32.totalorder %s17, 3
    %p49 = por %p47, %p48
    %p50 = scmp.ne.s32.totalorder %s39, %s40
    %p51 = scmp.eq.s32.totalorder %s17, 0
    %p52 = por %p50, %p51
    %p53 = scmp.ne.s32.totalorder %s39, %s40
    %p54 = scmp.eq.s32.totalorder %s18, 3
    %p55 = por %p53, %p54
    %p57 = scmp.ne.s32.totalorder %s40, %s56
    %p58 = scmp.eq.s32.totalorder %s18, 0
    %p59 = por %p57, %p58
    %s60 = sadd.s32 %s20, 1
    %s61 = smul.u32 %s60, 4
    %s62 = sadd.s32 %s27, 1
    %s63 = smul.u32 %s62, 4
    %s64 = ssub.s32 %s19, %s31
    %s65 = ssub.s32 %s61, %s63
    %s66 = sor.u32 %s64, %s65
    %p67 = scmp.eq.s32.totalorder %s66, 0
    %s69 = sadd.s32 %s68, 1
    %s70 = scalar_select %p67, %s68, %s69
    %p73 = pneg %p67
    %p74 = scmp.eq.s32.totalorder %s12, 3
    %p75 = por %p73, %p74
    %p76 = scmp.ne.s32.totalorder %s68, %s71
    %p77 = scmp.eq.s32.totalorder %s12, 0
    %p78 = por %p76, %p77
    %p79 = scmp.ne.s32.totalorder %s68, %s71
    %p80 = scmp.eq.s32.totalorder %s17, 3
    %p81 = por %p79, %p80
    %p82 = scmp.ne.s32.totalorder %s71, %s72
    %p83 = scmp.eq.s32.totalorder %s17, 0
    %p84 = por %p82, %p83
    %p85 = scmp.ne.s32.totalorder %s71, %s72
    %p86 = scmp.eq.s32.totalorder %s18, 3
    %p87 = por %p85, %p86
    %p89 = scmp.ne.s32.totalorder %s72, %s88
    %p90 = scmp.eq.s32.totalorder %s18, 0
    %p91 = por %p89, %p90
    %s93 = sadd.s32 %s92, 1
    %p96 = scmp.eq.s32.totalorder %s12, 3
    %p97 = scmp.ne.s32.totalorder %s92, %s94
    %p98 = scmp.eq.s32.totalorder %s12, 0
    %p99 = por %p97, %p98
    %p100 = scmp.ne.s32.totalorder %s92, %s94
    %p101 = scmp.eq.s32.totalorder %s17, 3
    %p102 = por %p100, %p101
    %p103 = scmp.ne.s32.totalorder %s94, %s95
    %p104 = scmp.eq.s32.totalorder %s17, 0
    %p105 = por %p103, %p104
    %p106 = scmp.ne.s32.totalorder %s94, %s95
    %p107 = scmp.eq.s32.totalorder %s18, 3
    %p108 = por %p106, %p107
    %p110 = scmp.ne.s32.totalorder %s95, %s109
    %p111 = scmp.eq.s32.totalorder %s18, 0
    %p112 = por %p110, %p111
    %s113 = ssub.s32 %s19, %s31
    %s114 = ssub.s32 %s20, %s27
    %s115 = sor.u32 %s113, %s114
    %p116 = scmp.eq.s32.totalorder %s115, 0
    %s118 = sadd.s32 %s117, 1
    %s119 = scalar_select %p116, %s117, %s118
    %p122 = pneg %p116
    %p123 = scmp.eq.s32.totalorder %s12, 3
    %p124 = por %p122, %p123
    %p125 = scmp.ne.s32.totalorder %s117, %s120
    %p126 = scmp.eq.s32.totalorder %s12, 0
    %p127 = por %p125, %p126
    %p128 = scmp.ne.s32.totalorder %s117, %s120
    %p129 = scmp.eq.s32.totalorder %s17, 3
    %p130 = por %p128, %p129
    %p131 = scmp.ne.s32.totalorder %s120, %s121
    %p132 = scmp.eq.s32.totalorder %s17, 0
    %p133 = por %p131, %p132
    %p134 = scmp.ne.s32.totalorder %s120, %s121
    %p135 = scmp.eq.s32.totalorder %s18, 3
    %p136 = por %p134, %p135
    %p138 = scmp.ne.s32.totalorder %s121, %s137
    %p139 = scmp.eq.s32.totalorder %s18, 0
    %p140 = por %p138, %p139
    %s141 = ssub.s32 %s19, %s31
    %s142 = ssub.s32 %s20, %s27
    %s143 = sor.u32 %s141, %s142
    %p144 = scmp.eq.s32.totalorder %s143, 0
    %s146 = sadd.s32 %s145, 1
    %s147 = scalar_select %p144, %s145, %s146
    %p150 = pneg %p144
    %p151 = scmp.eq.s32.totalorder %s12, 3
    %p152 = por %p150, %p151
    %p153 = scmp.ne.s32.totalorder %s145, %s148
    %p154 = scmp.eq.s32.totalorder %s12, 0
    %p155 = por %p153, %p154
    %p156 = scmp.ne.s32.totalorder %s145, %s148
    %p157 = scmp.eq.s32.totalorder %s17, 3
    %p158 = por %p156, %p157
    %p159 = scmp.ne.s32.totalorder %s148, %s149
    %p160 = scmp.eq.s32.totalorder %s17, 0
    %p161 = por %p159, %p160
    %p162 = scmp.ne.s32.totalorder %s148, %s149
    %p163 = scmp.eq.s32.totalorder %s18, 3
    %p164 = por %p162, %p163
    %p166 = scmp.ne.s32.totalorder %s149, %s165
    %p167 = scmp.eq.s32.totalorder %s18, 0
    %p168 = por %p166, %p167
    %s169 = ssub.s32 %s19, %s31
    %s170 = ssub.s32 %s20, %s27
    %s171 = sor.u32 %s169, %s170
    %p172 = scmp.eq.s32.totalorder %s171, 0
    %s174 = sadd.s32 %s173, 1
    %s175 = scalar_select %p172, %s173, %s174
    %p178 = pneg %p172
    %p179 = scmp.eq.s32.totalorder %s12, 3
    %p180 = por %p178, %p179
    %p181 = scmp.ne.s32.totalorder %s173, %s176
    %p182 = scmp.eq.s32.totalorder %s12, 0
    %p183 = por %p181, %p182
    %p184 = scmp.ne.s32.totalorder %s173, %s176
    %p185 = scmp.eq.s32.totalorder %s17, 3
    %p186 = por %p184, %p185
    %p187 = scmp.ne.s32.totalorder %s176, %s177
    %p188 = scmp.eq.s32.totalorder %s17, 0
    %p189 = por %p187, %p188
    %p190 = scmp.ne.s32.totalorder %s176, %s177
    %p191 = scmp.eq.s32.totalorder %s18, 3
    %p192 = por %p190, %p191
    %p194 = scmp.ne.s32.totalorder %s177, %s193
    %p195 = scmp.eq.s32.totalorder %s18, 0
    %p196 = por %p194, %p195
    %p197 = scmp.le.s32.totalorder 1, %s12
    %p198 = scmp.lt.s32.totalorder %s12, 5
    %p199 = pnand %p197, %p198
    %p200 = pneg %p199
    // Predicated region
    $region9: #{unet_conv2_forward.6} parent=5 // pred_check
      _
    $region10: #{unet_conv2_forward.6} parent=5 // pred_check_branch
      %202 = sbr.rel (%p199) target = $region12
    $region11: #{unet_conv2_forward.6} parent=5 // pred_region
      %s203 = ssub.s32 %s12, 1
      // Predicated region
      $region13: #{unet_conv2_forward.6} parent=11 // pred_check
        %p204 = pneg %p105
      $region14: #{unet_conv2_forward.6} parent=11 // pred_check_branch
        %206 = sbr.rel (%p204) target = $region16
      $region15: #{unet_conv2_forward.6} parent=11 // pred_region
        _
      $region16: #{unet_conv2_forward.6} parent=11 // pred_fallthru
        _
    $region12: #{unet_conv2_forward.6} parent=5 // pred_fallthru
      _
    %p207 = scmp.lt.s32.totalorder %s12, 4
    // Predicated region
    $region17: #{unet_conv2_forward.6} parent=5 // pred_check
      %p208 = pneg %p207
    $region18: #{unet_conv2_forward.6} parent=5 // pred_check_branch
      %210 = sbr.rel (%p208) target = $region20
    $region19: #{unet_conv2_forward.6} parent=5 // pred_region
      // Predicated region
      $region21: #{unet_conv2_forward.6} parent=19 // pred_check
        %p211 = pneg %p46
      $region22: #{unet_conv2_forward.6} parent=19 // pred_check_branch
        %213 = sbr.rel (%p211) target = $region24
      $region23: #{unet_conv2_forward.6} parent=19 // pred_region
        %s214 = smul.u32 8, %s20
        %s215 = ssub.s32 18, %s214
        %p216 = scmp.lt.s32.totalorder %s215, 8
        %s217 = scalar_select %p216, %s215, 8
        %s218 = smul.u32 4, %s217
        %s219 = smul.u32 %s218, 3
        %p220 = scmp.lt.s32.totalorder %s19, 1
        %s221 = scalar_select %p220, %s19, 1
        %p222 = scmp.lt.s32.totalorder %s214, 17
        %s223 = scalar_select %p222, %s214, 17
        %s224 = smul.addr %s223, 3
        %s225 = smul.addr %s221, 54
        %s226 = sadd.s32 %s224, %s225
        %s227 = smul.addr %s226, 4
        %s228 = scalar_lea.vmem %s0, %s227
        %s229 = smul.u32 8, %s20
        %s230 = ssub.s32 18, %s229
        %p231 = scmp.lt.s32.totalorder %s230, 8
        %s232 = scalar_select %p231, %s230, 8
        %s233 = smul.u32 4, %s232
        %s234 = smul.u32 %s233, 3
      $region24: #{unet_conv2_forward.6} parent=19 // pred_fallthru
        _
      // Predicated region
      $region25: #{unet_conv2_forward.6} parent=19 // pred_check
        %p235 = pneg %p78
      $region26: #{unet_conv2_forward.6} parent=19 // pred_check_branch
        %237 = sbr.rel (%p235) target = $region28
      $region27: #{unet_conv2_forward.6} parent=19 // pred_region
        %s238 = sadd.s32 %s20, 1
        %s239 = smul.u32 %s238, 4
        %s240 = smul.u32 2, %s239
        %p241 = scmp.lt.s32.totalorder %s19, 1
        %s242 = scalar_select %p241, %s19, 1
        %p243 = scmp.lt.s32.totalorder %s240, 17
        %s244 = scalar_select %p243, %s240, 17
        %s245 = smul.addr %s244, 3
        %s246 = smul.addr %s242, 54
        %s247 = sadd.s32 %s245, %s246
        %s248 = smul.addr %s247, 4
        %s249 = scalar_lea.vmem %s1, %s248
        %s250 = sadd.s32 %s20, 1
        %s251 = smul.u32 %s250, 4
        %s252 = smul.u32 2, %s251
      $region28: #{unet_conv2_forward.6} parent=19 // pred_fallthru
        _
    $region20: #{unet_conv2_forward.6} parent=5 // pred_fallthru
      _
    %p253 = scmp.le.s32.totalorder 1, %s12
    %p254 = scmp.lt.s32.totalorder %s12, 5
    %p255 = pnand %p253, %p254
    %p256 = pneg %p255
    // Predicated region
    $region29: #{unet_conv2_forward.6} parent=5 // pred_check
      _
    $region30: #{unet_conv2_forward.6} parent=5 // pred_check_branch
      %258 = sbr.rel (%p255) target = $region32
    $region31: #{unet_conv2_forward.6} parent=5 // pred_region
      %s259 = ssub.s32 %s12, 1
      %s260 = smul.u32 8, %s22
      %s261 = ssub.s32 18, %s260
      %p262 = scmp.lt.s32.totalorder %s261, 8
      %s263 = scalar_select %p262, %s261, 8
      %s264 = smul.u32 4, %s263
      %s265 = smul.u32 %s264, 3
      %p266 = scmp.lt.s32.totalorder %s21, 1
      %s267 = scalar_select %p266, %s21, 1
      %p268 = scmp.lt.s32.totalorder %s260, 17
      %s269 = scalar_select %p268, %s260, 17
      %s270 = smul.addr %s269, 3
      %s271 = smul.addr %s267, 54
      %s272 = sadd.s32 %s270, %s271
      %s273 = smul.addr %s272, 4
      %s274 = scalar_lea.vmem %s0, %s273
      %p275 = pneg %p52
      %p276 = pneg %p49
      %s277 = sadd.s32 %s22, 1
      %s278 = smul.u32 %s277, 4
      %s279 = smul.u32 2, %s278
      %p280 = scmp.lt.s32.totalorder %s21, 1
      %s281 = scalar_select %p280, %s21, 1
      %p282 = scmp.lt.s32.totalorder %s279, 17
      %s283 = scalar_select %p282, %s279, 17
      %s284 = smul.addr %s283, 3
      %s285 = smul.addr %s281, 54
      %s286 = sadd.s32 %s284, %s285
      %s287 = smul.addr %s286, 4
      %s288 = scalar_lea.vmem %s1, %s287
      %p289 = pneg %p84
      %p290 = pneg %p81
      %p291 = pneg %p105
      %p292 = pneg %p102
      %p293 = pneg %p133
      %p294 = pneg %p130
      %s295 = smul.u32 16, %s22
      %p296 = scmp.lt.s32.totalorder %s21, 1
      %s297 = scalar_select %p296, %s21, 1
      %p298 = scmp.lt.s32.totalorder %s295, 31
      %s299 = scalar_select %p298, %s295, 31
      %s300 = smul.addr %s297, 32
      %s301 = sadd.s32 %s299, %s300
      %s302 = smul.addr %s301, 4
      %s303 = scalar_lea.vmem %s3, %s302
      %p304 = pneg %p161
      %p305 = pneg %p158
      %p306 = scmp.lt.s32.totalorder %s21, 1
      %s307 = scalar_select %p306, %s21, 1
      %p308 = scmp.lt.s32.totalorder %s22, 1
      %s309 = scalar_select %p308, %s22, 1
      %s310 = smul.addr %s307, 2
      %s311 = sadd.s32 %s309, %s310
      %s312 = scalar_lea.vmem %s4, %s311
      %p313 = pneg %p189
      %p314 = pneg %p186
      %p315 = scmp.lt.s32.totalorder %s21, 1
      %s316 = scalar_select %p315, %s21, 1
      %p317 = scmp.lt.s32.totalorder %s22, 1
      %s318 = scalar_select %p317, %s22, 1
      %s319 = smul.addr %s316, 2
      %s320 = sadd.s32 %s318, %s319
      %s321 = scalar_lea.vmem %s5, %s320
      %s322 = smul.u32 8, %s22
      %s323 = ssub.s32 18, %s322
      %p324 = scmp.lt.s32.totalorder %s323, 8
      %s325 = scalar_select %p324, %s323, 8
      %s326 = smul.u32 4, %s325
      %s327 = smul.u32 %s326, 3
      %p328 = scmp.lt.s32.totalorder %s21, 1
      %s329 = scalar_select %p328, %s21, 1
      %p330 = scmp.lt.s32.totalorder %s322, 17
      %s331 = scalar_select %p330, %s322, 17
      %s332 = smul.addr %s331, 3
      %s333 = smul.addr %s329, 54
      %s334 = sadd.s32 %s332, %s333
      %s335 = smul.addr %s334, 4
      %s336 = scalar_lea.vmem %s0, %s335
      %s337 = smul.u32 8, %s22
      %s338 = ssub.s32 18, %s337
      %p339 = scmp.lt.s32.totalorder %s338, 8
      %s340 = scalar_select %p339, %s338, 8
      %s341 = smul.u32 4, %s340
      %s342 = smul.u32 %s341, 3
      %s343 = sadd.s32 %s22, 1
      %s344 = smul.u32 %s343, 4
      %s345 = smul.u32 2, %s344
      %p346 = scmp.lt.s32.totalorder %s21, 1
      %s347 = scalar_select %p346, %s21, 1
      %p348 = scmp.lt.s32.totalorder %s345, 17
      %s349 = scalar_select %p348, %s345, 17
      %s350 = smul.addr %s349, 3
      %s351 = smul.addr %s347, 54
      %s352 = sadd.s32 %s350, %s351
      %s353 = smul.addr %s352, 4
      %s354 = scalar_lea.vmem %s1, %s353
      %s355 = sadd.s32 %s22, 1
      %s356 = smul.u32 %s355, 4
      %s357 = smul.u32 2, %s356
      %s358 = smul.u32 16, %s22
      %p359 = scmp.lt.s32.totalorder %s21, 1
      %s360 = scalar_select %p359, %s21, 1
      %p361 = scmp.lt.s32.totalorder %s358, 31
      %s362 = scalar_select %p361, %s358, 31
      %s363 = smul.addr %s360, 32
      %s364 = sadd.s32 %s362, %s363
      %s365 = smul.addr %s364, 4
      %s366 = scalar_lea.vmem %s3, %s365
      %s367 = smul.u32 16, %s22
      %p368 = scmp.lt.s32.totalorder %s21, 1
      %s369 = scalar_select %p368, %s21, 1
      %p370 = scmp.lt.s32.totalorder %s22, 1
      %s371 = scalar_select %p370, %s22, 1
      %s372 = smul.addr %s369, 2
      %s373 = sadd.s32 %s371, %s372
      %s374 = scalar_lea.vmem %s4, %s373
      %p375 = scmp.lt.s32.totalorder %s21, 1
      %s376 = scalar_select %p375, %s21, 1
      %p377 = scmp.lt.s32.totalorder %s22, 1
      %s378 = scalar_select %p377, %s22, 1
      %s379 = smul.addr %s376, 2
      %s380 = sadd.s32 %s378, %s379
      %s381 = scalar_lea.vmem %s5, %s380
      %v382 = vld [vmem:[%s336] sm:$0xf]
      %v383 = vld [vmem:[%s336 + $0x4] sm:$0xf]
      %v384 = vld [vmem:[%s336 + $0x8] sm:$0x1]
      %v385 = vld [vmem:[%s336 + $0xc] sm:$0xf]
      %v386 = vld [vmem:[%s336 + $0x10] sm:$0xf]
      %v387 = vld [vmem:[%s336 + $0x14] sm:$0x1]
      %v388 = vld [vmem:[%s336 + $0x18] sm:$0xf]
      %v389 = vld [vmem:[%s336 + $0x1c] sm:$0xf]
      %v390 = vld [vmem:[%s336 + $0x20] sm:$0x1]
      %v391 = vld [vmem:[%s336 + $0x24] sm:$0xf]
      %v392 = vld [vmem:[%s336 + $0x28] sm:$0xf]
      %v393 = vld [vmem:[%s336 + $0x2c] sm:$0x1]
      %v394 = vld [vmem:[%s336 + $0x30] sm:$0xf]
      %v395 = vld [vmem:[%s336 + $0x34] sm:$0xf]
      %v396 = vld [vmem:[%s336 + $0x38] sm:$0x1]
      %v397 = vld [vmem:[%s336 + $0x3c] sm:$0xf]
      %v398 = vld [vmem:[%s336 + $0x40] sm:$0xf]
      %v399 = vld [vmem:[%s336 + $0x44] sm:$0x1]
      %v400 = vld [vmem:[%s336 + $0x48] sm:$0xf]
      %v401 = vld [vmem:[%s336 + $0x4c] sm:$0xf]
      %v402 = vld [vmem:[%s336 + $0x50] sm:$0x1]
      %v403 = vld [vmem:[%s336 + $0x54] sm:$0xf]
      %v404 = vld [vmem:[%s336 + $0x58] sm:$0xf]
      %v405 = vld [vmem:[%s336 + $0x5c] sm:$0x1]
      %v406 = vld [vmem:[%s354] sm:$0xf]
      %v407 = vld [vmem:[%s354 + $0x4] sm:$0xf]
      %v408 = vld [vmem:[%s354 + $0x8] sm:$0x1]
      %v409 = vld [vmem:[%s354 + $0xc] sm:$0xf]
      %v410 = vld [vmem:[%s354 + $0x10] sm:$0xf]
      %v411 = vld [vmem:[%s354 + $0x14] sm:$0x1]
      %412 = vst [vmem:[#allocation2] sm:$0xf] %v382
      %413 = vst [vmem:[#allocation2 + $0x24] sm:$0xf] %v383
      %414 = vst [vmem:[#allocation2 + $0x48] sm:$0xf] %v385
      %415 = vst [vmem:[#allocation2 + $0x6c] sm:$0xf] %v386
      %416 = vst [vmem:[#allocation2 + $0x90] sm:$0xf] %v388
      %417 = vst [vmem:[#allocation2 + $0xb4] sm:$0xf] %v389
      %418 = vst [vmem:[#allocation2 + $0xd8] sm:$0xf] %v391
      %419 = vst [vmem:[#allocation2 + $0xfc] sm:$0xf] %v392
      %420 = vst [vmem:[#allocation2 + $0x120] sm:$0xf] %v394
      %421 = vst [vmem:[#allocation2 + $0x144] sm:$0xf] %v395
      %422 = vst [vmem:[#allocation2 + $0x168] sm:$0xf] %v397
      %423 = vst [vmem:[#allocation2 + $0x18c] sm:$0xf] %v398
      %424 = vst [vmem:[#allocation2 + $0x1b0] sm:$0xf] %v400
      %425 = vst [vmem:[#allocation2 + $0x1d4] sm:$0xf] %v401
      %426 = vst [vmem:[#allocation2 + $0x1f8] sm:$0xf] %v403
      %427 = vst [vmem:[#allocation2 + $0x21c] sm:$0xf] %v404
      %vm428 = vsmask.f32 3328
      %vm429 = vsmask.f32 7440
      %vm430 = vmor %vm428, %vm429
      %v432 = vshrl.u32 %v382, 16
      %v434 = vrot.slane %v432, 4
      %v435 = vshll.u32 %v382, 16
      %v437 = vrot.slane %v435, 5
      %v438 = vor.u32 %v434, %v437
      %v439 = vrot.slane %v438, 4
      %v441 = vshll.u32 %v383, 16
      %v443 = vrot.slane %v441, 5
      %v444 = vsel %vm430, %v439, %v443
      %v445 = vshrl.u32 %v383, 16
      %v447 = vrot.slane %v445, 4
      %v448 = vor.u32 %v447, %v443
      %v449 = vrot.slane %v448, 4
      %v451 = vshll.u32 %v384, 16
      %v453 = vrot.slane %v451, 5
      %v454 = vsel %vm430, %v449, %v453
      %v456 = vshrl.u32 %v385, 16
      %v458 = vrot.slane %v456, 4
      %v459 = vshll.u32 %v385, 16
      %v461 = vrot.slane %v459, 5
      %v462 = vor.u32 %v458, %v461
      %v463 = vrot.slane %v462, 4
      %v465 = vshll.u32 %v386, 16
      %v467 = vrot.slane %v465, 5
      %v468 = vsel %vm430, %v463, %v467
      %v469 = vshrl.u32 %v386, 16
      %v471 = vrot.slane %v469, 4
      %v472 = vor.u32 %v471, %v467
      %v473 = vrot.slane %v472, 4
      %v475 = vshll.u32 %v387, 16
      %v477 = vrot.slane %v475, 5
      %v478 = vsel %vm430, %v473, %v477
      %v480 = vshrl.u32 %v388, 16
      %v482 = vrot.slane %v480, 4
      %v483 = vshll.u32 %v388, 16
      %v485 = vrot.slane %v483, 5
      %v486 = vor.u32 %v482, %v485
      %v487 = vrot.slane %v486, 4
      %v489 = vshll.u32 %v389, 16
      %v491 = vrot.slane %v489, 5
      %v492 = vsel %vm430, %v487, %v491
      %v493 = vshrl.u32 %v389, 16
      %v495 = vrot.slane %v493, 4
      %v496 = vor.u32 %v495, %v491
      %v497 = vrot.slane %v496, 4
      %v499 = vshll.u32 %v390, 16
      %v501 = vrot.slane %v499, 5
      %v502 = vsel %vm430, %v497, %v501
      %v504 = vshrl.u32 %v391, 16
      %v506 = vrot.slane %v504, 4
      %v507 = vshll.u32 %v391, 16
      %v509 = vrot.slane %v507, 5
      %v510 = vor.u32 %v506, %v509
      %v511 = vrot.slane %v510, 4
      %v513 = vshll.u32 %v392, 16
      %v515 = vrot.slane %v513, 5
      %v516 = vsel %vm430, %v511, %v515
      %v517 = vshrl.u32 %v392, 16
      %v519 = vrot.slane %v517, 4
      %v520 = vor.u32 %v519, %v515
      %v521 = vrot.slane %v520, 4
      %v523 = vshll.u32 %v393, 16
      %v525 = vrot.slane %v523, 5
      %v526 = vsel %vm430, %v521, %v525
      %v528 = vshrl.u32 %v394, 16
      %v530 = vrot.slane %v528, 4
      %v531 = vshll.u32 %v394, 16
      %v533 = vrot.slane %v531, 5
      %v534 = vor.u32 %v530, %v533
      %v535 = vrot.slane %v534, 4
      %v537 = vshll.u32 %v395, 16
      %v539 = vrot.slane %v537, 5
      %v540 = vsel %vm430, %v535, %v539
      %v541 = vshrl.u32 %v395, 16
      %v543 = vrot.slane %v541, 4
      %v544 = vor.u32 %v543, %v539
      %v545 = vrot.slane %v544, 4
      %v547 = vshll.u32 %v396, 16
      %v549 = vrot.slane %v547, 5
      %v550 = vsel %vm430, %v545, %v549
      %v552 = vshrl.u32 %v397, 16
      %v554 = vrot.slane %v552, 4
      %v555 = vshll.u32 %v397, 16
      %v557 = vrot.slane %v555, 5
      %v558 = vor.u32 %v554, %v557
      %v559 = vrot.slane %v558, 4
      %v561 = vshll.u32 %v398, 16
      %v563 = vrot.slane %v561, 5
      %v564 = vsel %vm430, %v559, %v563
      %v565 = vshrl.u32 %v398, 16
      %v567 = vrot.slane %v565, 4
      %v568 = vor.u32 %v567, %v563
      %v569 = vrot.slane %v568, 4
      %v571 = vshll.u32 %v399, 16
      %v573 = vrot.slane %v571, 5
      %v574 = vsel %vm430, %v569, %v573
      %v576 = vshrl.u32 %v400, 16
      %v578 = vrot.slane %v576, 4
      %v579 = vshll.u32 %v400, 16
      %v581 = vrot.slane %v579, 5
      %v582 = vor.u32 %v578, %v581
      %v583 = vrot.slane %v582, 4
      %v585 = vshll.u32 %v401, 16
      %v587 = vrot.slane %v585, 5
      %v588 = vsel %vm430, %v583, %v587
      %v589 = vshrl.u32 %v401, 16
      %v591 = vrot.slane %v589, 4
      %v592 = vor.u32 %v591, %v587
      %v593 = vrot.slane %v592, 4
      %v595 = vshll.u32 %v402, 16
      %v597 = vrot.slane %v595, 5
      %v598 = vsel %vm430, %v593, %v597
      %v600 = vshrl.u32 %v403, 16
      %v602 = vrot.slane %v600, 4
      %v603 = vshll.u32 %v403, 16
      %v605 = vrot.slane %v603, 5
      %v606 = vor.u32 %v602, %v605
      %v607 = vrot.slane %v606, 4
      %v609 = vshll.u32 %v404, 16
      %v611 = vrot.slane %v609, 5
      %v612 = vsel %vm430, %v607, %v611
      %v613 = vshrl.u32 %v404, 16
      %v615 = vrot.slane %v613, 4
      %v616 = vor.u32 %v615, %v611
      %v617 = vrot.slane %v616, 4
      %v619 = vshll.u32 %v405, 16
      %v621 = vrot.slane %v619, 5
      %v622 = vsel %vm430, %v617, %v621
      %639 = vst [vmem:[#allocation2 + $0x4] sm:$0xf] %v444
      %640 = vst [vmem:[#allocation2 + $0x28] sm:$0xf] %v454
      %641 = vst [vmem:[#allocation2 + $0x4c] sm:$0xf] %v468
      %642 = vst [vmem:[#allocation2 + $0x70] sm:$0xf] %v478
      %643 = vst [vmem:[#allocation2 + $0x94] sm:$0xf] %v492
      %644 = vst [vmem:[#allocation2 + $0xb8] sm:$0xf] %v502
      %645 = vst [vmem:[#allocation2 + $0xdc] sm:$0xf] %v516
      %646 = vst [vmem:[#allocation2 + $0x100] sm:$0xf] %v526
      %647 = vst [vmem:[#allocation2 + $0x124] sm:$0xf] %v540
      %648 = vst [vmem:[#allocation2 + $0x148] sm:$0xf] %v550
      %649 = vst [vmem:[#allocation2 + $0x16c] sm:$0xf] %v564
      %650 = vst [vmem:[#allocation2 + $0x190] sm:$0xf] %v574
      %651 = vst [vmem:[#allocation2 + $0x1b4] sm:$0xf] %v588
      %652 = vst [vmem:[#allocation2 + $0x1d8] sm:$0xf] %v598
      %653 = vst [vmem:[#allocation2 + $0x1fc] sm:$0xf] %v612
      %654 = vst [vmem:[#allocation2 + $0x220] sm:$0xf] %v622
      %vm679 = vcmask 1042432
      %vm680 = vcmask 1046532
      %vm681 = vmor %vm679, %vm680
      %v682 = vrot.slane %v382, 5
      %v683 = vrot.slane %v682, 4
      %v684 = vrot.slane %v383, 5
      %v685 = vsel %vm681, %v683, %v684
      %v686 = vrot.slane %v684, 4
      %v687 = vrot.slane %v384, 5
      %v688 = vsel %vm681, %v686, %v687
      %v689 = vrot.slane %v385, 5
      %v690 = vrot.slane %v689, 4
      %v691 = vrot.slane %v386, 5
      %v692 = vsel %vm681, %v690, %v691
      %v693 = vrot.slane %v691, 4
      %v694 = vrot.slane %v387, 5
      %v695 = vsel %vm681, %v693, %v694
      %v696 = vrot.slane %v388, 5
      %v697 = vrot.slane %v696, 4
      %v698 = vrot.slane %v389, 5
      %v699 = vsel %vm681, %v697, %v698
      %v700 = vrot.slane %v698, 4
      %v701 = vrot.slane %v390, 5
      %v702 = vsel %vm681, %v700, %v701
      %v703 = vrot.slane %v391, 5
      %v704 = vrot.slane %v703, 4
      %v705 = vrot.slane %v392, 5
      %v706 = vsel %vm681, %v704, %v705
      %v707 = vrot.slane %v705, 4
      %v708 = vrot.slane %v393, 5
      %v709 = vsel %vm681, %v707, %v708
      %v710 = vrot.slane %v394, 5
      %v711 = vrot.slane %v710, 4
      %v712 = vrot.slane %v395, 5
      %v713 = vsel %vm681, %v711, %v712
      %v714 = vrot.slane %v712, 4
      %v715 = vrot.slane %v396, 5
      %v716 = vsel %vm681, %v714, %v715
      %v717 = vrot.slane %v397, 5
      %v718 = vrot.slane %v717, 4
      %v719 = vrot.slane %v398, 5
      %v720 = vsel %vm681, %v718, %v719
      %v721 = vrot.slane %v719, 4
      %v722 = vrot.slane %v399, 5
      %v723 = vsel %vm681, %v721, %v722
      %v724 = vrot.slane %v400, 5
      %v725 = vrot.slane %v724, 4
      %v726 = vrot.slane %v401, 5
      %v727 = vsel %vm681, %v725, %v726
      %v728 = vrot.slane %v726, 4
      %v729 = vrot.slane %v402, 5
      %v730 = vsel %vm681, %v728, %v729
      %v731 = vrot.slane %v403, 5
      %v732 = vrot.slane %v731, 4
      %v733 = vrot.slane %v404, 5
      %v734 = vsel %vm681, %v732, %v733
      %v735 = vrot.slane %v733, 4
      %v736 = vrot.slane %v405, 5
      %v737 = vsel %vm681, %v735, %v736
      %754 = vst [vmem:[#allocation2 + $0x8] sm:$0xf] %v685
      %755 = vst [vmem:[#allocation2 + $0x2c] sm:$0xf] %v688
      %756 = vst [vmem:[#allocation2 + $0x50] sm:$0xf] %v692
      %757 = vst [vmem:[#allocation2 + $0x74] sm:$0xf] %v695
      %758 = vst [vmem:[#allocation2 + $0x98] sm:$0xf] %v699
      %759 = vst [vmem:[#allocation2 + $0xbc] sm:$0xf] %v702
      %760 = vst [vmem:[#allocation2 + $0xe0] sm:$0xf] %v706
      %761 = vst [vmem:[#allocation2 + $0x104] sm:$0xf] %v709
      %762 = vst [vmem:[#allocation2 + $0x128] sm:$0xf] %v713
      %763 = vst [vmem:[#allocation2 + $0x14c] sm:$0xf] %v716
      %764 = vst [vmem:[#allocation2 + $0x170] sm:$0xf] %v720
      %765 = vst [vmem:[#allocation2 + $0x194] sm:$0xf] %v723
      %766 = vst [vmem:[#allocation2 + $0x1b8] sm:$0xf] %v727
      %767 = vst [vmem:[#allocation2 + $0x1dc] sm:$0xf] %v730
      %768 = vst [vmem:[#allocation2 + $0x200] sm:$0xf] %v734
      %769 = vst [vmem:[#allocation2 + $0x224] sm:$0xf] %v737
      %770 = vst [vmem:[#allocation2 + $0xc] sm:$0xf] %v385
      %771 = vst [vmem:[#allocation2 + $0x30] sm:$0xf] %v386
      %772 = vst [vmem:[#allocation2 + $0x54] sm:$0xf] %v388
      %773 = vst [vmem:[#allocation2 + $0x78] sm:$0xf] %v389
      %774 = vst [vmem:[#allocation2 + $0x9c] sm:$0xf] %v391
      %775 = vst [vmem:[#allocation2 + $0xc0] sm:$0xf] %v392
      %776 = vst [vmem:[#allocation2 + $0xe4] sm:$0xf] %v394
      %777 = vst [vmem:[#allocation2 + $0x108] sm:$0xf] %v395
      %778 = vst [vmem:[#allocation2 + $0x12c] sm:$0xf] %v397
      %779 = vst [vmem:[#allocation2 + $0x150] sm:$0xf] %v398
      %780 = vst [vmem:[#allocation2 + $0x174] sm:$0xf] %v400
      %781 = vst [vmem:[#allocation2 + $0x198] sm:$0xf] %v401
      %782 = vst [vmem:[#allocation2 + $0x1bc] sm:$0xf] %v403
      %783 = vst [vmem:[#allocation2 + $0x1e0] sm:$0xf] %v404
      %784 = vst [vmem:[#allocation2 + $0x204] sm:$0xf] %v406
      %785 = vst [vmem:[#allocation2 + $0x228] sm:$0xf] %v407
      %v787 = vshrl.u32 %v406, 16
      %v789 = vrot.slane %v787, 4
      %v790 = vshll.u32 %v406, 16
      %v792 = vrot.slane %v790, 5
      %v793 = vor.u32 %v789, %v792
      %v794 = vrot.slane %v793, 4
      %v796 = vshll.u32 %v407, 16
      %v798 = vrot.slane %v796, 5
      %v799 = vsel %vm430, %v794, %v798
      %v800 = vshrl.u32 %v407, 16
      %v802 = vrot.slane %v800, 4
      %v803 = vor.u32 %v802, %v798
      %v804 = vrot.slane %v803, 4
      %v806 = vshll.u32 %v408, 16
      %v808 = vrot.slane %v806, 5
      %v809 = vsel %vm430, %v804, %v808
      %812 = vst [vmem:[#allocation2 + $0x10] sm:$0xf] %v468
      %813 = vst [vmem:[#allocation2 + $0x34] sm:$0xf] %v478
      %814 = vst [vmem:[#allocation2 + $0x58] sm:$0xf] %v492
      %815 = vst [vmem:[#allocation2 + $0x7c] sm:$0xf] %v502
      %816 = vst [vmem:[#allocation2 + $0xa0] sm:$0xf] %v516
      %817 = vst [vmem:[#allocation2 + $0xc4] sm:$0xf] %v526
      %818 = vst [vmem:[#allocation2 + $0xe8] sm:$0xf] %v540
      %819 = vst [vmem:[#allocation2 + $0x10c] sm:$0xf] %v550
      %820 = vst [vmem:[#allocation2 + $0x130] sm:$0xf] %v564
      %821 = vst [vmem:[#allocation2 + $0x154] sm:$0xf] %v574
      %822 = vst [vmem:[#allocation2 + $0x178] sm:$0xf] %v588
      %823 = vst [vmem:[#allocation2 + $0x19c] sm:$0xf] %v598
      %824 = vst [vmem:[#allocation2 + $0x1c0] sm:$0xf] %v612
      %825 = vst [vmem:[#allocation2 + $0x1e4] sm:$0xf] %v622
      %826 = vst [vmem:[#allocation2 + $0x208] sm:$0xf] %v799
      %827 = vst [vmem:[#allocation2 + $0x22c] sm:$0xf] %v809
      %v831 = vrot.slane %v406, 5
      %v832 = vrot.slane %v831, 4
      %v833 = vrot.slane %v407, 5
      %v834 = vsel %vm681, %v832, %v833
      %v835 = vrot.slane %v833, 4
      %v836 = vrot.slane %v408, 5
      %v837 = vsel %vm681, %v835, %v836
      %840 = vst [vmem:[#allocation2 + $0x14] sm:$0xf] %v692
      %841 = vst [vmem:[#allocation2 + $0x38] sm:$0xf] %v695
      %842 = vst [vmem:[#allocation2 + $0x5c] sm:$0xf] %v699
      %843 = vst [vmem:[#allocation2 + $0x80] sm:$0xf] %v702
      %844 = vst [vmem:[#allocation2 + $0xa4] sm:$0xf] %v706
      %845 = vst [vmem:[#allocation2 + $0xc8] sm:$0xf] %v709
      %846 = vst [vmem:[#allocation2 + $0xec] sm:$0xf] %v713
      %847 = vst [vmem:[#allocation2 + $0x110] sm:$0xf] %v716
      %848 = vst [vmem:[#allocation2 + $0x134] sm:$0xf] %v720
      %849 = vst [vmem:[#allocation2 + $0x158] sm:$0xf] %v723
      %850 = vst [vmem:[#allocation2 + $0x17c] sm:$0xf] %v727
      %851 = vst [vmem:[#allocation2 + $0x1a0] sm:$0xf] %v730
      %852 = vst [vmem:[#allocation2 + $0x1c4] sm:$0xf] %v734
      %853 = vst [vmem:[#allocation2 + $0x1e8] sm:$0xf] %v737
      %854 = vst [vmem:[#allocation2 + $0x20c] sm:$0xf] %v834
      %855 = vst [vmem:[#allocation2 + $0x230] sm:$0xf] %v837
      %856 = vst [vmem:[#allocation2 + $0x18] sm:$0xf] %v388
      %857 = vst [vmem:[#allocation2 + $0x3c] sm:$0xf] %v389
      %858 = vst [vmem:[#allocation2 + $0x60] sm:$0xf] %v391
      %859 = vst [vmem:[#allocation2 + $0x84] sm:$0xf] %v392
      %860 = vst [vmem:[#allocation2 + $0xa8] sm:$0xf] %v394
      %861 = vst [vmem:[#allocation2 + $0xcc] sm:$0xf] %v395
      %862 = vst [vmem:[#allocation2 + $0xf0] sm:$0xf] %v397
      %863 = vst [vmem:[#allocation2 + $0x114] sm:$0xf] %v398
      %864 = vst [vmem:[#allocation2 + $0x138] sm:$0xf] %v400
      %865 = vst [vmem:[#allocation2 + $0x15c] sm:$0xf] %v401
      %866 = vst [vmem:[#allocation2 + $0x180] sm:$0xf] %v403
      %867 = vst [vmem:[#allocation2 + $0x1a4] sm:$0xf] %v404
      %868 = vst [vmem:[#allocation2 + $0x1c8] sm:$0xf] %v406
      %869 = vst [vmem:[#allocation2 + $0x1ec] sm:$0xf] %v407
      %870 = vst [vmem:[#allocation2 + $0x210] sm:$0xf] %v409
      %871 = vst [vmem:[#allocation2 + $0x234] sm:$0xf] %v410
      %v873 = vshrl.u32 %v409, 16
      %v875 = vrot.slane %v873, 4
      %v876 = vshll.u32 %v409, 16
      %v878 = vrot.slane %v876, 5
      %v879 = vor.u32 %v875, %v878
      %v880 = vrot.slane %v879, 4
      %v882 = vshll.u32 %v410, 16
      %v884 = vrot.slane %v882, 5
      %v885 = vsel %vm430, %v880, %v884
      %v886 = vshrl.u32 %v410, 16
      %v888 = vrot.slane %v886, 4
      %v889 = vor.u32 %v888, %v884
      %v890 = vrot.slane %v889, 4
      %v892 = vshll.u32 %v411, 16
      %v894 = vrot.slane %v892, 5
      %v895 = vsel %vm430, %v890, %v894
      %898 = vst [vmem:[#allocation2 + $0x1c] sm:$0xf] %v492
      %899 = vst [vmem:[#allocation2 + $0x40] sm:$0xf] %v502
      %900 = vst [vmem:[#allocation2 + $0x64] sm:$0xf] %v516
      %901 = vst [vmem:[#allocation2 + $0x88] sm:$0xf] %v526
      %902 = vst [vmem:[#allocation2 + $0xac] sm:$0xf] %v540
      %903 = vst [vmem:[#allocation2 + $0xd0] sm:$0xf] %v550
      %904 = vst [vmem:[#allocation2 + $0xf4] sm:$0xf] %v564
      %905 = vst [vmem:[#allocation2 + $0x118] sm:$0xf] %v574
      %906 = vst [vmem:[#allocation2 + $0x13c] sm:$0xf] %v588
      %907 = vst [vmem:[#allocation2 + $0x160] sm:$0xf] %v598
      %908 = vst [vmem:[#allocation2 + $0x184] sm:$0xf] %v612
      %909 = vst [vmem:[#allocation2 + $0x1a8] sm:$0xf] %v622
      %910 = vst [vmem:[#allocation2 + $0x1cc] sm:$0xf] %v799
      %911 = vst [vmem:[#allocation2 + $0x1f0] sm:$0xf] %v809
      %912 = vst [vmem:[#allocation2 + $0x214] sm:$0xf] %v885
      %913 = vst [vmem:[#allocation2 + $0x238] sm:$0xf] %v895
      %v917 = vrot.slane %v409, 5
      %v918 = vrot.slane %v917, 4
      %v919 = vrot.slane %v410, 5
      %v920 = vsel %vm681, %v918, %v919
      %v921 = vrot.slane %v919, 4
      %v922 = vrot.slane %v411, 5
      %v923 = vsel %vm681, %v921, %v922
      %926 = vst [vmem:[#allocation2 + $0x20] sm:$0xf] %v699
      %927 = vst [vmem:[#allocation2 + $0x44] sm:$0xf] %v702
      %928 = vst [vmem:[#allocation2 + $0x68] sm:$0xf] %v706
      %929 = vst [vmem:[#allocation2 + $0x8c] sm:$0xf] %v709
      %930 = vst [vmem:[#allocation2 + $0xb0] sm:$0xf] %v713
      %931 = vst [vmem:[#allocation2 + $0xd4] sm:$0xf] %v716
      %932 = vst [vmem:[#allocation2 + $0xf8] sm:$0xf] %v720
      %933 = vst [vmem:[#allocation2 + $0x11c] sm:$0xf] %v723
      %934 = vst [vmem:[#allocation2 + $0x140] sm:$0xf] %v727
      %935 = vst [vmem:[#allocation2 + $0x164] sm:$0xf] %v730
      %936 = vst [vmem:[#allocation2 + $0x188] sm:$0xf] %v734
      %937 = vst [vmem:[#allocation2 + $0x1ac] sm:$0xf] %v737
      %938 = vst [vmem:[#allocation2 + $0x1d0] sm:$0xf] %v834
      %939 = vst [vmem:[#allocation2 + $0x1f4] sm:$0xf] %v837
      %940 = vst [vmem:[#allocation2 + $0x218] sm:$0xf] %v920
      %941 = vst [vmem:[#allocation2 + $0x23c] sm:$0xf] %v923
      %v942 = vld [vmem:[#allocation2] sm:$0xff]
      %v943 = vld [vmem:[#allocation2 + $0x8] sm:$0xff]
      %v944 = vld [vmem:[#allocation2 + $0x10] sm:$0xff]
      %v945 = vld [vmem:[#allocation2 + $0x18] sm:$0xff]
      %v946 = vld [vmem:[#allocation2 + $0x20] sm:$0xf]
      %v947 = vld [vmem:[#allocation2 + $0x24] sm:$0xff]
      %v948 = vld [vmem:[#allocation2 + $0x2c] sm:$0xff]
      %v949 = vld [vmem:[#allocation2 + $0x34] sm:$0xff]
      %v950 = vld [vmem:[#allocation2 + $0x3c] sm:$0xff]
      %v951 = vld [vmem:[#allocation2 + $0x44] sm:$0xf]
      %v952 = vld [vmem:[#allocation2 + $0x48] sm:$0xff]
      %v953 = vld [vmem:[#allocation2 + $0x50] sm:$0xff]
      %v954 = vld [vmem:[#allocation2 + $0x58] sm:$0xff]
      %v955 = vld [vmem:[#allocation2 + $0x60] sm:$0xff]
      %v956 = vld [vmem:[#allocation2 + $0x68] sm:$0xf]
      %v957 = vld [vmem:[#allocation2 + $0x6c] sm:$0xff]
      %v958 = vld [vmem:[#allocation2 + $0x74] sm:$0xff]
      %v959 = vld [vmem:[#allocation2 + $0x7c] sm:$0xff]
      %v960 = vld [vmem:[#allocation2 + $0x84] sm:$0xff]
      %v961 = vld [vmem:[#allocation2 + $0x8c] sm:$0xf]
      %v962 = vld [vmem:[#allocation2 + $0x90] sm:$0xff]
      %v963 = vld [vmem:[#allocation2 + $0x98] sm:$0xff]
      %v964 = vld [vmem:[#allocation2 + $0xa0] sm:$0xff]
      %v965 = vld [vmem:[#allocation2 + $0xa8] sm:$0xff]
      %v966 = vld [vmem:[#allocation2 + $0xb0] sm:$0xf]
      %v967 = vld [vmem:[#allocation2 + $0xb4] sm:$0xff]
      %v968 = vld [vmem:[#allocation2 + $0xbc] sm:$0xff]
      %v969 = vld [vmem:[#allocation2 + $0xc4] sm:$0xff]
      %v970 = vld [vmem:[#allocation2 + $0xcc] sm:$0xff]
      %v971 = vld [vmem:[#allocation2 + $0xd4] sm:$0xf]
      %v972 = vld [vmem:[#allocation2 + $0xd8] sm:$0xff]
      %v973 = vld [vmem:[#allocation2 + $0xe0] sm:$0xff]
      %v974 = vld [vmem:[#allocation2 + $0xe8] sm:$0xff]
      %v975 = vld [vmem:[#allocation2 + $0xf0] sm:$0xff]
      %v976 = vld [vmem:[#allocation2 + $0xf8] sm:$0xf]
      %v977 = vld [vmem:[#allocation2 + $0xfc] sm:$0xff]
      %v978 = vld [vmem:[#allocation2 + $0x104] sm:$0xff]
      %v979 = vld [vmem:[#allocation2 + $0x10c] sm:$0xff]
      %v980 = vld [vmem:[#allocation2 + $0x114] sm:$0xff]
      %v981 = vld [vmem:[#allocation2 + $0x11c] sm:$0xf]
      %v982 = vld [vmem:[#allocation2 + $0x120] sm:$0xff]
      %v983 = vld [vmem:[#allocation2 + $0x128] sm:$0xff]
      %v984 = vld [vmem:[#allocation2 + $0x130] sm:$0xff]
      %v985 = vld [vmem:[#allocation2 + $0x138] sm:$0xff]
      %v986 = vld [vmem:[#allocation2 + $0x140] sm:$0xf]
      %v987 = vld [vmem:[#allocation2 + $0x144] sm:$0xff]
      %v988 = vld [vmem:[#allocation2 + $0x14c] sm:$0xff]
      %v989 = vld [vmem:[#allocation2 + $0x154] sm:$0xff]
      %v990 = vld [vmem:[#allocation2 + $0x15c] sm:$0xff]
      %v991 = vld [vmem:[#allocation2 + $0x164] sm:$0xf]
      %v992 = vld [vmem:[#allocation2 + $0x168] sm:$0xff]
      %v993 = vld [vmem:[#allocation2 + $0x170] sm:$0xff]
      %v994 = vld [vmem:[#allocation2 + $0x178] sm:$0xff]
      %v995 = vld [vmem:[#allocation2 + $0x180] sm:$0xff]
      %v996 = vld [vmem:[#allocation2 + $0x188] sm:$0xf]
      %v997 = vld [vmem:[#allocation2 + $0x18c] sm:$0xff]
      %v998 = vld [vmem:[#allocation2 + $0x194] sm:$0xff]
      %v999 = vld [vmem:[#allocation2 + $0x19c] sm:$0xff]
      %v1000 = vld [vmem:[#allocation2 + $0x1a4] sm:$0xff]
      %v1001 = vld [vmem:[#allocation2 + $0x1ac] sm:$0xf]
      %v1002 = vld [vmem:[#allocation2 + $0x1b0] sm:$0xff]
      %v1003 = vld [vmem:[#allocation2 + $0x1b8] sm:$0xff]
      %v1004 = vld [vmem:[#allocation2 + $0x1c0] sm:$0xff]
      %v1005 = vld [vmem:[#allocation2 + $0x1c8] sm:$0xff]
      %v1006 = vld [vmem:[#allocation2 + $0x1d0] sm:$0xf]
      %v1007 = vld [vmem:[#allocation2 + $0x1d4] sm:$0xff]
      %v1008 = vld [vmem:[#allocation2 + $0x1dc] sm:$0xff]
      %v1009 = vld [vmem:[#allocation2 + $0x1e4] sm:$0xff]
      %v1010 = vld [vmem:[#allocation2 + $0x1ec] sm:$0xff]
      %v1011 = vld [vmem:[#allocation2 + $0x1f4] sm:$0xf]
      %v1012 = vld [vmem:[#allocation2 + $0x1f8] sm:$0xff]
      %v1013 = vld [vmem:[#allocation2 + $0x200] sm:$0xff]
      %v1014 = vld [vmem:[#allocation2 + $0x208] sm:$0xff]
      %v1015 = vld [vmem:[#allocation2 + $0x210] sm:$0xff]
      %v1016 = vld [vmem:[#allocation2 + $0x218] sm:$0xf]
      %v1017 = vld [vmem:[#allocation2 + $0x21c] sm:$0xff]
      %v1018 = vld [vmem:[#allocation2 + $0x224] sm:$0xff]
      %v1019 = vld [vmem:[#allocation2 + $0x22c] sm:$0xff]
      %v1020 = vld [vmem:[#allocation2 + $0x234] sm:$0xff]
      %v1021 = vld [vmem:[#allocation2 + $0x23c] sm:$0xf]
      %v1022 = vld [vmem:[%s2] sm:$0xf]
      %v1023 = vld [vmem:[%s2 + $0x4] sm:$0xf]
      %v1024 = vld [vmem:[%s2 + $0x8] sm:$0xf]
      %v1025 = vld [vmem:[%s2 + $0xc] sm:$0xf]
      %v1026 = vld [vmem:[%s2 + $0x10] sm:$0xf]
      %v1027 = vld [vmem:[%s2 + $0x14] sm:$0xf]
      %v1028 = vld [vmem:[%s2 + $0x18] sm:$0xf]
      %v1029 = vld [vmem:[%s2 + $0x1c] sm:$0xf]
      %v1030 = vld [vmem:[%s2 + $0x20] sm:$0xf]
      %v1031 = vld [vmem:[%s2 + $0x24] sm:$0xf]
      %v1032 = vld [vmem:[%s2 + $0x28] sm:$0xf]
      %v1033 = vld [vmem:[%s2 + $0x2c] sm:$0xf]
      %v1034 = vld [vmem:[%s2 + $0x30] sm:$0xf]
      %v1035 = vld [vmem:[%s2 + $0x34] sm:$0xf]
      %v1036 = vld [vmem:[%s2 + $0x38] sm:$0xf]
      %v1037 = vld [vmem:[%s2 + $0x3c] sm:$0xf]
      %v1038 = vld [vmem:[%s2 + $0x40] sm:$0xf]
      %v1039 = vld [vmem:[%s2 + $0x44] sm:$0xf]
      %v1040 = vld [vmem:[%s2 + $0x48] sm:$0xf]
      %v1041 = vld [vmem:[%s2 + $0x4c] sm:$0xf]
      %v1042 = vld [vmem:[%s2 + $0x50] sm:$0xf]
      %v1043 = vld [vmem:[%s2 + $0x54] sm:$0xf]
      %v1044 = vld [vmem:[%s2 + $0x58] sm:$0xf]
      %v1045 = vld [vmem:[%s2 + $0x5c] sm:$0xf]
      %v1046 = vld [vmem:[%s2 + $0x60] sm:$0xf]
      %v1047 = vld [vmem:[%s2 + $0x64] sm:$0xf]
      %v1048 = vld [vmem:[%s2 + $0x68] sm:$0xf]
      %v1049 = vld [vmem:[%s2 + $0x6c] sm:$0xf]
      %v1050 = vld [vmem:[%s2 + $0x70] sm:$0xf]
      %v1051 = vld [vmem:[%s2 + $0x74] sm:$0xf]
      %v1052 = vld [vmem:[%s2 + $0x78] sm:$0xf]
      %v1053 = vld [vmem:[%s2 + $0x7c] sm:$0xf]
      %v1054 = vld [vmem:[%s2 + $0x80] sm:$0xf]
      %v1055 = vld [vmem:[%s2 + $0x84] sm:$0xf]
      %v1056 = vld [vmem:[%s2 + $0x88] sm:$0xf]
      %v1057 = vld [vmem:[%s2 + $0x8c] sm:$0xf]
      %v1058 = vld [vmem:[%s2 + $0x90] sm:$0xf]
      %v1059 = vld [vmem:[%s2 + $0x94] sm:$0xf]
      %v1060 = vld [vmem:[%s2 + $0x98] sm:$0xf]
      %v1061 = vld [vmem:[%s2 + $0x9c] sm:$0xf]
      %v1062 = vld [vmem:[%s2 + $0xa0] sm:$0xf]
      %v1063 = vld [vmem:[%s2 + $0xa4] sm:$0xf]
      %v1064 = vld [vmem:[%s2 + $0xa8] sm:$0xf]
      %v1065 = vld [vmem:[%s2 + $0xac] sm:$0xf]
      %v1066 = vld [vmem:[%s2 + $0xb0] sm:$0xf]
      %v1067 = vld [vmem:[%s2 + $0xb4] sm:$0xf]
      %v1068 = vld [vmem:[%s2 + $0xb8] sm:$0xf]
      %v1069 = vld [vmem:[%s2 + $0xbc] sm:$0xf]
      %v1070 = vld [vmem:[%s2 + $0xc0] sm:$0xf]
      %v1071 = vld [vmem:[%s2 + $0xc4] sm:$0xf]
      %v1072 = vld [vmem:[%s2 + $0xc8] sm:$0xf]
      %v1073 = vld [vmem:[%s2 + $0xcc] sm:$0xf]
      %v1074 = vld [vmem:[%s2 + $0xd0] sm:$0xf]
      %v1075 = vld [vmem:[%s2 + $0xd4] sm:$0xf]
      %v1076 = vld [vmem:[%s2 + $0xd8] sm:$0xf]
      %v1077 = vld [vmem:[%s2 + $0xdc] sm:$0xf]
      %v1078 = vld [vmem:[%s2 + $0xe0] sm:$0xf]
      %v1079 = vld [vmem:[%s2 + $0xe4] sm:$0xf]
      %v1080 = vld [vmem:[%s2 + $0xe8] sm:$0xf]
      %v1081 = vld [vmem:[%s2 + $0xec] sm:$0xf]
      %v1082 = vld [vmem:[%s2 + $0xf0] sm:$0xf]
      %v1083 = vld [vmem:[%s2 + $0xf4] sm:$0xf]
      %v1084 = vld [vmem:[%s2 + $0xf8] sm:$0xf]
      %v1085 = vld [vmem:[%s2 + $0xfc] sm:$0xf]
      %v1086 = vld [vmem:[%s2 + $0x100] sm:$0xf]
      %v1087 = vld [vmem:[%s2 + $0x104] sm:$0xf]
      %v1088 = vld [vmem:[%s2 + $0x108] sm:$0xf]
      %v1089 = vld [vmem:[%s2 + $0x10c] sm:$0xf]
      %v1090 = vld [vmem:[%s2 + $0x110] sm:$0xf]
      %v1091 = vld [vmem:[%s2 + $0x114] sm:$0xf]
      %v1092 = vld [vmem:[%s2 + $0x118] sm:$0xf]
      %v1093 = vld [vmem:[%s2 + $0x11c] sm:$0xf]
      %v1094 = vld [vmem:[%s2 + $0x120] sm:$0xf]
      %v1095 = vld [vmem:[%s2 + $0x124] sm:$0xf]
      %v1096 = vld [vmem:[%s2 + $0x128] sm:$0xf]
      %v1097 = vld [vmem:[%s2 + $0x12c] sm:$0xf]
      %v1098 = vld [vmem:[%s2 + $0x130] sm:$0xf]
      %v1099 = vld [vmem:[%s2 + $0x134] sm:$0xf]
      %v1100 = vld [vmem:[%s2 + $0x138] sm:$0xf]
      %v1101 = vld [vmem:[%s2 + $0x13c] sm:$0xf]
      %v1102 = vld [vmem:[%s2 + $0x140] sm:$0xf]
      %v1103 = vld [vmem:[%s2 + $0x144] sm:$0xf]
      %v1104 = vld [vmem:[%s2 + $0x148] sm:$0xf]
      %v1105 = vld [vmem:[%s2 + $0x14c] sm:$0xf]
      %v1106 = vld [vmem:[%s2 + $0x150] sm:$0xf]
      %v1107 = vld [vmem:[%s2 + $0x154] sm:$0xf]
      %v1108 = vld [vmem:[%s2 + $0x158] sm:$0xf]
      %v1109 = vld [vmem:[%s2 + $0x15c] sm:$0xf]
      %v1110 = vld [vmem:[%s2 + $0x160] sm:$0xf]
      %v1111 = vld [vmem:[%s2 + $0x164] sm:$0xf]
      %v1112 = vld [vmem:[%s2 + $0x168] sm:$0xf]
      %v1113 = vld [vmem:[%s2 + $0x16c] sm:$0xf]
      %v1114 = vld [vmem:[%s2 + $0x170] sm:$0xf]
      %v1115 = vld [vmem:[%s2 + $0x174] sm:$0xf]
      %v1116 = vld [vmem:[%s2 + $0x178] sm:$0xf]
      %v1117 = vld [vmem:[%s2 + $0x17c] sm:$0xf]
      %v1118 = vld [vmem:[%s2 + $0x180] sm:$0xf]
      %v1119 = vld [vmem:[%s2 + $0x184] sm:$0xf]
      %v1120 = vld [vmem:[%s2 + $0x188] sm:$0xf]
      %v1121 = vld [vmem:[%s2 + $0x18c] sm:$0xf]
      %v1122 = vld [vmem:[%s2 + $0x190] sm:$0xf]
      %v1123 = vld [vmem:[%s2 + $0x194] sm:$0xf]
      %v1124 = vld [vmem:[%s2 + $0x198] sm:$0xf]
      %v1125 = vld [vmem:[%s2 + $0x19c] sm:$0xf]
      %v1126 = vld [vmem:[%s2 + $0x1a0] sm:$0xf]
      %v1127 = vld [vmem:[%s2 + $0x1a4] sm:$0xf]
      %v1128 = vld [vmem:[%s2 + $0x1a8] sm:$0xf]
      %v1129 = vld [vmem:[%s2 + $0x1ac] sm:$0xf]
      %v1130 = vld [vmem:[%s2 + $0x1b0] sm:$0xf]
      %v1131 = vld [vmem:[%s2 + $0x1b4] sm:$0xf]
      %v1132 = vld [vmem:[%s2 + $0x1b8] sm:$0xf]
      %v1133 = vld [vmem:[%s2 + $0x1bc] sm:$0xf]
      %v1134 = vld [vmem:[%s2 + $0x1c0] sm:$0xf]
      %v1135 = vld [vmem:[%s2 + $0x1c4] sm:$0xf]
      %v1136 = vld [vmem:[%s2 + $0x1c8] sm:$0xf]
      %v1137 = vld [vmem:[%s2 + $0x1cc] sm:$0xf]
      %v1138 = vld [vmem:[%s2 + $0x1d0] sm:$0xf]
      %v1139 = vld [vmem:[%s2 + $0x1d4] sm:$0xf]
      %v1140 = vld [vmem:[%s2 + $0x1d8] sm:$0xf]
      %v1141 = vld [vmem:[%s2 + $0x1dc] sm:$0xf]
      %v1142 = vld [vmem:[%s2 + $0x1e0] sm:$0xf]
      %v1143 = vld [vmem:[%s2 + $0x1e4] sm:$0xf]
      %v1144 = vld [vmem:[%s2 + $0x1e8] sm:$0xf]
      %v1145 = vld [vmem:[%s2 + $0x1ec] sm:$0xf]
      %v1146 = vld [vmem:[%s2 + $0x1f0] sm:$0xf]
      %v1147 = vld [vmem:[%s2 + $0x1f4] sm:$0xf]
      %v1148 = vld [vmem:[%s2 + $0x1f8] sm:$0xf]
      %v1149 = vld [vmem:[%s2 + $0x1fc] sm:$0xf]
      %v1150 = vld [vmem:[%s2 + $0x200] sm:$0xf]
      %v1151 = vld [vmem:[%s2 + $0x204] sm:$0xf]
      %v1152 = vld [vmem:[%s2 + $0x208] sm:$0xf]
      %v1153 = vld [vmem:[%s2 + $0x20c] sm:$0xf]
      %v1154 = vld [vmem:[%s2 + $0x210] sm:$0xf]
      %v1155 = vld [vmem:[%s2 + $0x214] sm:$0xf]
      %v1156 = vld [vmem:[%s2 + $0x218] sm:$0xf]
      %v1157 = vld [vmem:[%s2 + $0x21c] sm:$0xf]
      %v1158 = vld [vmem:[%s2 + $0x220] sm:$0xf]
      %v1159 = vld [vmem:[%s2 + $0x224] sm:$0xf]
      %v1160 = vld [vmem:[%s2 + $0x228] sm:$0xf]
      %v1161 = vld [vmem:[%s2 + $0x22c] sm:$0xf]
      %v1162 = vld [vmem:[%s2 + $0x230] sm:$0xf]
      %v1163 = vld [vmem:[%s2 + $0x234] sm:$0xf]
      %v1164 = vld [vmem:[%s2 + $0x238] sm:$0xf]
      %v1165 = vld [vmem:[%s2 + $0x23c] sm:$0xf]
      %v1246 = vunpack.c.l.b16 %v942
      %v1247 = vunpack.c.h.b16 %v942
      %v1248 = vunpack.c.l.b16 %v943
      %v1249 = vunpack.c.h.b16 %v943
      %v1250 = vunpack.c.l.b16 %v944
      %v1251 = vunpack.c.h.b16 %v944
      %v1252 = vunpack.c.l.b16 %v945
      %v1253 = vunpack.c.h.b16 %v945
      %v1254 = vunpack.c.l.b16 %v946
      %v1255 = vunpack.c.l.b16 %v947
      %v1256 = vunpack.c.h.b16 %v947
      %v1257 = vunpack.c.l.b16 %v948
      %v1258 = vunpack.c.h.b16 %v948
      %v1259 = vunpack.c.l.b16 %v949
      %v1260 = vunpack.c.h.b16 %v949
      %v1261 = vunpack.c.l.b16 %v950
      %v1262 = vunpack.c.h.b16 %v950
      %v1263 = vunpack.c.l.b16 %v951
      %v1264 = vunpack.c.l.b16 %v952
      %v1265 = vunpack.c.h.b16 %v952
      %v1266 = vunpack.c.l.b16 %v953
      %v1267 = vunpack.c.h.b16 %v953
      %v1268 = vunpack.c.l.b16 %v954
      %v1269 = vunpack.c.h.b16 %v954
      %v1270 = vunpack.c.l.b16 %v955
      %v1271 = vunpack.c.h.b16 %v955
      %v1272 = vunpack.c.l.b16 %v956
      %v1273 = vunpack.c.l.b16 %v957
      %v1274 = vunpack.c.h.b16 %v957
      %v1275 = vunpack.c.l.b16 %v958
      %v1276 = vunpack.c.h.b16 %v958
      %v1277 = vunpack.c.l.b16 %v959
      %v1278 = vunpack.c.h.b16 %v959
      %v1279 = vunpack.c.l.b16 %v960
      %v1280 = vunpack.c.h.b16 %v960
      %v1281 = vunpack.c.l.b16 %v961
      %v1282 = vunpack.c.l.b16 %v962
      %v1283 = vunpack.c.h.b16 %v962
      %v1284 = vunpack.c.l.b16 %v963
      %v1285 = vunpack.c.h.b16 %v963
      %v1286 = vunpack.c.l.b16 %v964
      %v1287 = vunpack.c.h.b16 %v964
      %v1288 = vunpack.c.l.b16 %v965
      %v1289 = vunpack.c.h.b16 %v965
      %v1290 = vunpack.c.l.b16 %v966
      %v1291 = vunpack.c.l.b16 %v967
      %v1292 = vunpack.c.h.b16 %v967
      %v1293 = vunpack.c.l.b16 %v968
      %v1294 = vunpack.c.h.b16 %v968
      %v1295 = vunpack.c.l.b16 %v969
      %v1296 = vunpack.c.h.b16 %v969
      %v1297 = vunpack.c.l.b16 %v970
      %v1298 = vunpack.c.h.b16 %v970
      %v1299 = vunpack.c.l.b16 %v971
      %v1300 = vunpack.c.l.b16 %v972
      %v1301 = vunpack.c.h.b16 %v972
      %v1302 = vunpack.c.l.b16 %v973
      %v1303 = vunpack.c.h.b16 %v973
      %v1304 = vunpack.c.l.b16 %v974
      %v1305 = vunpack.c.h.b16 %v974
      %v1306 = vunpack.c.l.b16 %v975
      %v1307 = vunpack.c.h.b16 %v975
      %v1308 = vunpack.c.l.b16 %v976
      %v1309 = vunpack.c.l.b16 %v977
      %v1310 = vunpack.c.h.b16 %v977
      %v1311 = vunpack.c.l.b16 %v978
      %v1312 = vunpack.c.h.b16 %v978
      %v1313 = vunpack.c.l.b16 %v979
      %v1314 = vunpack.c.h.b16 %v979
      %v1315 = vunpack.c.l.b16 %v980
      %v1316 = vunpack.c.h.b16 %v980
      %v1317 = vunpack.c.l.b16 %v981
      %v1318 = vunpack.c.l.b16 %v982
      %v1319 = vunpack.c.h.b16 %v982
      %v1320 = vunpack.c.l.b16 %v983
      %v1321 = vunpack.c.h.b16 %v983
      %v1322 = vunpack.c.l.b16 %v984
      %v1323 = vunpack.c.h.b16 %v984
      %v1324 = vunpack.c.l.b16 %v985
      %v1325 = vunpack.c.h.b16 %v985
      %v1326 = vunpack.c.l.b16 %v986
      %v1327 = vunpack.c.l.b16 %v987
      %v1328 = vunpack.c.h.b16 %v987
      %v1329 = vunpack.c.l.b16 %v988
      %v1330 = vunpack.c.h.b16 %v988
      %v1331 = vunpack.c.l.b16 %v989
      %v1332 = vunpack.c.h.b16 %v989
      %v1333 = vunpack.c.l.b16 %v990
      %v1334 = vunpack.c.h.b16 %v990
      %v1335 = vunpack.c.l.b16 %v991
      %v1336 = vunpack.c.l.b16 %v992
      %v1337 = vunpack.c.h.b16 %v992
      %v1338 = vunpack.c.l.b16 %v993
      %v1339 = vunpack.c.h.b16 %v993
      %v1340 = vunpack.c.l.b16 %v994
      %v1341 = vunpack.c.h.b16 %v994
      %v1342 = vunpack.c.l.b16 %v995
      %v1343 = vunpack.c.h.b16 %v995
      %v1344 = vunpack.c.l.b16 %v996
      %v1345 = vunpack.c.l.b16 %v997
      %v1346 = vunpack.c.h.b16 %v997
      %v1347 = vunpack.c.l.b16 %v998
      %v1348 = vunpack.c.h.b16 %v998
      %v1349 = vunpack.c.l.b16 %v999
      %v1350 = vunpack.c.h.b16 %v999
      %v1351 = vunpack.c.l.b16 %v1000
      %v1352 = vunpack.c.h.b16 %v1000
      %v1353 = vunpack.c.l.b16 %v1001
      %v1354 = vunpack.c.l.b16 %v1002
      %v1355 = vunpack.c.h.b16 %v1002
      %v1356 = vunpack.c.l.b16 %v1003
      %v1357 = vunpack.c.h.b16 %v1003
      %v1358 = vunpack.c.l.b16 %v1004
      %v1359 = vunpack.c.h.b16 %v1004
      %v1360 = vunpack.c.l.b16 %v1005
      %v1361 = vunpack.c.h.b16 %v1005
      %v1362 = vunpack.c.l.b16 %v1006
      %v1363 = vunpack.c.l.b16 %v1007
      %v1364 = vunpack.c.h.b16 %v1007
      %v1365 = vunpack.c.l.b16 %v1008
      %v1366 = vunpack.c.h.b16 %v1008
      %v1367 = vunpack.c.l.b16 %v1009
      %v1368 = vunpack.c.h.b16 %v1009
      %v1369 = vunpack.c.l.b16 %v1010
      %v1370 = vunpack.c.h.b16 %v1010
      %v1371 = vunpack.c.l.b16 %v1011
      %v1372 = vunpack.c.l.b16 %v1012
      %v1373 = vunpack.c.h.b16 %v1012
      %v1374 = vunpack.c.l.b16 %v1013
      %v1375 = vunpack.c.h.b16 %v1013
      %v1376 = vunpack.c.l.b16 %v1014
      %v1377 = vunpack.c.h.b16 %v1014
      %v1378 = vunpack.c.l.b16 %v1015
      %v1379 = vunpack.c.h.b16 %v1015
      %v1380 = vunpack.c.l.b16 %v1016
      %v1381 = vunpack.c.l.b16 %v1017
      %v1382 = vunpack.c.h.b16 %v1017
      %v1383 = vunpack.c.l.b16 %v1018
      %v1384 = vunpack.c.h.b16 %v1018
      %v1385 = vunpack.c.l.b16 %v1019
      %v1386 = vunpack.c.h.b16 %v1019
      %v1387 = vunpack.c.l.b16 %v1020
      %v1388 = vunpack.c.h.b16 %v1020
      %v1389 = vunpack.c.l.b16 %v1021
      %v1390 = vpack.c.b16 %v1255, %v1246
      %v1391 = vpack.c.b16 %v1256, %v1247
      %v1392 = vpack.c.b16 %v1257, %v1248
      %v1393 = vpack.c.b16 %v1258, %v1249
      %v1394 = vpack.c.b16 %v1259, %v1250
      %v1395 = vpack.c.b16 %v1260, %v1251
      %v1396 = vpack.c.b16 %v1261, %v1252
      %v1397 = vpack.c.b16 %v1262, %v1253
      %v1398 = vpack.c.b16 %v1263, %v1254
      %v1399 = vpack.c.b16 %v1273, %v1264
      %v1400 = vpack.c.b16 %v1274, %v1265
      %v1401 = vpack.c.b16 %v1275, %v1266
      %v1402 = vpack.c.b16 %v1276, %v1267
      %v1403 = vpack.c.b16 %v1277, %v1268
      %v1404 = vpack.c.b16 %v1278, %v1269
      %v1405 = vpack.c.b16 %v1279, %v1270
      %v1406 = vpack.c.b16 %v1280, %v1271
      %v1407 = vpack.c.b16 %v1281, %v1272
      %v1408 = vpack.c.b16 %v1291, %v1282
      %v1409 = vpack.c.b16 %v1292, %v1283
      %v1410 = vpack.c.b16 %v1293, %v1284
      %v1411 = vpack.c.b16 %v1294, %v1285
      %v1412 = vpack.c.b16 %v1295, %v1286
      %v1413 = vpack.c.b16 %v1296, %v1287
      %v1414 = vpack.c.b16 %v1297, %v1288
      %v1415 = vpack.c.b16 %v1298, %v1289
      %v1416 = vpack.c.b16 %v1299, %v1290
      %v1417 = vpack.c.b16 %v1309, %v1300
      %v1418 = vpack.c.b16 %v1310, %v1301
      %v1419 = vpack.c.b16 %v1311, %v1302
      %v1420 = vpack.c.b16 %v1312, %v1303
      %v1421 = vpack.c.b16 %v1313, %v1304
      %v1422 = vpack.c.b16 %v1314, %v1305
      %v1423 = vpack.c.b16 %v1315, %v1306
      %v1424 = vpack.c.b16 %v1316, %v1307
      %v1425 = vpack.c.b16 %v1317, %v1308
      %v1426 = vpack.c.b16 %v1327, %v1318
      %v1427 = vpack.c.b16 %v1328, %v1319
      %v1428 = vpack.c.b16 %v1329, %v1320
      %v1429 = vpack.c.b16 %v1330, %v1321
      %v1430 = vpack.c.b16 %v1331, %v1322
      %v1431 = vpack.c.b16 %v1332, %v1323
      %v1432 = vpack.c.b16 %v1333, %v1324
      %v1433 = vpack.c.b16 %v1334, %v1325
      %v1434 = vpack.c.b16 %v1335, %v1326
      %v1435 = vpack.c.b16 %v1345, %v1336
      %v1436 = vpack.c.b16 %v1346, %v1337
      %v1437 = vpack.c.b16 %v1347, %v1338
      %v1438 = vpack.c.b16 %v1348, %v1339
      %v1439 = vpack.c.b16 %v1349, %v1340
      %v1440 = vpack.c.b16 %v1350, %v1341
      %v1441 = vpack.c.b16 %v1351, %v1342
      %v1442 = vpack.c.b16 %v1352, %v1343
      %v1443 = vpack.c.b16 %v1353, %v1344
      %v1444 = vpack.c.b16 %v1363, %v1354
      %v1445 = vpack.c.b16 %v1364, %v1355
      %v1446 = vpack.c.b16 %v1365, %v1356
      %v1447 = vpack.c.b16 %v1366, %v1357
      %v1448 = vpack.c.b16 %v1367, %v1358
      %v1449 = vpack.c.b16 %v1368, %v1359
      %v1450 = vpack.c.b16 %v1369, %v1360
      %v1451 = vpack.c.b16 %v1370, %v1361
      %v1452 = vpack.c.b16 %v1371, %v1362
      %v1453 = vpack.c.b16 %v1381, %v1372
      %v1454 = vpack.c.b16 %v1382, %v1373
      %v1455 = vpack.c.b16 %v1383, %v1374
      %v1456 = vpack.c.b16 %v1384, %v1375
      %v1457 = vpack.c.b16 %v1385, %v1376
      %v1458 = vpack.c.b16 %v1386, %v1377
      %v1459 = vpack.c.b16 %v1387, %v1378
      %v1460 = vpack.c.b16 %v1388, %v1379
      %v1461 = vpack.c.b16 %v1389, %v1380
      %v1678 = vunpack.c.l.b16 %v1022
      %v1679 = vunpack.c.l.b16 %v1023
      %v1680 = vunpack.c.l.b16 %v1024
      %v1681 = vunpack.c.l.b16 %v1025
      %v1682 = vunpack.c.l.b16 %v1026
      %v1683 = vunpack.c.l.b16 %v1027
      %v1684 = vunpack.c.l.b16 %v1028
      %v1685 = vunpack.c.l.b16 %v1029
      %v1686 = vunpack.c.l.b16 %v1030
      %v1687 = vunpack.c.l.b16 %v1031
      %v1688 = vunpack.c.l.b16 %v1032
      %v1689 = vunpack.c.l.b16 %v1033
      %v1690 = vunpack.c.l.b16 %v1034
      %v1691 = vunpack.c.l.b16 %v1035
      %v1692 = vunpack.c.l.b16 %v1036
      %v1693 = vunpack.c.l.b16 %v1037
      %v1694 = vunpack.c.l.b16 %v1038
      %v1695 = vunpack.c.l.b16 %v1039
      %v1696 = vunpack.c.l.b16 %v1040
      %v1697 = vunpack.c.l.b16 %v1041
      %v1698 = vunpack.c.l.b16 %v1042
      %v1699 = vunpack.c.l.b16 %v1043
      %v1700 = vunpack.c.l.b16 %v1044
      %v1701 = vunpack.c.l.b16 %v1045
      %v1702 = vunpack.c.l.b16 %v1046
      %v1703 = vunpack.c.l.b16 %v1047
      %v1704 = vunpack.c.l.b16 %v1048
      %v1705 = vunpack.c.l.b16 %v1049
      %v1706 = vunpack.c.l.b16 %v1050
      %v1707 = vunpack.c.l.b16 %v1051
      %v1708 = vunpack.c.l.b16 %v1052
      %v1709 = vunpack.c.l.b16 %v1053
      %v1710 = vunpack.c.l.b16 %v1054
      %v1711 = vunpack.c.l.b16 %v1055
      %v1712 = vunpack.c.l.b16 %v1056
      %v1713 = vunpack.c.l.b16 %v1057
      %v1714 = vunpack.c.l.b16 %v1058
      %v1715 = vunpack.c.l.b16 %v1059
      %v1716 = vunpack.c.l.b16 %v1060
      %v1717 = vunpack.c.l.b16 %v1061
      %v1718 = vunpack.c.l.b16 %v1062
      %v1719 = vunpack.c.l.b16 %v1063
      %v1720 = vunpack.c.l.b16 %v1064
      %v1721 = vunpack.c.l.b16 %v1065
      %v1722 = vunpack.c.l.b16 %v1066
      %v1723 = vunpack.c.l.b16 %v1067
      %v1724 = vunpack.c.l.b16 %v1068
      %v1725 = vunpack.c.l.b16 %v1069
      %v1726 = vunpack.c.l.b16 %v1070
      %v1727 = vunpack.c.l.b16 %v1071
      %v1728 = vunpack.c.l.b16 %v1072
      %v1729 = vunpack.c.l.b16 %v1073
      %v1730 = vunpack.c.l.b16 %v1074
      %v1731 = vunpack.c.l.b16 %v1075
      %v1732 = vunpack.c.l.b16 %v1076
      %v1733 = vunpack.c.l.b16 %v1077
      %v1734 = vunpack.c.l.b16 %v1078
      %v1735 = vunpack.c.l.b16 %v1079
      %v1736 = vunpack.c.l.b16 %v1080
      %v1737 = vunpack.c.l.b16 %v1081
      %v1738 = vunpack.c.l.b16 %v1082
      %v1739 = vunpack.c.l.b16 %v1083
      %v1740 = vunpack.c.l.b16 %v1084
      %v1741 = vunpack.c.l.b16 %v1085
      %v1742 = vunpack.c.l.b16 %v1086
      %v1743 = vunpack.c.l.b16 %v1087
      %v1744 = vunpack.c.l.b16 %v1088
      %v1745 = vunpack.c.l.b16 %v1089
      %v1746 = vunpack.c.l.b16 %v1090
      %v1747 = vunpack.c.l.b16 %v1091
      %v1748 = vunpack.c.l.b16 %v1092
      %v1749 = vunpack.c.l.b16 %v1093
      %v1750 = vunpack.c.l.b16 %v1094
      %v1751 = vunpack.c.l.b16 %v1095
      %v1752 = vunpack.c.l.b16 %v1096
      %v1753 = vunpack.c.l.b16 %v1097
      %v1754 = vunpack.c.l.b16 %v1098
      %v1755 = vunpack.c.l.b16 %v1099
      %v1756 = vunpack.c.l.b16 %v1100
      %v1757 = vunpack.c.l.b16 %v1101
      %v1758 = vunpack.c.l.b16 %v1102
      %v1759 = vunpack.c.l.b16 %v1103
      %v1760 = vunpack.c.l.b16 %v1104
      %v1761 = vunpack.c.l.b16 %v1105
      %v1762 = vunpack.c.l.b16 %v1106
      %v1763 = vunpack.c.l.b16 %v1107
      %v1764 = vunpack.c.l.b16 %v1108
      %v1765 = vunpack.c.l.b16 %v1109
      %v1766 = vunpack.c.l.b16 %v1110
      %v1767 = vunpack.c.l.b16 %v1111
      %v1768 = vunpack.c.l.b16 %v1112
      %v1769 = vunpack.c.l.b16 %v1113
      %v1770 = vunpack.c.l.b16 %v1114
      %v1771 = vunpack.c.l.b16 %v1115
      %v1772 = vunpack.c.l.b16 %v1116
      %v1773 = vunpack.c.l.b16 %v1117
      %v1774 = vunpack.c.l.b16 %v1118
      %v1775 = vunpack.c.l.b16 %v1119
      %v1776 = vunpack.c.l.b16 %v1120
      %v1777 = vunpack.c.l.b16 %v1121
      %v1778 = vunpack.c.l.b16 %v1122
      %v1779 = vunpack.c.l.b16 %v1123
      %v1780 = vunpack.c.l.b16 %v1124
      %v1781 = vunpack.c.l.b16 %v1125
      %v1782 = vunpack.c.l.b16 %v1126
      %v1783 = vunpack.c.l.b16 %v1127
      %v1784 = vunpack.c.l.b16 %v1128
      %v1785 = vunpack.c.l.b16 %v1129
      %v1786 = vunpack.c.l.b16 %v1130
      %v1787 = vunpack.c.l.b16 %v1131
      %v1788 = vunpack.c.l.b16 %v1132
      %v1789 = vunpack.c.l.b16 %v1133
      %v1790 = vunpack.c.l.b16 %v1134
      %v1791 = vunpack.c.l.b16 %v1135
      %v1792 = vunpack.c.l.b16 %v1136
      %v1793 = vunpack.c.l.b16 %v1137
      %v1794 = vunpack.c.l.b16 %v1138
      %v1795 = vunpack.c.l.b16 %v1139
      %v1796 = vunpack.c.l.b16 %v1140
      %v1797 = vunpack.c.l.b16 %v1141
      %v1798 = vunpack.c.l.b16 %v1142
      %v1799 = vunpack.c.l.b16 %v1143
      %v1800 = vunpack.c.l.b16 %v1144
      %v1801 = vunpack.c.l.b16 %v1145
      %v1802 = vunpack.c.l.b16 %v1146
      %v1803 = vunpack.c.l.b16 %v1147
      %v1804 = vunpack.c.l.b16 %v1148
      %v1805 = vunpack.c.l.b16 %v1149
      %v1806 = vunpack.c.l.b16 %v1150
      %v1807 = vunpack.c.l.b16 %v1151
      %v1808 = vunpack.c.l.b16 %v1152
      %v1809 = vunpack.c.l.b16 %v1153
      %v1810 = vunpack.c.l.b16 %v1154
      %v1811 = vunpack.c.l.b16 %v1155
      %v1812 = vunpack.c.l.b16 %v1156
      %v1813 = vunpack.c.l.b16 %v1157
      %v1814 = vunpack.c.l.b16 %v1158
      %v1815 = vunpack.c.l.b16 %v1159
      %v1816 = vunpack.c.l.b16 %v1160
      %v1817 = vunpack.c.l.b16 %v1161
      %v1818 = vunpack.c.l.b16 %v1162
      %v1819 = vunpack.c.l.b16 %v1163
      %v1820 = vunpack.c.l.b16 %v1164
      %v1821 = vunpack.c.l.b16 %v1165
      %v1822 = vpack.c.b16 %v1679, %v1678
      %v1823 = vpack.c.b16 %v1681, %v1680
      %v1824 = vpack.c.b16 %v1683, %v1682
      %v1825 = vpack.c.b16 %v1685, %v1684
      %v1826 = vpack.c.b16 %v1687, %v1686
      %v1827 = vpack.c.b16 %v1689, %v1688
      %v1828 = vpack.c.b16 %v1691, %v1690
      %v1829 = vpack.c.b16 %v1693, %v1692
      %v1830 = vpack.c.b16 %v1695, %v1694
      %v1831 = vpack.c.b16 %v1697, %v1696
      %v1832 = vpack.c.b16 %v1699, %v1698
      %v1833 = vpack.c.b16 %v1701, %v1700
      %v1834 = vpack.c.b16 %v1703, %v1702
      %v1835 = vpack.c.b16 %v1705, %v1704
      %v1836 = vpack.c.b16 %v1707, %v1706
      %v1837 = vpack.c.b16 %v1709, %v1708
      %v1838 = vpack.c.b16 %v1711, %v1710
      %v1839 = vpack.c.b16 %v1713, %v1712
      %v1840 = vpack.c.b16 %v1715, %v1714
      %v1841 = vpack.c.b16 %v1717, %v1716
      %v1842 = vpack.c.b16 %v1719, %v1718
      %v1843 = vpack.c.b16 %v1721, %v1720
      %v1844 = vpack.c.b16 %v1723, %v1722
      %v1845 = vpack.c.b16 %v1725, %v1724
      %v1846 = vpack.c.b16 %v1727, %v1726
      %v1847 = vpack.c.b16 %v1729, %v1728
      %v1848 = vpack.c.b16 %v1731, %v1730
      %v1849 = vpack.c.b16 %v1733, %v1732
      %v1850 = vpack.c.b16 %v1735, %v1734
      %v1851 = vpack.c.b16 %v1737, %v1736
      %v1852 = vpack.c.b16 %v1739, %v1738
      %v1853 = vpack.c.b16 %v1741, %v1740
      %v1854 = vpack.c.b16 %v1743, %v1742
      %v1855 = vpack.c.b16 %v1745, %v1744
      %v1856 = vpack.c.b16 %v1747, %v1746
      %v1857 = vpack.c.b16 %v1749, %v1748
      %v1858 = vpack.c.b16 %v1751, %v1750
      %v1859 = vpack.c.b16 %v1753, %v1752
      %v1860 = vpack.c.b16 %v1755, %v1754
      %v1861 = vpack.c.b16 %v1757, %v1756
      %v1862 = vpack.c.b16 %v1759, %v1758
      %v1863 = vpack.c.b16 %v1761, %v1760
      %v1864 = vpack.c.b16 %v1763, %v1762
      %v1865 = vpack.c.b16 %v1765, %v1764
      %v1866 = vpack.c.b16 %v1767, %v1766
      %v1867 = vpack.c.b16 %v1769, %v1768
      %v1868 = vpack.c.b16 %v1771, %v1770
      %v1869 = vpack.c.b16 %v1773, %v1772
      %v1870 = vpack.c.b16 %v1775, %v1774
      %v1871 = vpack.c.b16 %v1777, %v1776
      %v1872 = vpack.c.b16 %v1779, %v1778
      %v1873 = vpack.c.b16 %v1781, %v1780
      %v1874 = vpack.c.b16 %v1783, %v1782
      %v1875 = vpack.c.b16 %v1785, %v1784
      %v1876 = vpack.c.b16 %v1787, %v1786
      %v1877 = vpack.c.b16 %v1789, %v1788
      %v1878 = vpack.c.b16 %v1791, %v1790
      %v1879 = vpack.c.b16 %v1793, %v1792
      %v1880 = vpack.c.b16 %v1795, %v1794
      %v1881 = vpack.c.b16 %v1797, %v1796
      %v1882 = vpack.c.b16 %v1799, %v1798
      %v1883 = vpack.c.b16 %v1801, %v1800
      %v1884 = vpack.c.b16 %v1803, %v1802
      %v1885 = vpack.c.b16 %v1805, %v1804
      %v1886 = vpack.c.b16 %v1807, %v1806
      %v1887 = vpack.c.b16 %v1809, %v1808
      %v1888 = vpack.c.b16 %v1811, %v1810
      %v1889 = vpack.c.b16 %v1813, %v1812
      %v1890 = vpack.c.b16 %v1815, %v1814
      %v1891 = vpack.c.b16 %v1817, %v1816
      %v1892 = vpack.c.b16 %v1819, %v1818
      %v1893 = vpack.c.b16 %v1821, %v1820
      %1966 = vmatpush.bf16.msra.mxu0 %v1829
      %1967 = vmatpush.bf16.msra.mxu0 %v1828
      %1968 = vmatpush.bf16.msra.mxu0 %v1827
      %1969 = vmatpush.bf16.msra.mxu0 %v1826
      %1970 = vmatpush.bf16.msra.mxu0 %v1825
      %1971 = vmatpush.bf16.msra.mxu0 %v1824
      %1972 = vmatpush.bf16.msra.mxu0 %v1823
      %1973 = vmatpush.bf16.msra.mxu0 %v1822
      %1974 = vmatmul.bf16.gmra.mxu0 %v1390
      %v1975 = vpop.f32.mrf.mxu0
      %v1976 = vadd.f32 0.0, %v1975
      %v1977 = vpop.f32.mrf.mxu0
      %v1978 = vadd.f32 0.0, %v1977
      %1979 = vmatmul.bf16.gmra.mxu0 %v1399
      %v1980 = vpop.f32.mrf.mxu0
      %v1981 = vadd.f32 0.0, %v1980
      %v1982 = vpop.f32.mrf.mxu0
      %v1983 = vadd.f32 0.0, %v1982
      %1984 = vmatmul.bf16.gmra.mxu0 %v1408
      %v1985 = vpop.f32.mrf.mxu0
      %v1986 = vadd.f32 0.0, %v1985
      %v1987 = vpop.f32.mrf.mxu0
      %v1988 = vadd.f32 0.0, %v1987
      %1989 = vmatmul.bf16.gmra.mxu0 %v1417
      %v1990 = vpop.f32.mrf.mxu0
      %v1991 = vadd.f32 0.0, %v1990
      %v1992 = vpop.f32.mrf.mxu0
      %v1993 = vadd.f32 0.0, %v1992
      %1994 = vmatmul.bf16.gmra.mxu0 %v1426
      %v1995 = vpop.f32.mrf.mxu0
      %v1996 = vadd.f32 0.0, %v1995
      %v1997 = vpop.f32.mrf.mxu0
      %v1998 = vadd.f32 0.0, %v1997
      %1999 = vmatmul.bf16.gmra.mxu0 %v1435
      %v2000 = vpop.f32.mrf.mxu0
      %v2001 = vadd.f32 0.0, %v2000
      %v2002 = vpop.f32.mrf.mxu0
      %v2003 = vadd.f32 0.0, %v2002
      %2004 = vmatmul.bf16.gmra.mxu0 %v1444
      %v2005 = vpop.f32.mrf.mxu0
      %v2006 = vadd.f32 0.0, %v2005
      %v2007 = vpop.f32.mrf.mxu0
      %v2008 = vadd.f32 0.0, %v2007
      %2009 = vmatmul.bf16.gmra.mxu0 %v1453
      %v2010 = vpop.f32.mrf.mxu0
      %v2011 = vadd.f32 0.0, %v2010
      %v2012 = vpop.f32.mrf.mxu0
      %v2013 = vadd.f32 0.0, %v2012
      %2014 = vdwg.mxu0
      %2015 = vmatpush.bf16.msra.mxu0 %v1837
      %2016 = vmatpush.bf16.msra.mxu0 %v1836
      %2017 = vmatpush.bf16.msra.mxu0 %v1835
      %2018 = vmatpush.bf16.msra.mxu0 %v1834
      %2019 = vmatpush.bf16.msra.mxu0 %v1833
      %2020 = vmatpush.bf16.msra.mxu0 %v1832
      %2021 = vmatpush.bf16.msra.mxu0 %v1831
      %2022 = vmatpush.bf16.msra.mxu0 %v1830
      %2023 = vmatmul.bf16.gmra.mxu0 %v1391
      %v2024 = vpop.f32.mrf.mxu0
      %v2025 = vadd.f32 %v1976, %v2024
      %v2026 = vpop.f32.mrf.mxu0
      %v2027 = vadd.f32 %v1978, %v2026
      %2028 = vmatmul.bf16.gmra.mxu0 %v1400
      %v2029 = vpop.f32.mrf.mxu0
      %v2030 = vadd.f32 %v1981, %v2029
      %v2031 = vpop.f32.mrf.mxu0
      %v2032 = vadd.f32 %v1983, %v2031
      %2033 = vmatmul.bf16.gmra.mxu0 %v1409
      %v2034 = vpop.f32.mrf.mxu0
      %v2035 = vadd.f32 %v1986, %v2034
      %v2036 = vpop.f32.mrf.mxu0
      %v2037 = vadd.f32 %v1988, %v2036
      %2038 = vmatmul.bf16.gmra.mxu0 %v1418
      %v2039 = vpop.f32.mrf.mxu0
      %v2040 = vadd.f32 %v1991, %v2039
      %v2041 = vpop.f32.mrf.mxu0
      %v2042 = vadd.f32 %v1993, %v2041
      %2043 = vmatmul.bf16.gmra.mxu0 %v1427
      %v2044 = vpop.f32.mrf.mxu0
      %v2045 = vadd.f32 %v1996, %v2044
      %v2046 = vpop.f32.mrf.mxu0
      %v2047 = vadd.f32 %v1998, %v2046
      %2048 = vmatmul.bf16.gmra.mxu0 %v1436
      %v2049 = vpop.f32.mrf.mxu0
      %v2050 = vadd.f32 %v2001, %v2049
      %v2051 = vpop.f32.mrf.mxu0
      %v2052 = vadd.f32 %v2003, %v2051
      %2053 = vmatmul.bf16.gmra.mxu0 %v1445
      %v2054 = vpop.f32.mrf.mxu0
      %v2055 = vadd.f32 %v2006, %v2054
      %v2056 = vpop.f32.mrf.mxu0
      %v2057 = vadd.f32 %v2008, %v2056
      %2058 = vmatmul.bf16.gmra.mxu0 %v1454
      %v2059 = vpop.f32.mrf.mxu0
      %v2060 = vadd.f32 %v2011, %v2059
      %v2061 = vpop.f32.mrf.mxu0
      %v2062 = vadd.f32 %v2013, %v2061
      %2063 = vdwg.mxu0
      %2064 = vmatpush.bf16.msra.mxu0 %v1845
      %2065 = vmatpush.bf16.msra.mxu0 %v1844
      %2066 = vmatpush.bf16.msra.mxu0 %v1843
      %2067 = vmatpush.bf16.msra.mxu0 %v1842
      %2068 = vmatpush.bf16.msra.mxu0 %v1841
      %2069 = vmatpush.bf16.msra.mxu0 %v1840
      %2070 = vmatpush.bf16.msra.mxu0 %v1839
      %2071 = vmatpush.bf16.msra.mxu0 %v1838
      %2072 = vmatmul.bf16.gmra.mxu0 %v1392
      %v2073 = vpop.f32.mrf.mxu0
      %v2074 = vadd.f32 %v2025, %v2073
      %v2075 = vpop.f32.mrf.mxu0
      %v2076 = vadd.f32 %v2027, %v2075
      %2077 = vmatmul.bf16.gmra.mxu0 %v1401
      %v2078 = vpop.f32.mrf.mxu0
      %v2079 = vadd.f32 %v2030, %v2078
      %v2080 = vpop.f32.mrf.mxu0
      %v2081 = vadd.f32 %v2032, %v2080
      %2082 = vmatmul.bf16.gmra.mxu0 %v1410
      %v2083 = vpop.f32.mrf.mxu0
      %v2084 = vadd.f32 %v2035, %v2083
      %v2085 = vpop.f32.mrf.mxu0
      %v2086 = vadd.f32 %v2037, %v2085
      %2087 = vmatmul.bf16.gmra.mxu0 %v1419
      %v2088 = vpop.f32.mrf.mxu0
      %v2089 = vadd.f32 %v2040, %v2088
      %v2090 = vpop.f32.mrf.mxu0
      %v2091 = vadd.f32 %v2042, %v2090
      %2092 = vmatmul.bf16.gmra.mxu0 %v1428
      %v2093 = vpop.f32.mrf.mxu0
      %v2094 = vadd.f32 %v2045, %v2093
      %v2095 = vpop.f32.mrf.mxu0
      %v2096 = vadd.f32 %v2047, %v2095
      %2097 = vmatmul.bf16.gmra.mxu0 %v1437
      %v2098 = vpop.f32.mrf.mxu0
      %v2099 = vadd.f32 %v2050, %v2098
      %v2100 = vpop.f32.mrf.mxu0
      %v2101 = vadd.f32 %v2052, %v2100
      %2102 = vmatmul.bf16.gmra.mxu0 %v1446
      %v2103 = vpop.f32.mrf.mxu0
      %v2104 = vadd.f32 %v2055, %v2103
      %v2105 = vpop.f32.mrf.mxu0
      %v2106 = vadd.f32 %v2057, %v2105
      %2107 = vmatmul.bf16.gmra.mxu0 %v1455
      %v2108 = vpop.f32.mrf.mxu0
      %v2109 = vadd.f32 %v2060, %v2108
      %v2110 = vpop.f32.mrf.mxu0
      %v2111 = vadd.f32 %v2062, %v2110
      %2112 = vdwg.mxu0
      %2113 = vmatpush.bf16.msra.mxu0 %v1853
      %2114 = vmatpush.bf16.msra.mxu0 %v1852
      %2115 = vmatpush.bf16.msra.mxu0 %v1851
      %2116 = vmatpush.bf16.msra.mxu0 %v1850
      %2117 = vmatpush.bf16.msra.mxu0 %v1849
      %2118 = vmatpush.bf16.msra.mxu0 %v1848
      %2119 = vmatpush.bf16.msra.mxu0 %v1847
      %2120 = vmatpush.bf16.msra.mxu0 %v1846
      %2121 = vmatmul.bf16.gmra.mxu0 %v1393
      %v2122 = vpop.f32.mrf.mxu0
      %v2123 = vadd.f32 %v2074, %v2122
      %v2124 = vpop.f32.mrf.mxu0
      %v2125 = vadd.f32 %v2076, %v2124
      %2126 = vmatmul.bf16.gmra.mxu0 %v1402
      %v2127 = vpop.f32.mrf.mxu0
      %v2128 = vadd.f32 %v2079, %v2127
      %v2129 = vpop.f32.mrf.mxu0
      %v2130 = vadd.f32 %v2081, %v2129
      %2131 = vmatmul.bf16.gmra.mxu0 %v1411
      %v2132 = vpop.f32.mrf.mxu0
      %v2133 = vadd.f32 %v2084, %v2132
      %v2134 = vpop.f32.mrf.mxu0
      %v2135 = vadd.f32 %v2086, %v2134
      %2136 = vmatmul.bf16.gmra.mxu0 %v1420
      %v2137 = vpop.f32.mrf.mxu0
      %v2138 = vadd.f32 %v2089, %v2137
      %v2139 = vpop.f32.mrf.mxu0
      %v2140 = vadd.f32 %v2091, %v2139
      %2141 = vmatmul.bf16.gmra.mxu0 %v1429
      %v2142 = vpop.f32.mrf.mxu0
      %v2143 = vadd.f32 %v2094, %v2142
      %v2144 = vpop.f32.mrf.mxu0
      %v2145 = vadd.f32 %v2096, %v2144
      %2146 = vmatmul.bf16.gmra.mxu0 %v1438
      %v2147 = vpop.f32.mrf.mxu0
      %v2148 = vadd.f32 %v2099, %v2147
      %v2149 = vpop.f32.mrf.mxu0
      %v2150 = vadd.f32 %v2101, %v2149
      %2151 = vmatmul.bf16.gmra.mxu0 %v1447
      %v2152 = vpop.f32.mrf.mxu0
      %v2153 = vadd.f32 %v2104, %v2152
      %v2154 = vpop.f32.mrf.mxu0
      %v2155 = vadd.f32 %v2106, %v2154
      %2156 = vmatmul.bf16.gmra.mxu0 %v1456
      %v2157 = vpop.f32.mrf.mxu0
      %v2158 = vadd.f32 %v2109, %v2157
      %v2159 = vpop.f32.mrf.mxu0
      %v2160 = vadd.f32 %v2111, %v2159
      %2161 = vdwg.mxu0
      %2162 = vmatpush.bf16.msra.mxu0 %v1861
      %2163 = vmatpush.bf16.msra.mxu0 %v1860
      %2164 = vmatpush.bf16.msra.mxu0 %v1859
      %2165 = vmatpush.bf16.msra.mxu0 %v1858
      %2166 = vmatpush.bf16.msra.mxu0 %v1857
      %2167 = vmatpush.bf16.msra.mxu0 %v1856
      %2168 = vmatpush.bf16.msra.mxu0 %v1855
      %2169 = vmatpush.bf16.msra.mxu0 %v1854
      %2170 = vmatmul.bf16.gmra.mxu0 %v1394
      %v2171 = vpop.f32.mrf.mxu0
      %v2172 = vadd.f32 %v2123, %v2171
      %v2173 = vpop.f32.mrf.mxu0
      %v2174 = vadd.f32 %v2125, %v2173
      %2175 = vmatmul.bf16.gmra.mxu0 %v1403
      %v2176 = vpop.f32.mrf.mxu0
      %v2177 = vadd.f32 %v2128, %v2176
      %v2178 = vpop.f32.mrf.mxu0
      %v2179 = vadd.f32 %v2130, %v2178
      %2180 = vmatmul.bf16.gmra.mxu0 %v1412
      %v2181 = vpop.f32.mrf.mxu0
      %v2182 = vadd.f32 %v2133, %v2181
      %v2183 = vpop.f32.mrf.mxu0
      %v2184 = vadd.f32 %v2135, %v2183
      %2185 = vmatmul.bf16.gmra.mxu0 %v1421
      %v2186 = vpop.f32.mrf.mxu0
      %v2187 = vadd.f32 %v2138, %v2186
      %v2188 = vpop.f32.mrf.mxu0
      %v2189 = vadd.f32 %v2140, %v2188
      %2190 = vmatmul.bf16.gmra.mxu0 %v1430
      %v2191 = vpop.f32.mrf.mxu0
      %v2192 = vadd.f32 %v2143, %v2191
      %v2193 = vpop.f32.mrf.mxu0
      %v2194 = vadd.f32 %v2145, %v2193
      %2195 = vmatmul.bf16.gmra.mxu0 %v1439
      %v2196 = vpop.f32.mrf.mxu0
      %v2197 = vadd.f32 %v2148, %v2196
      %v2198 = vpop.f32.mrf.mxu0
      %v2199 = vadd.f32 %v2150, %v2198
      %2200 = vmatmul.bf16.gmra.mxu0 %v1448
      %v2201 = vpop.f32.mrf.mxu0
      %v2202 = vadd.f32 %v2153, %v2201
      %v2203 = vpop.f32.mrf.mxu0
      %v2204 = vadd.f32 %v2155, %v2203
      %2205 = vmatmul.bf16.gmra.mxu0 %v1457
      %v2206 = vpop.f32.mrf.mxu0
      %v2207 = vadd.f32 %v2158, %v2206
      %v2208 = vpop.f32.mrf.mxu0
      %v2209 = vadd.f32 %v2160, %v2208
      %2210 = vdwg.mxu0
      %2211 = vmatpush.bf16.msra.mxu0 %v1869
      %2212 = vmatpush.bf16.msra.mxu0 %v1868
      %2213 = vmatpush.bf16.msra.mxu0 %v1867
      %2214 = vmatpush.bf16.msra.mxu0 %v1866
      %2215 = vmatpush.bf16.msra.mxu0 %v1865
      %2216 = vmatpush.bf16.msra.mxu0 %v1864
      %2217 = vmatpush.bf16.msra.mxu0 %v1863
      %2218 = vmatpush.bf16.msra.mxu0 %v1862
      %2219 = vmatmul.bf16.gmra.mxu0 %v1395
      %v2220 = vpop.f32.mrf.mxu0
      %v2221 = vadd.f32 %v2172, %v2220
      %v2222 = vpop.f32.mrf.mxu0
      %v2223 = vadd.f32 %v2174, %v2222
      %2224 = vmatmul.bf16.gmra.mxu0 %v1404
      %v2225 = vpop.f32.mrf.mxu0
      %v2226 = vadd.f32 %v2177, %v2225
      %v2227 = vpop.f32.mrf.mxu0
      %v2228 = vadd.f32 %v2179, %v2227
      %2229 = vmatmul.bf16.gmra.mxu0 %v1413
      %v2230 = vpop.f32.mrf.mxu0
      %v2231 = vadd.f32 %v2182, %v2230
      %v2232 = vpop.f32.mrf.mxu0
      %v2233 = vadd.f32 %v2184, %v2232
      %2234 = vmatmul.bf16.gmra.mxu0 %v1422
      %v2235 = vpop.f32.mrf.mxu0
      %v2236 = vadd.f32 %v2187, %v2235
      %v2237 = vpop.f32.mrf.mxu0
      %v2238 = vadd.f32 %v2189, %v2237
      %2239 = vmatmul.bf16.gmra.mxu0 %v1431
      %v2240 = vpop.f32.mrf.mxu0
      %v2241 = vadd.f32 %v2192, %v2240
      %v2242 = vpop.f32.mrf.mxu0
      %v2243 = vadd.f32 %v2194, %v2242
      %2244 = vmatmul.bf16.gmra.mxu0 %v1440
      %v2245 = vpop.f32.mrf.mxu0
      %v2246 = vadd.f32 %v2197, %v2245
      %v2247 = vpop.f32.mrf.mxu0
      %v2248 = vadd.f32 %v2199, %v2247
      %2249 = vmatmul.bf16.gmra.mxu0 %v1449
      %v2250 = vpop.f32.mrf.mxu0
      %v2251 = vadd.f32 %v2202, %v2250
      %v2252 = vpop.f32.mrf.mxu0
      %v2253 = vadd.f32 %v2204, %v2252
      %2254 = vmatmul.bf16.gmra.mxu0 %v1458
      %v2255 = vpop.f32.mrf.mxu0
      %v2256 = vadd.f32 %v2207, %v2255
      %v2257 = vpop.f32.mrf.mxu0
      %v2258 = vadd.f32 %v2209, %v2257
      %2259 = vdwg.mxu0
      %2260 = vmatpush.bf16.msra.mxu0 %v1877
      %2261 = vmatpush.bf16.msra.mxu0 %v1876
      %2262 = vmatpush.bf16.msra.mxu0 %v1875
      %2263 = vmatpush.bf16.msra.mxu0 %v1874
      %2264 = vmatpush.bf16.msra.mxu0 %v1873
      %2265 = vmatpush.bf16.msra.mxu0 %v1872
      %2266 = vmatpush.bf16.msra.mxu0 %v1871
      %2267 = vmatpush.bf16.msra.mxu0 %v1870
      %2268 = vmatmul.bf16.gmra.mxu0 %v1396
      %v2269 = vpop.f32.mrf.mxu0
      %v2270 = vadd.f32 %v2221, %v2269
      %v2271 = vpop.f32.mrf.mxu0
      %v2272 = vadd.f32 %v2223, %v2271
      %2273 = vmatmul.bf16.gmra.mxu0 %v1405
      %v2274 = vpop.f32.mrf.mxu0
      %v2275 = vadd.f32 %v2226, %v2274
      %v2276 = vpop.f32.mrf.mxu0
      %v2277 = vadd.f32 %v2228, %v2276
      %2278 = vmatmul.bf16.gmra.mxu0 %v1414
      %v2279 = vpop.f32.mrf.mxu0
      %v2280 = vadd.f32 %v2231, %v2279
      %v2281 = vpop.f32.mrf.mxu0
      %v2282 = vadd.f32 %v2233, %v2281
      %2283 = vmatmul.bf16.gmra.mxu0 %v1423
      %v2284 = vpop.f32.mrf.mxu0
      %v2285 = vadd.f32 %v2236, %v2284
      %v2286 = vpop.f32.mrf.mxu0
      %v2287 = vadd.f32 %v2238, %v2286
      %2288 = vmatmul.bf16.gmra.mxu0 %v1432
      %v2289 = vpop.f32.mrf.mxu0
      %v2290 = vadd.f32 %v2241, %v2289
      %v2291 = vpop.f32.mrf.mxu0
      %v2292 = vadd.f32 %v2243, %v2291
      %2293 = vmatmul.bf16.gmra.mxu0 %v1441
      %v2294 = vpop.f32.mrf.mxu0
      %v2295 = vadd.f32 %v2246, %v2294
      %v2296 = vpop.f32.mrf.mxu0
      %v2297 = vadd.f32 %v2248, %v2296
      %2298 = vmatmul.bf16.gmra.mxu0 %v1450
      %v2299 = vpop.f32.mrf.mxu0
      %v2300 = vadd.f32 %v2251, %v2299
      %v2301 = vpop.f32.mrf.mxu0
      %v2302 = vadd.f32 %v2253, %v2301
      %2303 = vmatmul.bf16.gmra.mxu0 %v1459
      %v2304 = vpop.f32.mrf.mxu0
      %v2305 = vadd.f32 %v2256, %v2304
      %v2306 = vpop.f32.mrf.mxu0
      %v2307 = vadd.f32 %v2258, %v2306
      %2308 = vdwg.mxu0
      %2309 = vmatpush.bf16.msra.mxu0 %v1885
      %2310 = vmatpush.bf16.msra.mxu0 %v1884
      %2311 = vmatpush.bf16.msra.mxu0 %v1883
      %2312 = vmatpush.bf16.msra.mxu0 %v1882
      %2313 = vmatpush.bf16.msra.mxu0 %v1881
      %2314 = vmatpush.bf16.msra.mxu0 %v1880
      %2315 = vmatpush.bf16.msra.mxu0 %v1879
      %2316 = vmatpush.bf16.msra.mxu0 %v1878
      %2317 = vmatmul.bf16.gmra.mxu0 %v1397
      %v2318 = vpop.f32.mrf.mxu0
      %v2319 = vadd.f32 %v2270, %v2318
      %v2320 = vpop.f32.mrf.mxu0
      %v2321 = vadd.f32 %v2272, %v2320
      %2322 = vmatmul.bf16.gmra.mxu0 %v1406
      %v2323 = vpop.f32.mrf.mxu0
      %v2324 = vadd.f32 %v2275, %v2323
      %v2325 = vpop.f32.mrf.mxu0
      %v2326 = vadd.f32 %v2277, %v2325
      %2327 = vmatmul.bf16.gmra.mxu0 %v1415
      %v2328 = vpop.f32.mrf.mxu0
      %v2329 = vadd.f32 %v2280, %v2328
      %v2330 = vpop.f32.mrf.mxu0
      %v2331 = vadd.f32 %v2282, %v2330
      %2332 = vmatmul.bf16.gmra.mxu0 %v1424
      %v2333 = vpop.f32.mrf.mxu0
      %v2334 = vadd.f32 %v2285, %v2333
      %v2335 = vpop.f32.mrf.mxu0
      %v2336 = vadd.f32 %v2287, %v2335
      %2337 = vmatmul.bf16.gmra.mxu0 %v1433
      %v2338 = vpop.f32.mrf.mxu0
      %v2339 = vadd.f32 %v2290, %v2338
      %v2340 = vpop.f32.mrf.mxu0
      %v2341 = vadd.f32 %v2292, %v2340
      %2342 = vmatmul.bf16.gmra.mxu0 %v1442
      %v2343 = vpop.f32.mrf.mxu0
      %v2344 = vadd.f32 %v2295, %v2343
      %v2345 = vpop.f32.mrf.mxu0
      %v2346 = vadd.f32 %v2297, %v2345
      %2347 = vmatmul.bf16.gmra.mxu0 %v1451
      %v2348 = vpop.f32.mrf.mxu0
      %v2349 = vadd.f32 %v2300, %v2348
      %v2350 = vpop.f32.mrf.mxu0
      %v2351 = vadd.f32 %v2302, %v2350
      %2352 = vmatmul.bf16.gmra.mxu0 %v1460
      %v2353 = vpop.f32.mrf.mxu0
      %v2354 = vadd.f32 %v2305, %v2353
      %v2355 = vpop.f32.mrf.mxu0
      %v2356 = vadd.f32 %v2307, %v2355
      %2357 = vdwg.mxu0
      %2358 = vmatpush.bf16.msra.mxu0 %v1893
      %2359 = vmatpush.bf16.msra.mxu0 %v1892
      %2360 = vmatpush.bf16.msra.mxu0 %v1891
      %2361 = vmatpush.bf16.msra.mxu0 %v1890
      %2362 = vmatpush.bf16.msra.mxu0 %v1889
      %2363 = vmatpush.bf16.msra.mxu0 %v1888
      %2364 = vmatpush.bf16.msra.mxu0 %v1887
      %2365 = vmatpush.bf16.msra.mxu0 %v1886
      %2366 = vmatmul.bf16.gmra.mxu0 %v1398
      %v2367 = vpop.f32.mrf.mxu0
      %v2368 = vadd.f32 %v2319, %v2367
      %v2369 = vpop.f32.mrf.mxu0
      %v2370 = vadd.f32 %v2321, %v2369
      %2371 = vmatmul.bf16.gmra.mxu0 %v1407
      %v2372 = vpop.f32.mrf.mxu0
      %v2373 = vadd.f32 %v2324, %v2372
      %v2374 = vpop.f32.mrf.mxu0
      %v2375 = vadd.f32 %v2326, %v2374
      %2376 = vmatmul.bf16.gmra.mxu0 %v1416
      %v2377 = vpop.f32.mrf.mxu0
      %v2378 = vadd.f32 %v2329, %v2377
      %v2379 = vpop.f32.mrf.mxu0
      %v2380 = vadd.f32 %v2331, %v2379
      %2381 = vmatmul.bf16.gmra.mxu0 %v1425
      %v2382 = vpop.f32.mrf.mxu0
      %v2383 = vadd.f32 %v2334, %v2382
      %v2384 = vpop.f32.mrf.mxu0
      %v2385 = vadd.f32 %v2336, %v2384
      %2386 = vmatmul.bf16.gmra.mxu0 %v1434
      %v2387 = vpop.f32.mrf.mxu0
      %v2388 = vadd.f32 %v2339, %v2387
      %v2389 = vpop.f32.mrf.mxu0
      %v2390 = vadd.f32 %v2341, %v2389
      %2391 = vmatmul.bf16.gmra.mxu0 %v1443
      %v2392 = vpop.f32.mrf.mxu0
      %v2393 = vadd.f32 %v2344, %v2392
      %v2394 = vpop.f32.mrf.mxu0
      %v2395 = vadd.f32 %v2346, %v2394
      %2396 = vmatmul.bf16.gmra.mxu0 %v1452
      %v2397 = vpop.f32.mrf.mxu0
      %v2398 = vadd.f32 %v2349, %v2397
      %v2399 = vpop.f32.mrf.mxu0
      %v2400 = vadd.f32 %v2351, %v2399
      %2401 = vmatmul.bf16.gmra.mxu0 %v1461
      %v2402 = vpop.f32.mrf.mxu0
      %v2403 = vadd.f32 %v2354, %v2402
      %v2404 = vpop.f32.mrf.mxu0
      %v2405 = vadd.f32 %v2356, %v2404
      %2406 = vdwg.mxu0
      %v2407 = vadd.f32 %v2368, %v2370
      %v2408 = vadd.f32 %v2407, %v2373
      %v2409 = vadd.f32 %v2408, %v2375
      %v2410 = vadd.f32 %v2409, %v2378
      %v2411 = vadd.f32 %v2410, %v2380
      %v2412 = vadd.f32 %v2411, %v2383
      %v2413 = vadd.f32 %v2412, %v2385
      %v2414 = vadd.f32 %v2413, %v2388
      %v2415 = vadd.f32 %v2414, %v2390
      %v2416 = vadd.f32 %v2415, %v2393
      %v2417 = vadd.f32 %v2416, %v2395
      %v2418 = vadd.f32 %v2417, %v2398
      %v2419 = vadd.f32 %v2418, %v2400
      %v2420 = vadd.f32 %v2419, %v2403
      %v2421 = vadd.f32 %v2420, %v2405
      %v2422 = vrot.slane %v2421, 4
      %v2423 = vadd.f32 %v2421, %v2422
      %v2424 = vrot.slane %v2423, 2
      %v2425 = vadd.f32 %v2423, %v2424
      %v2426 = vrot.slane %v2425, 1
      %v2427 = vadd.f32 %v2425, %v2426
      %v2428 = vmul.f32 %v2427, 0.0078125
      %v2429 = vsub.f32 %v2368, %v2428
      %v2430 = vsub.f32 %v2370, %v2428
      %v2431 = vsub.f32 %v2373, %v2428
      %v2432 = vsub.f32 %v2375, %v2428
      %v2433 = vsub.f32 %v2378, %v2428
      %v2434 = vsub.f32 %v2380, %v2428
      %v2435 = vsub.f32 %v2383, %v2428
      %v2436 = vsub.f32 %v2385, %v2428
      %v2437 = vsub.f32 %v2388, %v2428
      %v2438 = vsub.f32 %v2390, %v2428
      %v2439 = vsub.f32 %v2393, %v2428
      %v2440 = vsub.f32 %v2395, %v2428
      %v2441 = vsub.f32 %v2398, %v2428
      %v2442 = vsub.f32 %v2400, %v2428
      %v2443 = vsub.f32 %v2403, %v2428
      %v2444 = vsub.f32 %v2405, %v2428
      %2445 = vst [vmem:[%s374] sm:$0x1] %v2427
      %v2446 = vmul.f32 %v2429, %v2429
      %v2447 = vmul.f32 %v2430, %v2430
      %v2448 = vmul.f32 %v2431, %v2431
      %v2449 = vmul.f32 %v2432, %v2432
      %v2450 = vmul.f32 %v2433, %v2433
      %v2451 = vmul.f32 %v2434, %v2434
      %v2452 = vmul.f32 %v2435, %v2435
      %v2453 = vmul.f32 %v2436, %v2436
      %v2454 = vmul.f32 %v2437, %v2437
      %v2455 = vmul.f32 %v2438, %v2438
      %v2456 = vmul.f32 %v2439, %v2439
      %v2457 = vmul.f32 %v2440, %v2440
      %v2458 = vmul.f32 %v2441, %v2441
      %v2459 = vmul.f32 %v2442, %v2442
      %v2460 = vmul.f32 %v2443, %v2443
      %v2461 = vmul.f32 %v2444, %v2444
      %v2462 = vadd.f32 %v2446, %v2447
      %v2463 = vadd.f32 %v2462, %v2448
      %v2464 = vadd.f32 %v2463, %v2449
      %v2465 = vadd.f32 %v2464, %v2450
      %v2466 = vadd.f32 %v2465, %v2451
      %v2467 = vadd.f32 %v2466, %v2452
      %v2468 = vadd.f32 %v2467, %v2453
      %v2469 = vadd.f32 %v2468, %v2454
      %v2470 = vadd.f32 %v2469, %v2455
      %v2471 = vadd.f32 %v2470, %v2456
      %v2472 = vadd.f32 %v2471, %v2457
      %v2473 = vadd.f32 %v2472, %v2458
      %v2474 = vadd.f32 %v2473, %v2459
      %v2475 = vadd.f32 %v2474, %v2460
      %v2476 = vadd.f32 %v2475, %v2461
      %v2477 = vrot.slane %v2476, 4
      %v2478 = vadd.f32 %v2476, %v2477
      %v2479 = vrot.slane %v2478, 2
      %v2480 = vadd.f32 %v2478, %v2479
      %v2481 = vrot.slane %v2480, 1
      %v2482 = vadd.f32 %v2480, %v2481
      %2483 = vst [vmem:[%s381] sm:$0x1] %v2482
      %v2484 = vpack.c.bf16 %v2368, %v2368
      %v2485 = vpack.c.bf16 %v2370, %v2370
      %v2486 = vpack.c.bf16 %v2373, %v2373
      %v2487 = vpack.c.bf16 %v2375, %v2375
      %v2488 = vpack.c.bf16 %v2378, %v2378
      %v2489 = vpack.c.bf16 %v2380, %v2380
      %v2490 = vpack.c.bf16 %v2383, %v2383
      %v2491 = vpack.c.bf16 %v2385, %v2385
      %v2492 = vpack.c.bf16 %v2388, %v2388
      %v2493 = vpack.c.bf16 %v2390, %v2390
      %v2494 = vpack.c.bf16 %v2393, %v2393
      %v2495 = vpack.c.bf16 %v2395, %v2395
      %v2496 = vpack.c.bf16 %v2398, %v2398
      %v2497 = vpack.c.bf16 %v2400, %v2400
      %v2498 = vpack.c.bf16 %v2403, %v2403
      %v2499 = vpack.c.bf16 %v2405, %v2405
      %2500 = vst [vmem:[%s366] sm:$0xf] %v2484
      %2501 = vst [vmem:[%s366 + $0x4] sm:$0xf] %v2485
      %2502 = vst [vmem:[%s366 + $0x8] sm:$0xf] %v2486
      %2503 = vst [vmem:[%s366 + $0xc] sm:$0xf] %v2487
      %2504 = vst [vmem:[%s366 + $0x10] sm:$0xf] %v2488
      %2505 = vst [vmem:[%s366 + $0x14] sm:$0xf] %v2489
      %2506 = vst [vmem:[%s366 + $0x18] sm:$0xf] %v2490
      %2507 = vst [vmem:[%s366 + $0x1c] sm:$0xf] %v2491
      %2508 = vst [vmem:[%s366 + $0x20] sm:$0xf] %v2492
      %2509 = vst [vmem:[%s366 + $0x24] sm:$0xf] %v2493
      %2510 = vst [vmem:[%s366 + $0x28] sm:$0xf] %v2494
      %2511 = vst [vmem:[%s366 + $0x2c] sm:$0xf] %v2495
      %2512 = vst [vmem:[%s366 + $0x30] sm:$0xf] %v2496
      %2513 = vst [vmem:[%s366 + $0x34] sm:$0xf] %v2497
      %2514 = vst [vmem:[%s366 + $0x38] sm:$0xf] %v2498
      %2515 = vst [vmem:[%s366 + $0x3c] sm:$0xf] %v2499
      %s2516 = smul.u32 16, %s22
      %p2517 = scmp.lt.s32.totalorder %s21, 1
      %s2518 = scalar_select %p2517, %s21, 1
      %p2519 = scmp.lt.s32.totalorder %s2516, 31
      %s2520 = scalar_select %p2519, %s2516, 31
      %s2521 = smul.addr %s2518, 32
      %s2522 = sadd.s32 %s2520, %s2521
      %s2523 = smul.addr %s2522, 4
      %s2524 = scalar_lea.vmem %s3, %s2523
      %p2525 = scmp.lt.s32.totalorder %s21, 1
      %s2526 = scalar_select %p2525, %s21, 1
      %p2527 = scmp.lt.s32.totalorder %s22, 1
      %s2528 = scalar_select %p2527, %s22, 1
      %s2529 = smul.addr %s2526, 2
      %s2530 = sadd.s32 %s2528, %s2529
      %s2531 = scalar_lea.vmem %s4, %s2530
      %p2532 = scmp.lt.s32.totalorder %s21, 1
      %s2533 = scalar_select %p2532, %s21, 1
      %p2534 = scmp.lt.s32.totalorder %s22, 1
      %s2535 = scalar_select %p2534, %s22, 1
      %s2536 = smul.addr %s2533, 2
      %s2537 = sadd.s32 %s2535, %s2536
      %s2538 = scalar_lea.vmem %s5, %s2537
      // Predicated region
      $region33: #{unet_conv2_forward.6} parent=31 // pred_check
        %p2539 = pneg %p130
      $region34: #{unet_conv2_forward.6} parent=31 // pred_check_branch
        %2541 = sbr.rel (%p2539) target = $region36
      $region35: #{unet_conv2_forward.6} parent=31 // pred_region
        %s2542 = smul.u32 16, %s22
      $region36: #{unet_conv2_forward.6} parent=31 // pred_fallthru
        _
      // Predicated region
      $region37: #{unet_conv2_forward.6} parent=31 // pred_check
        %p2543 = pneg %p158
      $region38: #{unet_conv2_forward.6} parent=31 // pred_check_branch
        %2545 = sbr.rel (%p2543) target = $region40
      $region39: #{unet_conv2_forward.6} parent=31 // pred_region
        _
      $region40: #{unet_conv2_forward.6} parent=31 // pred_fallthru
        _
      // Predicated region
      $region41: #{unet_conv2_forward.6} parent=31 // pred_check
        %p2546 = pneg %p186
      $region42: #{unet_conv2_forward.6} parent=31 // pred_check_branch
        %2548 = sbr.rel (%p2546) target = $region44
      $region43: #{unet_conv2_forward.6} parent=31 // pred_region
        _
      $region44: #{unet_conv2_forward.6} parent=31 // pred_fallthru
        _
    $region32: #{unet_conv2_forward.6} parent=5 // pred_fallthru
      _
    %p2549 = scmp.le.s32.totalorder 2, %s12
    // Predicated region
    $region45: #{unet_conv2_forward.6} parent=5 // pred_check
      %p2550 = pneg %p2549
    $region46: #{unet_conv2_forward.6} parent=5 // pred_check_branch
      %2552 = sbr.rel (%p2550) target = $region48
    $region47: #{unet_conv2_forward.6} parent=5 // pred_region
      %s2553 = ssub.s32 %s12, 2
      // Predicated region
      $region49: #{unet_conv2_forward.6} parent=47 // pred_check
        %p2554 = pneg %p136
      $region50: #{unet_conv2_forward.6} parent=47 // pred_check_branch
        %2556 = sbr.rel (%p2554) target = $region52
      $region51: #{unet_conv2_forward.6} parent=47 // pred_region
        %s2557 = smul.u32 16, %s24
        %p2558 = scmp.lt.s32.totalorder %s23, 1
        %s2559 = scalar_select %p2558, %s23, 1
        %p2560 = scmp.lt.s32.totalorder %s2557, 31
        %s2561 = scalar_select %p2560, %s2557, 31
        %s2562 = smul.addr %s2559, 32
        %s2563 = sadd.s32 %s2561, %s2562
        %s2564 = smul.addr %s2563, 4
        %s2565 = scalar_lea.vmem %s3, %s2564
      $region52: #{unet_conv2_forward.6} parent=47 // pred_fallthru
        _
      // Predicated region
      $region53: #{unet_conv2_forward.6} parent=47 // pred_check
        %p2566 = pneg %p164
      $region54: #{unet_conv2_forward.6} parent=47 // pred_check_branch
        %2568 = sbr.rel (%p2566) target = $region56
      $region55: #{unet_conv2_forward.6} parent=47 // pred_region
        %p2569 = scmp.lt.s32.totalorder %s23, 1
        %s2570 = scalar_select %p2569, %s23, 1
        %p2571 = scmp.lt.s32.totalorder %s24, 1
        %s2572 = scalar_select %p2571, %s24, 1
        %s2573 = smul.addr %s2570, 2
        %s2574 = sadd.s32 %s2572, %s2573
        %s2575 = scalar_lea.vmem %s4, %s2574
      $region56: #{unet_conv2_forward.6} parent=47 // pred_fallthru
        _
      // Predicated region
      $region57: #{unet_conv2_forward.6} parent=47 // pred_check
        %p2576 = pneg %p192
      $region58: #{unet_conv2_forward.6} parent=47 // pred_check_branch
        %2578 = sbr.rel (%p2576) target = $region60
      $region59: #{unet_conv2_forward.6} parent=47 // pred_region
        %p2579 = scmp.lt.s32.totalorder %s23, 1
        %s2580 = scalar_select %p2579, %s23, 1
        %p2581 = scmp.lt.s32.totalorder %s24, 1
        %s2582 = scalar_select %p2581, %s24, 1
        %s2583 = smul.addr %s2580, 2
        %s2584 = sadd.s32 %s2582, %s2583
        %s2585 = scalar_lea.vmem %s5, %s2584
      $region60: #{unet_conv2_forward.6} parent=47 // pred_fallthru
        _
    $region48: #{unet_conv2_forward.6} parent=5 // pred_fallthru
      _
  $region6: #{unet_conv2_forward.6} parent=0 // loop_footer
    %s16 = sadd.s32 1, %s12
  $region7: #{unet_conv2_forward.6} parent=0 // loop_footer_branch
    %11 = sbr.rel target = $region3
  $region8: #{unet_conv2_forward.6} parent=0 // loop_exit
    _

</llo_original>
